<compile_context>
chip_gen: v5e
topology: v5e:2x2
jax: 0.10.0
libtpu: 0.0.40
codegen_flags: <defaults>
</compile_context>

<pallas_src>
import functools

import jax
import jax.numpy as jnp
import numpy as np
from jax.experimental import pallas as pl


# ------------------------------ kernel helpers -------------------------------

def _layernorm(x, g, b, eps):
    mu = jnp.mean(x, axis=-1, keepdims=True)
    xc = x - mu
    var = jnp.mean(xc * xc, axis=-1, keepdims=True)
    return xc * jax.lax.rsqrt(var + eps) * g + b


def _rel_shift_tiles(bd):
    """Exact torch `_rel_shift` applied to each (L, L) tile of a (G, L, L) array.

    result[i, j] = bd[i, j + L-1-i]      if j <= i
                 = 0                     if j == i+1
                 = bd[i+1, j - i - 2]    if j >= i+2
    Implemented with static slices/concats + per-row binary lane rolls only.
    """
    G, L, _ = bd.shape
    W = 2 * L + 1
    down = jnp.concatenate(
        [bd[:, 1:, :], jnp.zeros((G, 1, L), bd.dtype)], axis=1)        # rows i+1
    wide = jnp.concatenate(
        [bd, jnp.zeros((G, L, 1), bd.dtype), down], axis=2)            # (G, L, W)
    row = jax.lax.broadcasted_iota(jnp.int32, (G, L, W), 1)
    shift = (L - 1) - row                                              # 0 .. L-1
    bit = 1
    while bit < L:
        rolled = jnp.roll(wide, -bit, axis=2)
        wide = jnp.where((shift & bit) != 0, rolled, wide)
        bit *= 2
    return wide[:, :, :L]


# ------------------------------ fused kernel ---------------------------------

def _rel_mha_kernel(w_ref, r_ref, enc_ref, wproj_ref, wmerge_ref, bias_ref,
                    ln_ref, mask_ref, pad_ref, o_ref, *, H, eps):
    f32 = jnp.float32
    bf16 = jnp.bfloat16
    B, L, D = w_ref.shape
    G = B * H                                   # group index g = h*B + b

    def expand(t):                              # (B, S, D) -> (G, S, D), g = h*B+b
        return jnp.concatenate([t] * H, axis=0)

    def merge(partial):                         # (G, L, D) -> (B, L, D): sum heads
        out = partial[0:B]
        for h in range(1, H):
            out = out + partial[h * B:(h + 1) * B]
        return out

    def bdot(a, b, ca, cb):                     # batched (dim 0) matmul, f32 accum
        return jax.lax.dot_general(
            a, b, (((ca,), (cb,)), ((0,), (0,))), preferred_element_type=f32)

    def softmax_last(s):                        # f32 in / f32 out, additive-masked
        s = s - jnp.max(s, axis=-1, keepdims=True)
        e = jnp.exp(s)
        return e * pl.reciprocal(jnp.sum(e, axis=-1, keepdims=True), approx=True)

    x = w_ref[...]                                              # (B, L, D) f32
    xg = expand(x.astype(bf16))                                 # (G, L, D) bf16
    rg = jnp.broadcast_to(r_ref[...][None], (G, L, D))          # (G, L, D) bf16
    encg = expand(enc_ref[...])                                 # (G, E, D) bf16

    # ---- masked (relative-position) self-attention ---------------------------
    # 1/sqrt(d_head) is folded into the Q weights and the relative biases.
    q = bdot(xg, wproj_ref[0], 2, 1)                            # (G, L, Dh) f32
    k = bdot(xg, wproj_ref[1], 2, 1).astype(bf16)
    v = bdot(xg, wproj_ref[2], 2, 1).astype(bf16)
    rk = bdot(rg, wproj_ref[3], 2, 1).astype(bf16)

    q_rw = (q + bias_ref[0]).astype(bf16)                       # + r_w_bias*scale
    q_rr = (q + bias_ref[1]).astype(bf16)                       # + r_r_bias*scale

    ac = bdot(q_rw, k, 2, 2)                                    # (G, L, L) f32
    bd = _rel_shift_tiles(bdot(q_rr, rk, 2, 2))                 # (G, L, L) f32
    p = softmax_last(ac + bd + mask_ref[...][None]).astype(bf16)
    pv = bdot(p, v, 2, 1).astype(bf16)                          # (G, L, Dh)
    attn_out = merge(bdot(pv, wmerge_ref[0], 2, 1))             # (B, L, D) f32
    mao = _layernorm(x + attn_out, ln_ref[0], ln_ref[1], eps)   # (B, L, D) f32

    # ---- interaction (cross) attention ---------------------------------------
    maog = expand(mao.astype(bf16))                             # (G, L, D)
    q2 = bdot(maog, wproj_ref[4], 2, 1).astype(bf16)            # (G, L, Dh)
    k2 = bdot(encg, wproj_ref[5], 2, 1).astype(bf16)            # (G, E, Dh)
    v2 = bdot(encg, wproj_ref[6], 2, 1).astype(bf16)
    p2 = softmax_last(bdot(q2, k2, 2, 2) + pad_ref[...]).astype(bf16)
    pv2 = bdot(p2, v2, 2, 1).astype(bf16)                       # (G, L, Dh)
    out2 = merge(bdot(pv2, wmerge_ref[1], 2, 1))                # (B, L, D) f32
    o_ref[...] = _layernorm(out2 + mao, ln_ref[2], ln_ref[3], eps)


# ------------------------------ wrapper ---------------------------------------

def rel_mha_forward(params, w, r, enc_context, attn_mask, padding_mask,
                    n_heads, eps=1e-5):
    L, B, D = w.shape
    E = enc_context.shape[0]
    H = n_heads
    Dh = D // H
    scale = 1.0 / (Dh ** 0.5)
    bf16 = jnp.bfloat16

    def per_head_cols(mat, s=1.0):
        # (D, D) column blocks -> (H, D, Dh), optionally pre-scaled.
        return (mat * s).reshape(D, H, Dh).transpose(1, 0, 2)

    qkv_w = params['qkv_w']
    wproj = jnp.stack([
        per_head_cols(qkv_w[:, :D], scale),           # Q   (scale folded)
        per_head_cols(qkv_w[:, D:2 * D]),             # K
        per_head_cols(qkv_w[:, 2 * D:]),              # V
        per_head_cols(params['r_w']),                 # R-key
        per_head_cols(params['q_w'], scale),          # cross Q (scale folded)
        per_head_cols(params['kv_w'][:, :D]),         # cross K
        per_head_cols(params['kv_w'][:, D:]),         # cross V
    ])                                                # (7, H, D, Dh)
    wmerge = jnp.stack([params['o_w'].reshape(H, Dh, D),
                        params['io_w'].reshape(H, Dh, D)])        # (2, H, Dh, D)
    bias = jnp.stack([(params['r_w_bias'] * scale).reshape(H, 1, Dh),
                      (params['r_r_bias'] * scale).reshape(H, 1, Dh)])
    ln = jnp.stack([params['ln1_g'], params['ln1_b'],
                    params['ln2_g'], params['ln2_b']])            # (4, 1, D)

    # Duplicate per-head operands across the batch: group index g = h*B + b.
    wproj = jnp.repeat(wproj, B, axis=1).astype(bf16)             # (7, G, D, Dh)
    wmerge = jnp.repeat(wmerge, B, axis=1).astype(bf16)           # (2, G, Dh, D)
    bias = jnp.repeat(bias, B, axis=1)                            # (2, G, 1, Dh)

    # Additive masks.
    mask_add = jnp.where(attn_mask.reshape(L, L) == 0,
                         jnp.float32(-1e30), jnp.float32(0.0))    # (L, L)
    pad_add = ((1.0 - padding_mask.astype(jnp.float32).T)
               * jnp.float32(-1e30)).reshape(B, 1, E)
    pad_add = jnp.tile(pad_add, (H, 1, 1))                        # (G, 1, E)

    # Token-major activation slabs.
    wt = jnp.transpose(w, (1, 0, 2))                              # (B, L, D) f32
    enct = jnp.transpose(enc_context, (1, 0, 2)).astype(bf16)     # (B, E, D)
    rb = r.astype(bf16)                                           # (L, D)

    kernel = functools.partial(_rel_mha_kernel, H=H, eps=eps)
    out_bld = pl.pallas_call(
        kernel,
        out_shape=jax.ShapeDtypeStruct((B, L, D), jnp.float32),
    )(wt, rb, enct, wproj, wmerge, bias, ln, mask_add, pad_add)

    return jnp.transpose(out_bld, (1, 0, 2))                      # (L, B, D)


# --------------------------- pure-JAX reference -------------------------------

def rel_shift(x):
    """Exact mirror of torch _rel_shift: x has shape (i, j, ...)."""
    zero_pad = jnp.zeros((x.shape[0], 1) + x.shape[2:], dtype=x.dtype)
    x_padded = jnp.concatenate([zero_pad, x], axis=1)
    x_padded = x_padded.reshape((x.shape[1] + 1, x.shape[0]) + x.shape[2:])
    return x_padded[1:].reshape(x.shape)


def _layer_norm_ref(x, g, b, eps):
    mu = jnp.mean(x, axis=-1, keepdims=True)
    var = jnp.mean((x - mu) ** 2, axis=-1, keepdims=True)
    return (x - mu) / jnp.sqrt(var + eps) * g + b


def rel_mha_reference(params, w, r, enc_context, attn_mask, padding_mask,
                      n_heads, eps=1e-5):
    L, B, D = w.shape
    E = enc_context.shape[0]
    H = n_heads
    Dh = D // H
    scale = 1.0 / (Dh ** 0.5)

    w_heads = w @ params['qkv_w']
    r_head_k = (r @ params['r_w']).reshape(L, H, Dh)
    w_head_q, w_head_k, w_head_v = jnp.split(w_heads, 3, axis=-1)
    w_head_q = w_head_q.reshape(L, B, H, Dh)
    w_head_k = w_head_k.reshape(L, B, H, Dh)
    w_head_v = w_head_v.reshape(L, B, H, Dh)

    rw_head_q = w_head_q + params['r_w_bias']
    AC = jnp.einsum('ibnd,jbnd->ijbn', rw_head_q, w_head_k)
    rr_head_q = w_head_q + params['r_r_bias']
    BD = jnp.einsum('ibnd,jnd->ijbn', rr_head_q, r_head_k)
    BD = rel_shift(BD)
    attn_score = (AC + BD) * scale
    attn_score = jnp.where(attn_mask == 0, -1e30, attn_score)
    attn_prob = jax.nn.softmax(attn_score, axis=1)
    attn_vec = jnp.einsum('ijbn,jbnd->ibnd', attn_prob, w_head_v).reshape(L, B, D)
    attn_out = attn_vec @ params['o_w']
    mask_attn_output = _layer_norm_ref(w + attn_out, params['ln1_g'],
                                       params['ln1_b'], eps)

    inter_kv = enc_context @ params['kv_w']
    inter_k, inter_v = jnp.split(inter_kv, 2, axis=-1)
    inter_q = (mask_attn_output @ params['q_w']).reshape(L, B, H, Dh)
    inter_k = inter_k.reshape(E, B, H, Dh)
    inter_v = inter_v.reshape(E, B, H, Dh)
    score2 = jnp.einsum('qbnd,kbnd->qkbn', inter_q, inter_k) * scale
    pm = padding_mask[None, :, :, None]
    score2 = score2 + (1 - pm) * -1e30
    prob2 = jax.nn.softmax(score2, axis=1)
    vec2 = jnp.einsum('ijbn,jbnd->ibnd', prob2, inter_v).reshape(L, B, D)
    out2 = vec2 @ params['io_w']
    return _layer_norm_ref(out2 + mask_attn_output, params['ln2_g'],
                           params['ln2_b'], eps)


# ----------------------------------- main --------------------------------------

if __name__ == "__main__":
    dec_len, enc_len, bsz = 8, 16, 2
    d_model, n_heads = 32, 4
    d_head = d_model // n_heads
    eps = 1e-5

    key = jax.random.PRNGKey(0)
    ks = jax.random.split(key, 16)

    def rnd(k, shape, s=0.05):
        return (s * jax.random.normal(k, shape)).astype(jnp.float32)

    # Parameters (nn.Linear weights stored transposed: (in, out)).
    params = {
        'qkv_w': rnd(ks[0], (d_model, 3 * d_model)),
        'r_w': rnd(ks[1], (d_model, d_model)),
        'o_w': rnd(ks[2], (d_model, d_model)),
        'kv_w': rnd(ks[3], (d_model, 2 * d_model)),
        'q_w': rnd(ks[4], (d_model, d_model)),
        'io_w': rnd(ks[5], (d_model, d_model)),
        'r_w_bias': rnd(ks[6], (n_heads, d_head), 0.1),
        'r_r_bias': rnd(ks[7], (n_heads, d_head), 0.1),
        'ln1_g': (1.0 + rnd(ks[8], (1, d_model), 0.1)),
        'ln1_b': rnd(ks[9], (1, d_model), 0.1),
        'ln2_g': (1.0 + rnd(ks[10], (1, d_model), 0.1)),
        'ln2_b': rnd(ks[11], (1, d_model), 0.1),
    }

    # Inputs.
    w = jax.random.normal(ks[12], (dec_len, bsz, d_model), dtype=jnp.float32)
    r = jax.random.normal(ks[13], (dec_len, d_model), dtype=jnp.float32)
    enc_context = jax.random.normal(ks[14], (enc_len, bsz, d_model),
                                    dtype=jnp.float32)
    # Causal self-attention mask: 0 => masked (matches `attn_mask == 0` fill).
    attn_mask = jnp.tril(jnp.ones((dec_len, dec_len), jnp.float32))[:, :, None, None]
    # Encoder padding mask (enc_len, bsz): 1 => valid.
    padding_mask = jnp.ones((enc_len, bsz), jnp.float32)
    padding_mask = padding_mask.at[enc_len - 4:, 1].set(0.0)

    fwd = jax.jit(functools.partial(rel_mha_forward, n_heads=n_heads, eps=eps))
    out = fwd(params, w, r, enc_context, attn_mask, padding_mask)
    out = jax.block_until_ready(out)

    ref = rel_mha_reference(params, w, r, enc_context, attn_mask, padding_mask,
                            n_heads, eps)
    np.testing.assert_allclose(np.asarray(out), np.asarray(ref),
                               rtol=2e-2, atol=2e-2)

    print("KERNEL_OK")
</pallas_src>

<mosaic_0001>
module attributes {stable_mosaic.version = 11 : i64} {
  func.func @_rel_mha_kernel(%arg0: memref<2x8x32xf32, #tpu.memory_space<vmem>>, %arg1: memref<8x32xbf16, #tpu.memory_space<vmem>>, %arg2: memref<2x16x32xbf16, #tpu.memory_space<vmem>>, %arg3: memref<7x8x32x8xbf16, #tpu.memory_space<vmem>>, %arg4: memref<2x8x8x32xbf16, #tpu.memory_space<vmem>>, %arg5: memref<2x8x1x8xf32, #tpu.memory_space<vmem>>, %arg6: memref<4x1x32xf32, #tpu.memory_space<vmem>>, %arg7: memref<8x8xf32, #tpu.memory_space<vmem>>, %arg8: memref<8x1x16xf32, #tpu.memory_space<vmem>>, %arg9: memref<2x8x32xf32, #tpu.memory_space<vmem>>) attributes {dimension_semantics = [], scalar_prefetch = 0 : i64, scratch_operands = 0 : i64, tpu.core_type = #tpu.core_type<tc>} {
    %c0 = arith.constant 0 : index
    %c0_0 = arith.constant 0 : index
    %c0_1 = arith.constant 0 : index
    %0 = vector.load %arg0[%c0, %c0_0, %c0_1] : memref<2x8x32xf32, #tpu.memory_space<vmem>>, vector<2x8x32xf32>
    %1 = arith.truncf %0 : vector<2x8x32xf32> to vector<2x8x32xbf16>
    %2 = tpu.concatenate %1, %1, %1, %1 in 0 : vector<2x8x32xbf16>, vector<2x8x32xbf16>, vector<2x8x32xbf16>, vector<2x8x32xbf16> -> vector<8x8x32xbf16>
    %c0_2 = arith.constant 0 : index
    %c0_3 = arith.constant 0 : index
    %3 = vector.load %arg1[%c0_2, %c0_3] : memref<8x32xbf16, #tpu.memory_space<vmem>>, vector<8x32xbf16>
    %4 = vector.shape_cast %3 : vector<8x32xbf16> to vector<1x8x32xbf16>
    %5 = vector.shape_cast %4 : vector<1x8x32xbf16> to vector<1x8x32xbf16>
    %6 = vector.broadcast %5 : vector<1x8x32xbf16> to vector<8x8x32xbf16>
    %c0_4 = arith.constant 0 : index
    %c0_5 = arith.constant 0 : index
    %c0_6 = arith.constant 0 : index
    %7 = vector.load %arg2[%c0_4, %c0_5, %c0_6] : memref<2x16x32xbf16, #tpu.memory_space<vmem>>, vector<2x16x32xbf16>
    %8 = tpu.concatenate %7, %7, %7, %7 in 0 : vector<2x16x32xbf16>, vector<2x16x32xbf16>, vector<2x16x32xbf16>, vector<2x16x32xbf16> -> vector<8x16x32xbf16>
    %c0_7 = arith.constant 0 : index
    %c0_8 = arith.constant 0 : index
    %c0_9 = arith.constant 0 : index
    %c0_10 = arith.constant 0 : index
    %9 = vector.load %arg3[%c0_7, %c0_8, %c0_9, %c0_10] : memref<7x8x32x8xbf16, #tpu.memory_space<vmem>>, vector<1x8x32x8xbf16>
    %10 = vector.shape_cast %9 : vector<1x8x32x8xbf16> to vector<8x32x8xbf16>
    %cst = arith.constant dense<0.000000e+00> : vector<8x8x8xf32>
    %11 = tpu.matmul %2, %10, %cst {dimension_numbers = #tpu.dot_dimension_numbers<[2], [1], [1], [2], [0, 0, 0, 1, 1, 2], [0], [0]>} : vector<8x8x32xbf16>, vector<8x32x8xbf16>, vector<8x8x8xf32> -> vector<8x8x8xf32>
    %c1 = arith.constant 1 : index
    %c0_11 = arith.constant 0 : index
    %c0_12 = arith.constant 0 : index
    %c0_13 = arith.constant 0 : index
    %12 = vector.load %arg3[%c1, %c0_11, %c0_12, %c0_13] : memref<7x8x32x8xbf16, #tpu.memory_space<vmem>>, vector<1x8x32x8xbf16>
    %13 = vector.shape_cast %12 : vector<1x8x32x8xbf16> to vector<8x32x8xbf16>
    %cst_14 = arith.constant dense<0.000000e+00> : vector<8x8x8xf32>
    %14 = tpu.matmul %2, %13, %cst_14 {dimension_numbers = #tpu.dot_dimension_numbers<[2], [1], [1], [2], [0, 0, 0, 1, 1, 2], [0], [0]>} : vector<8x8x32xbf16>, vector<8x32x8xbf16>, vector<8x8x8xf32> -> vector<8x8x8xf32>
    %15 = arith.truncf %14 : vector<8x8x8xf32> to vector<8x8x8xbf16>
    %c2 = arith.constant 2 : index
    %c0_15 = arith.constant 0 : index
    %c0_16 = arith.constant 0 : index
    %c0_17 = arith.constant 0 : index
    %16 = vector.load %arg3[%c2, %c0_15, %c0_16, %c0_17] : memref<7x8x32x8xbf16, #tpu.memory_space<vmem>>, vector<1x8x32x8xbf16>
    %17 = vector.shape_cast %16 : vector<1x8x32x8xbf16> to vector<8x32x8xbf16>
    %cst_18 = arith.constant dense<0.000000e+00> : vector<8x8x8xf32>
    %18 = tpu.matmul %2, %17, %cst_18 {dimension_numbers = #tpu.dot_dimension_numbers<[2], [1], [1], [2], [0, 0, 0, 1, 1, 2], [0], [0]>} : vector<8x8x32xbf16>, vector<8x32x8xbf16>, vector<8x8x8xf32> -> vector<8x8x8xf32>
    %19 = arith.truncf %18 : vector<8x8x8xf32> to vector<8x8x8xbf16>
    %c3 = arith.constant 3 : index
    %c0_19 = arith.constant 0 : index
    %c0_20 = arith.constant 0 : index
    %c0_21 = arith.constant 0 : index
    %20 = vector.load %arg3[%c3, %c0_19, %c0_20, %c0_21] : memref<7x8x32x8xbf16, #tpu.memory_space<vmem>>, vector<1x8x32x8xbf16>
    %21 = vector.shape_cast %20 : vector<1x8x32x8xbf16> to vector<8x32x8xbf16>
    %cst_22 = arith.constant dense<0.000000e+00> : vector<8x8x8xf32>
    %22 = tpu.matmul %6, %21, %cst_22 {dimension_numbers = #tpu.dot_dimension_numbers<[2], [1], [1], [2], [0, 0, 0, 1, 1, 2], [0], [0]>} : vector<8x8x32xbf16>, vector<8x32x8xbf16>, vector<8x8x8xf32> -> vector<8x8x8xf32>
    %23 = arith.truncf %22 : vector<8x8x8xf32> to vector<8x8x8xbf16>
    %c0_23 = arith.constant 0 : index
    %c0_24 = arith.constant 0 : index
    %c0_25 = arith.constant 0 : index
    %c0_26 = arith.constant 0 : index
    %24 = vector.load %arg5[%c0_23, %c0_24, %c0_25, %c0_26] : memref<2x8x1x8xf32, #tpu.memory_space<vmem>>, vector<1x8x1x8xf32>
    %25 = vector.shape_cast %24 : vector<1x8x1x8xf32> to vector<8x1x8xf32>
    %26 = vector.broadcast %25 : vector<8x1x8xf32> to vector<8x8x8xf32>
    %27 = arith.addf %11, %26 : vector<8x8x8xf32>
    %28 = arith.truncf %27 : vector<8x8x8xf32> to vector<8x8x8xbf16>
    %c1_27 = arith.constant 1 : index
    %c0_28 = arith.constant 0 : index
    %c0_29 = arith.constant 0 : index
    %c0_30 = arith.constant 0 : index
    %29 = vector.load %arg5[%c1_27, %c0_28, %c0_29, %c0_30] : memref<2x8x1x8xf32, #tpu.memory_space<vmem>>, vector<1x8x1x8xf32>
    %30 = vector.shape_cast %29 : vector<1x8x1x8xf32> to vector<8x1x8xf32>
    %31 = vector.broadcast %30 : vector<8x1x8xf32> to vector<8x8x8xf32>
    %32 = arith.addf %11, %31 : vector<8x8x8xf32>
    %33 = arith.truncf %32 : vector<8x8x8xf32> to vector<8x8x8xbf16>
    %cst_31 = arith.constant dense<0.000000e+00> : vector<8x8x8xf32>
    %34 = tpu.matmul %28, %15, %cst_31 {dimension_numbers = #tpu.dot_dimension_numbers<[2], [2], [1], [1], [0, 0, 0, 1, 1, 1], [0], [0]>} : vector<8x8x8xbf16>, vector<8x8x8xbf16>, vector<8x8x8xf32> -> vector<8x8x8xf32>
    %cst_32 = arith.constant dense<0.000000e+00> : vector<8x8x8xf32>
    %35 = tpu.matmul %33, %23, %cst_32 {dimension_numbers = #tpu.dot_dimension_numbers<[2], [2], [1], [1], [0, 0, 0, 1, 1, 1], [0], [0]>} : vector<8x8x8xbf16>, vector<8x8x8xbf16>, vector<8x8x8xf32> -> vector<8x8x8xf32>
    %36 = vector.extract_strided_slice %35 {offsets = [0, 1, 0], sizes = [8, 7, 8], strides = [1, 1, 1]} : vector<8x8x8xf32> to vector<8x7x8xf32>
    %cst_33 = arith.constant 0.000000e+00 : f32
    %37 = vector.broadcast %cst_33 : f32 to vector<8x1x8xf32>
    %38 = tpu.concatenate %36, %37 in 1 : vector<8x7x8xf32>, vector<8x1x8xf32> -> vector<8x8x8xf32>
    %cst_34 = arith.constant 0.000000e+00 : f32
    %39 = vector.broadcast %cst_34 : f32 to vector<8x8x1xf32>
    %40 = tpu.concatenate %35, %39, %38 in 2 : vector<8x8x8xf32>, vector<8x8x1xf32>, vector<8x8x8xf32> -> vector<8x8x17xf32>
    %41 = tpu.iota {dimensions = array<i32: 1>} : vector<8x8x17xi32>
    %c7_i32 = arith.constant 7 : i32
    %42 = vector.broadcast %c7_i32 : i32 to vector<8x8x17xi32>
    %43 = arith.subi %42, %41 : vector<8x8x17xi32>
    %44 = vector.extract_strided_slice %40 {offsets = [0, 0, 1], sizes = [8, 8, 16], strides = [1, 1, 1]} : vector<8x8x17xf32> to vector<8x8x16xf32>
    %45 = vector.extract_strided_slice %40 {offsets = [0, 0, 0], sizes = [8, 8, 1], strides = [1, 1, 1]} : vector<8x8x17xf32> to vector<8x8x1xf32>
    %46 = tpu.concatenate %44, %45 in 2 : vector<8x8x16xf32>, vector<8x8x1xf32> -> vector<8x8x17xf32>
    %c1_i32 = arith.constant 1 : i32
    %47 = vector.broadcast %c1_i32 : i32 to vector<8x8x17xi32>
    %48 = arith.andi %43, %47 : vector<8x8x17xi32>
    %c0_i32 = arith.constant 0 : i32
    %49 = vector.broadcast %c0_i32 : i32 to vector<8x8x17xi32>
    %50 = arith.cmpi ne, %48, %49 : vector<8x8x17xi32>
    %51 = arith.select %50, %46, %40 : vector<8x8x17xi1>, vector<8x8x17xf32>
    %52 = vector.extract_strided_slice %51 {offsets = [0, 0, 2], sizes = [8, 8, 15], strides = [1, 1, 1]} : vector<8x8x17xf32> to vector<8x8x15xf32>
    %53 = vector.extract_strided_slice %51 {offsets = [0, 0, 0], sizes = [8, 8, 2], strides = [1, 1, 1]} : vector<8x8x17xf32> to vector<8x8x2xf32>
    %54 = tpu.concatenate %52, %53 in 2 : vector<8x8x15xf32>, vector<8x8x2xf32> -> vector<8x8x17xf32>
    %c2_i32 = arith.constant 2 : i32
    %55 = vector.broadcast %c2_i32 : i32 to vector<8x8x17xi32>
    %56 = arith.andi %43, %55 : vector<8x8x17xi32>
    %c0_i32_35 = arith.constant 0 : i32
    %57 = vector.broadcast %c0_i32_35 : i32 to vector<8x8x17xi32>
    %58 = arith.cmpi ne, %56, %57 : vector<8x8x17xi32>
    %59 = arith.select %58, %54, %51 : vector<8x8x17xi1>, vector<8x8x17xf32>
    %60 = vector.extract_strided_slice %59 {offsets = [0, 0, 4], sizes = [8, 8, 13], strides = [1, 1, 1]} : vector<8x8x17xf32> to vector<8x8x13xf32>
    %61 = vector.extract_strided_slice %59 {offsets = [0, 0, 0], sizes = [8, 8, 4], strides = [1, 1, 1]} : vector<8x8x17xf32> to vector<8x8x4xf32>
    %62 = tpu.concatenate %60, %61 in 2 : vector<8x8x13xf32>, vector<8x8x4xf32> -> vector<8x8x17xf32>
    %c4_i32 = arith.constant 4 : i32
    %63 = vector.broadcast %c4_i32 : i32 to vector<8x8x17xi32>
    %64 = arith.andi %43, %63 : vector<8x8x17xi32>
    %c0_i32_36 = arith.constant 0 : i32
    %65 = vector.broadcast %c0_i32_36 : i32 to vector<8x8x17xi32>
    %66 = arith.cmpi ne, %64, %65 : vector<8x8x17xi32>
    %67 = arith.select %66, %62, %59 : vector<8x8x17xi1>, vector<8x8x17xf32>
    %68 = vector.extract_strided_slice %67 {offsets = [0, 0, 0], sizes = [8, 8, 8], strides = [1, 1, 1]} : vector<8x8x17xf32> to vector<8x8x8xf32>
    %69 = arith.addf %34, %68 : vector<8x8x8xf32>
    %c0_37 = arith.constant 0 : index
    %c0_38 = arith.constant 0 : index
    %70 = vector.load %arg7[%c0_37, %c0_38] : memref<8x8xf32, #tpu.memory_space<vmem>>, vector<8x8xf32>
    %71 = vector.shape_cast %70 : vector<8x8xf32> to vector<1x8x8xf32>
    %72 = vector.broadcast %71 : vector<1x8x8xf32> to vector<8x8x8xf32>
    %73 = arith.addf %69, %72 : vector<8x8x8xf32>
    %cst_39 = arith.constant dense<0xFF800000> : vector<8x8xf32>
    %74 = vector.multi_reduction <maximumf>, %73, %cst_39 [2] : vector<8x8x8xf32> to vector<8x8xf32>
    %75 = vector.shape_cast %74 : vector<8x8xf32> to vector<8x8x1xf32>
    %76 = vector.broadcast %75 : vector<8x8x1xf32> to vector<8x8x8xf32>
    %77 = arith.subf %73, %76 : vector<8x8x8xf32>
    %78 = math.exp %77 : vector<8x8x8xf32>
    %cst_40 = arith.constant dense<0.000000e+00> : vector<8x8xf32>
    %79 = vector.multi_reduction <add>, %78, %cst_40 [2] : vector<8x8x8xf32> to vector<8x8xf32>
    %80 = vector.shape_cast %79 : vector<8x8xf32> to vector<8x8x1xf32>
    %81 = tpu.reciprocal %80 {approx = true} : vector<8x8x1xf32> -> vector<8x8x1xf32>
    %82 = vector.broadcast %81 : vector<8x8x1xf32> to vector<8x8x8xf32>
    %83 = arith.mulf %78, %82 : vector<8x8x8xf32>
    %84 = arith.truncf %83 : vector<8x8x8xf32> to vector<8x8x8xbf16>
    %cst_41 = arith.constant dense<0.000000e+00> : vector<8x8x8xf32>
    %85 = tpu.matmul %84, %19, %cst_41 {dimension_numbers = #tpu.dot_dimension_numbers<[2], [1], [1], [2], [0, 0, 0, 1, 1, 2], [0], [0]>} : vector<8x8x8xbf16>, vector<8x8x8xbf16>, vector<8x8x8xf32> -> vector<8x8x8xf32>
    %86 = arith.truncf %85 : vector<8x8x8xf32> to vector<8x8x8xbf16>
    %c0_42 = arith.constant 0 : index
    %c0_43 = arith.constant 0 : index
    %c0_44 = arith.constant 0 : index
    %c0_45 = arith.constant 0 : index
    %87 = vector.load %arg4[%c0_42, %c0_43, %c0_44, %c0_45] : memref<2x8x8x32xbf16, #tpu.memory_space<vmem>>, vector<1x8x8x32xbf16>
    %88 = vector.shape_cast %87 : vector<1x8x8x32xbf16> to vector<8x8x32xbf16>
    %cst_46 = arith.constant dense<0.000000e+00> : vector<8x8x32xf32>
    %89 = tpu.matmul %86, %88, %cst_46 {dimension_numbers = #tpu.dot_dimension_numbers<[2], [1], [1], [2], [0, 0, 0, 1, 1, 2], [0], [0]>} : vector<8x8x8xbf16>, vector<8x8x32xbf16>, vector<8x8x32xf32> -> vector<8x8x32xf32>
    %90 = vector.extract_strided_slice %89 {offsets = [0, 0, 0], sizes = [2, 8, 32], strides = [1, 1, 1]} : vector<8x8x32xf32> to vector<2x8x32xf32>
    %91 = vector.extract_strided_slice %89 {offsets = [2, 0, 0], sizes = [2, 8, 32], strides = [1, 1, 1]} : vector<8x8x32xf32> to vector<2x8x32xf32>
    %92 = arith.addf %90, %91 : vector<2x8x32xf32>
    %93 = vector.extract_strided_slice %89 {offsets = [4, 0, 0], sizes = [2, 8, 32], strides = [1, 1, 1]} : vector<8x8x32xf32> to vector<2x8x32xf32>
    %94 = arith.addf %92, %93 : vector<2x8x32xf32>
    %95 = vector.extract_strided_slice %89 {offsets = [6, 0, 0], sizes = [2, 8, 32], strides = [1, 1, 1]} : vector<8x8x32xf32> to vector<2x8x32xf32>
    %96 = arith.addf %94, %95 : vector<2x8x32xf32>
    %97 = arith.addf %0, %96 : vector<2x8x32xf32>
    %c0_47 = arith.constant 0 : index
    %c0_48 = arith.constant 0 : index
    %c0_49 = arith.constant 0 : index
    %98 = vector.load %arg6[%c0_47, %c0_48, %c0_49] : memref<4x1x32xf32, #tpu.memory_space<vmem>>, vector<1x1x32xf32>
    %99 = vector.shape_cast %98 : vector<1x1x32xf32> to vector<1x32xf32>
    %c1_50 = arith.constant 1 : index
    %c0_51 = arith.constant 0 : index
    %c0_52 = arith.constant 0 : index
    %100 = vector.load %arg6[%c1_50, %c0_51, %c0_52] : memref<4x1x32xf32, #tpu.memory_space<vmem>>, vector<1x1x32xf32>
    %101 = vector.shape_cast %100 : vector<1x1x32xf32> to vector<1x32xf32>
    %cst_53 = arith.constant dense<0.000000e+00> : vector<2x8xf32>
    %102 = vector.multi_reduction <add>, %97, %cst_53 [2] : vector<2x8x32xf32> to vector<2x8xf32>
    %103 = vector.shape_cast %102 : vector<2x8xf32> to vector<2x8x1xf32>
    %cst_54 = arith.constant 3.200000e+01 : f32
    %104 = vector.broadcast %cst_54 : f32 to vector<2x8x1xf32>
    %105 = arith.divf %103, %104 : vector<2x8x1xf32>
    %106 = vector.broadcast %105 : vector<2x8x1xf32> to vector<2x8x32xf32>
    %107 = arith.subf %97, %106 : vector<2x8x32xf32>
    %108 = arith.mulf %107, %107 : vector<2x8x32xf32>
    %cst_55 = arith.constant dense<0.000000e+00> : vector<2x8xf32>
    %109 = vector.multi_reduction <add>, %108, %cst_55 [2] : vector<2x8x32xf32> to vector<2x8xf32>
    %110 = vector.shape_cast %109 : vector<2x8xf32> to vector<2x8x1xf32>
    %cst_56 = arith.constant 3.200000e+01 : f32
    %111 = vector.broadcast %cst_56 : f32 to vector<2x8x1xf32>
    %112 = arith.divf %110, %111 : vector<2x8x1xf32>
    %cst_57 = arith.constant 9.99999974E-6 : f32
    %113 = vector.broadcast %cst_57 : f32 to vector<2x8x1xf32>
    %114 = arith.addf %112, %113 : vector<2x8x1xf32>
    %115 = math.rsqrt %114 : vector<2x8x1xf32>
    %116 = vector.broadcast %115 : vector<2x8x1xf32> to vector<2x8x32xf32>
    %117 = arith.mulf %107, %116 : vector<2x8x32xf32>
    %118 = vector.shape_cast %99 : vector<1x32xf32> to vector<1x1x32xf32>
    %119 = vector.broadcast %118 : vector<1x1x32xf32> to vector<2x8x32xf32>
    %120 = arith.mulf %117, %119 : vector<2x8x32xf32>
    %121 = vector.shape_cast %101 : vector<1x32xf32> to vector<1x1x32xf32>
    %122 = vector.broadcast %121 : vector<1x1x32xf32> to vector<2x8x32xf32>
    %123 = arith.addf %120, %122 : vector<2x8x32xf32>
    %124 = arith.truncf %123 : vector<2x8x32xf32> to vector<2x8x32xbf16>
    %125 = tpu.concatenate %124, %124, %124, %124 in 0 : vector<2x8x32xbf16>, vector<2x8x32xbf16>, vector<2x8x32xbf16>, vector<2x8x32xbf16> -> vector<8x8x32xbf16>
    %c4 = arith.constant 4 : index
    %c0_58 = arith.constant 0 : index
    %c0_59 = arith.constant 0 : index
    %c0_60 = arith.constant 0 : index
    %126 = vector.load %arg3[%c4, %c0_58, %c0_59, %c0_60] : memref<7x8x32x8xbf16, #tpu.memory_space<vmem>>, vector<1x8x32x8xbf16>
    %127 = vector.shape_cast %126 : vector<1x8x32x8xbf16> to vector<8x32x8xbf16>
    %cst_61 = arith.constant dense<0.000000e+00> : vector<8x8x8xf32>
    %128 = tpu.matmul %125, %127, %cst_61 {dimension_numbers = #tpu.dot_dimension_numbers<[2], [1], [1], [2], [0, 0, 0, 1, 1, 2], [0], [0]>} : vector<8x8x32xbf16>, vector<8x32x8xbf16>, vector<8x8x8xf32> -> vector<8x8x8xf32>
    %129 = arith.truncf %128 : vector<8x8x8xf32> to vector<8x8x8xbf16>
    %c5 = arith.constant 5 : index
    %c0_62 = arith.constant 0 : index
    %c0_63 = arith.constant 0 : index
    %c0_64 = arith.constant 0 : index
    %130 = vector.load %arg3[%c5, %c0_62, %c0_63, %c0_64] : memref<7x8x32x8xbf16, #tpu.memory_space<vmem>>, vector<1x8x32x8xbf16>
    %131 = vector.shape_cast %130 : vector<1x8x32x8xbf16> to vector<8x32x8xbf16>
    %cst_65 = arith.constant dense<0.000000e+00> : vector<8x16x8xf32>
    %132 = tpu.matmul %8, %131, %cst_65 {dimension_numbers = #tpu.dot_dimension_numbers<[2], [1], [1], [2], [0, 0, 0, 1, 1, 2], [0], [0]>} : vector<8x16x32xbf16>, vector<8x32x8xbf16>, vector<8x16x8xf32> -> vector<8x16x8xf32>
    %133 = arith.truncf %132 : vector<8x16x8xf32> to vector<8x16x8xbf16>
    %c6 = arith.constant 6 : index
    %c0_66 = arith.constant 0 : index
    %c0_67 = arith.constant 0 : index
    %c0_68 = arith.constant 0 : index
    %134 = vector.load %arg3[%c6, %c0_66, %c0_67, %c0_68] : memref<7x8x32x8xbf16, #tpu.memory_space<vmem>>, vector<1x8x32x8xbf16>
    %135 = vector.shape_cast %134 : vector<1x8x32x8xbf16> to vector<8x32x8xbf16>
    %cst_69 = arith.constant dense<0.000000e+00> : vector<8x16x8xf32>
    %136 = tpu.matmul %8, %135, %cst_69 {dimension_numbers = #tpu.dot_dimension_numbers<[2], [1], [1], [2], [0, 0, 0, 1, 1, 2], [0], [0]>} : vector<8x16x32xbf16>, vector<8x32x8xbf16>, vector<8x16x8xf32> -> vector<8x16x8xf32>
    %137 = arith.truncf %136 : vector<8x16x8xf32> to vector<8x16x8xbf16>
    %cst_70 = arith.constant dense<0.000000e+00> : vector<8x8x16xf32>
    %138 = tpu.matmul %129, %133, %cst_70 {dimension_numbers = #tpu.dot_dimension_numbers<[2], [2], [1], [1], [0, 0, 0, 1, 1, 1], [0], [0]>} : vector<8x8x8xbf16>, vector<8x16x8xbf16>, vector<8x8x16xf32> -> vector<8x8x16xf32>
    %c0_71 = arith.constant 0 : index
    %c0_72 = arith.constant 0 : index
    %c0_73 = arith.constant 0 : index
    %139 = vector.load %arg8[%c0_71, %c0_72, %c0_73] : memref<8x1x16xf32, #tpu.memory_space<vmem>>, vector<8x1x16xf32>
    %140 = vector.broadcast %139 : vector<8x1x16xf32> to vector<8x8x16xf32>
    %141 = arith.addf %138, %140 : vector<8x8x16xf32>
    %cst_74 = arith.constant dense<0xFF800000> : vector<8x8xf32>
    %142 = vector.multi_reduction <maximumf>, %141, %cst_74 [2] : vector<8x8x16xf32> to vector<8x8xf32>
    %143 = vector.shape_cast %142 : vector<8x8xf32> to vector<8x8x1xf32>
    %144 = vector.broadcast %143 : vector<8x8x1xf32> to vector<8x8x16xf32>
    %145 = arith.subf %141, %144 : vector<8x8x16xf32>
    %146 = math.exp %145 : vector<8x8x16xf32>
    %cst_75 = arith.constant dense<0.000000e+00> : vector<8x8xf32>
    %147 = vector.multi_reduction <add>, %146, %cst_75 [2] : vector<8x8x16xf32> to vector<8x8xf32>
    %148 = vector.shape_cast %147 : vector<8x8xf32> to vector<8x8x1xf32>
    %149 = tpu.reciprocal %148 {approx = true} : vector<8x8x1xf32> -> vector<8x8x1xf32>
    %150 = vector.broadcast %149 : vector<8x8x1xf32> to vector<8x8x16xf32>
    %151 = arith.mulf %146, %150 : vector<8x8x16xf32>
    %152 = arith.truncf %151 : vector<8x8x16xf32> to vector<8x8x16xbf16>
    %cst_76 = arith.constant dense<0.000000e+00> : vector<8x8x8xf32>
    %153 = tpu.matmul %152, %137, %cst_76 {dimension_numbers = #tpu.dot_dimension_numbers<[2], [1], [1], [2], [0, 0, 0, 1, 1, 2], [0], [0]>} : vector<8x8x16xbf16>, vector<8x16x8xbf16>, vector<8x8x8xf32> -> vector<8x8x8xf32>
    %154 = arith.truncf %153 : vector<8x8x8xf32> to vector<8x8x8xbf16>
    %c1_77 = arith.constant 1 : index
    %c0_78 = arith.constant 0 : index
    %c0_79 = arith.constant 0 : index
    %c0_80 = arith.constant 0 : index
    %155 = vector.load %arg4[%c1_77, %c0_78, %c0_79, %c0_80] : memref<2x8x8x32xbf16, #tpu.memory_space<vmem>>, vector<1x8x8x32xbf16>
    %156 = vector.shape_cast %155 : vector<1x8x8x32xbf16> to vector<8x8x32xbf16>
    %cst_81 = arith.constant dense<0.000000e+00> : vector<8x8x32xf32>
    %157 = tpu.matmul %154, %156, %cst_81 {dimension_numbers = #tpu.dot_dimension_numbers<[2], [1], [1], [2], [0, 0, 0, 1, 1, 2], [0], [0]>} : vector<8x8x8xbf16>, vector<8x8x32xbf16>, vector<8x8x32xf32> -> vector<8x8x32xf32>
    %158 = vector.extract_strided_slice %157 {offsets = [0, 0, 0], sizes = [2, 8, 32], strides = [1, 1, 1]} : vector<8x8x32xf32> to vector<2x8x32xf32>
    %159 = vector.extract_strided_slice %157 {offsets = [2, 0, 0], sizes = [2, 8, 32], strides = [1, 1, 1]} : vector<8x8x32xf32> to vector<2x8x32xf32>
    %160 = arith.addf %158, %159 : vector<2x8x32xf32>
    %161 = vector.extract_strided_slice %157 {offsets = [4, 0, 0], sizes = [2, 8, 32], strides = [1, 1, 1]} : vector<8x8x32xf32> to vector<2x8x32xf32>
    %162 = arith.addf %160, %161 : vector<2x8x32xf32>
    %163 = vector.extract_strided_slice %157 {offsets = [6, 0, 0], sizes = [2, 8, 32], strides = [1, 1, 1]} : vector<8x8x32xf32> to vector<2x8x32xf32>
    %164 = arith.addf %162, %163 : vector<2x8x32xf32>
    %165 = arith.addf %164, %123 : vector<2x8x32xf32>
    %c2_82 = arith.constant 2 : index
    %c0_83 = arith.constant 0 : index
    %c0_84 = arith.constant 0 : index
    %166 = vector.load %arg6[%c2_82, %c0_83, %c0_84] : memref<4x1x32xf32, #tpu.memory_space<vmem>>, vector<1x1x32xf32>
    %167 = vector.shape_cast %166 : vector<1x1x32xf32> to vector<1x32xf32>
    %c3_85 = arith.constant 3 : index
    %c0_86 = arith.constant 0 : index
    %c0_87 = arith.constant 0 : index
    %168 = vector.load %arg6[%c3_85, %c0_86, %c0_87] : memref<4x1x32xf32, #tpu.memory_space<vmem>>, vector<1x1x32xf32>
    %169 = vector.shape_cast %168 : vector<1x1x32xf32> to vector<1x32xf32>
    %cst_88 = arith.constant dense<0.000000e+00> : vector<2x8xf32>
    %170 = vector.multi_reduction <add>, %165, %cst_88 [2] : vector<2x8x32xf32> to vector<2x8xf32>
    %171 = vector.shape_cast %170 : vector<2x8xf32> to vector<2x8x1xf32>
    %cst_89 = arith.constant 3.200000e+01 : f32
    %172 = vector.broadcast %cst_89 : f32 to vector<2x8x1xf32>
    %173 = arith.divf %171, %172 : vector<2x8x1xf32>
    %174 = vector.broadcast %173 : vector<2x8x1xf32> to vector<2x8x32xf32>
    %175 = arith.subf %165, %174 : vector<2x8x32xf32>
    %176 = arith.mulf %175, %175 : vector<2x8x32xf32>
    %cst_90 = arith.constant dense<0.000000e+00> : vector<2x8xf32>
    %177 = vector.multi_reduction <add>, %176, %cst_90 [2] : vector<2x8x32xf32> to vector<2x8xf32>
    %178 = vector.shape_cast %177 : vector<2x8xf32> to vector<2x8x1xf32>
    %cst_91 = arith.constant 3.200000e+01 : f32
    %179 = vector.broadcast %cst_91 : f32 to vector<2x8x1xf32>
    %180 = arith.divf %178, %179 : vector<2x8x1xf32>
    %cst_92 = arith.constant 9.99999974E-6 : f32
    %181 = vector.broadcast %cst_92 : f32 to vector<2x8x1xf32>
    %182 = arith.addf %180, %181 : vector<2x8x1xf32>
    %183 = math.rsqrt %182 : vector<2x8x1xf32>
    %184 = vector.broadcast %183 : vector<2x8x1xf32> to vector<2x8x32xf32>
    %185 = arith.mulf %175, %184 : vector<2x8x32xf32>
    %186 = vector.shape_cast %167 : vector<1x32xf32> to vector<1x1x32xf32>
    %187 = vector.broadcast %186 : vector<1x1x32xf32> to vector<2x8x32xf32>
    %188 = arith.mulf %185, %187 : vector<2x8x32xf32>
    %189 = vector.shape_cast %169 : vector<1x32xf32> to vector<1x1x32xf32>
    %190 = vector.broadcast %189 : vector<1x1x32xf32> to vector<2x8x32xf32>
    %191 = arith.addf %188, %190 : vector<2x8x32xf32>
    %c0_93 = arith.constant 0 : index
    %c0_94 = arith.constant 0 : index
    %c0_95 = arith.constant 0 : index
    %192 = vector.load %arg9[%c0_93, %c0_94, %c0_95] : memref<2x8x32xf32, #tpu.memory_space<vmem>>, vector<2x8x32xf32>
    tpu.vector_store %arg9[%c0_93, %c0_94, %c0_95], %191 {strides = array<i32>} : memref<2x8x32xf32, #tpu.memory_space<vmem>>, vector<2x8x32xf32>,
    return
  }
}

</mosaic_0001>

<llo_original>
// kernel: rel_mha_forward.1
$region0: #{rel_mha_forward.1}
  #allocation0 [shape = 'u32[]', space=smem, size = 0x4, offset = 0x4, fixed_abs, tag = 'smem constant byte address 0x4 - core index']
  #allocation1 [shape = 'u32[72,128]{1,0:T(1,128)}', space=vmem, size = 0x9000, scoped, tag = 'internal scratch']
  %s0 = inlined_call_operand.vmem [shape: f32[2,8,32], index: 0, kind: input, shape index: {}]
  %s1 = inlined_call_operand.vmem [shape: bf16[8,32], index: 1, kind: input, shape index: {}]
  %s2 = inlined_call_operand.vmem [shape: bf16[2,16,32], index: 2, kind: input, shape index: {}]
  %s3 = inlined_call_operand.vmem [shape: bf16[7,8,32,8], index: 3, kind: input, shape index: {}]
  %s4 = inlined_call_operand.vmem [shape: bf16[2,8,8,32], index: 4, kind: input, shape index: {}]
  %s5 = inlined_call_operand.vmem [shape: f32[2,8,1,8], index: 5, kind: input, shape index: {}]
  %s6 = inlined_call_operand.vmem [shape: f32[4,1,32], index: 6, kind: input, shape index: {}]
  %s7 = inlined_call_operand.vmem [shape: f32[8,8], index: 7, kind: input, shape index: {}]
  %s8 = inlined_call_operand.vmem [shape: f32[8,1,16], index: 8, kind: input, shape index: {}]
  %s9 = inlined_call_operand.vmem [shape: f32[2,8,32], index: 9, kind: output, shape index: {}]
  %s10 = sld [smem:[#allocation0]]
  $region46: #{rel_mha_forward.1} parent=0
    _
  %s12 = ssub.s32 1, %s10
  %s13 = scalar_select 0, %s12, %s10
  // Predicated region
  $region2: #{rel_mha_forward.1} parent=0 // pred_check
    _
  $region3: #{rel_mha_forward.1} parent=0 // pred_check_branch
    %15 = sbr.rel (0) target = $region5
  $region4: #{rel_mha_forward.1} parent=0 // pred_region
    _
  $region5: #{rel_mha_forward.1} parent=0 // pred_fallthru
    _
  // Predicated region
  $region6: #{rel_mha_forward.1} parent=0 // pred_check
    _
  $region7: #{rel_mha_forward.1} parent=0 // pred_check_branch
    %17 = sbr.rel (0) target = $region9
  $region8: #{rel_mha_forward.1} parent=0 // pred_region
    _
  $region9: #{rel_mha_forward.1} parent=0 // pred_fallthru
    _
  // Predicated region
  $region10: #{rel_mha_forward.1} parent=0 // pred_check
    _
  $region11: #{rel_mha_forward.1} parent=0 // pred_check_branch
    %19 = sbr.rel (0) target = $region13
  $region12: #{rel_mha_forward.1} parent=0 // pred_region
    _
  $region13: #{rel_mha_forward.1} parent=0 // pred_fallthru
    _
  // Predicated region
  $region14: #{rel_mha_forward.1} parent=0 // pred_check
    _
  $region15: #{rel_mha_forward.1} parent=0 // pred_check_branch
    %21 = sbr.rel (0) target = $region17
  $region16: #{rel_mha_forward.1} parent=0 // pred_region
    _
  $region17: #{rel_mha_forward.1} parent=0 // pred_fallthru
    _
  // Predicated region
  $region18: #{rel_mha_forward.1} parent=0 // pred_check
    _
  $region19: #{rel_mha_forward.1} parent=0 // pred_check_branch
    %23 = sbr.rel (0) target = $region21
  $region20: #{rel_mha_forward.1} parent=0 // pred_region
    _
  $region21: #{rel_mha_forward.1} parent=0 // pred_fallthru
    _
  // Predicated region
  $region22: #{rel_mha_forward.1} parent=0 // pred_check
    _
  $region23: #{rel_mha_forward.1} parent=0 // pred_check_branch
    %25 = sbr.rel (0) target = $region25
  $region24: #{rel_mha_forward.1} parent=0 // pred_region
    _
  $region25: #{rel_mha_forward.1} parent=0 // pred_fallthru
    _
  // Predicated region
  $region26: #{rel_mha_forward.1} parent=0 // pred_check
    _
  $region27: #{rel_mha_forward.1} parent=0 // pred_check_branch
    %27 = sbr.rel (0) target = $region29
  $region28: #{rel_mha_forward.1} parent=0 // pred_region
    _
  $region29: #{rel_mha_forward.1} parent=0 // pred_fallthru
    _
  // Predicated region
  $region30: #{rel_mha_forward.1} parent=0 // pred_check
    _
  $region31: #{rel_mha_forward.1} parent=0 // pred_check_branch
    %29 = sbr.rel (0) target = $region33
  $region32: #{rel_mha_forward.1} parent=0 // pred_region
    _
  $region33: #{rel_mha_forward.1} parent=0 // pred_fallthru
    _
  // Predicated region
  $region34: #{rel_mha_forward.1} parent=0 // pred_check
    _
  $region35: #{rel_mha_forward.1} parent=0 // pred_check_branch
    %31 = sbr.rel (0) target = $region37
  $region36: #{rel_mha_forward.1} parent=0 // pred_region
    _
  $region37: #{rel_mha_forward.1} parent=0 // pred_fallthru
    _
  %v33 = vld [vmem:[%s0] sm:$0xff]
  %v34 = vld [vmem:[%s0 + $0x8] sm:$0xff]
  %v35 = vpack.c.bf16 %v33, %v33
  %v36 = vpack.c.bf16 %v34, %v34
  %v37 = vld [vmem:[%s1] sm:$0xf]
  %v38 = vld [vmem:[%s2] sm:$0xf]
  %v39 = vld [vmem:[%s2 + $0x4] sm:$0xf]
  %v40 = vld [vmem:[%s2 + $0x8] sm:$0xf]
  %v41 = vld [vmem:[%s2 + $0xc] sm:$0xf]
  %v42 = vld [vmem:[%s3] sm:$0xf]
  %v43 = vld [vmem:[%s3 + $0x4] sm:$0xf]
  %v44 = vld [vmem:[%s3 + $0x8] sm:$0xf]
  %v45 = vld [vmem:[%s3 + $0xc] sm:$0xf]
  %v46 = vld [vmem:[%s3 + $0x10] sm:$0xf]
  %v47 = vld [vmem:[%s3 + $0x14] sm:$0xf]
  %v48 = vld [vmem:[%s3 + $0x18] sm:$0xf]
  %v49 = vld [vmem:[%s3 + $0x1c] sm:$0xf]
  %v50 = vld [vmem:[%s3 + $0x20] sm:$0xf]
  %v51 = vld [vmem:[%s3 + $0x24] sm:$0xf]
  %v52 = vld [vmem:[%s3 + $0x28] sm:$0xf]
  %v53 = vld [vmem:[%s3 + $0x2c] sm:$0xf]
  %v54 = vld [vmem:[%s3 + $0x30] sm:$0xf]
  %v55 = vld [vmem:[%s3 + $0x34] sm:$0xf]
  %v56 = vld [vmem:[%s3 + $0x38] sm:$0xf]
  %v57 = vld [vmem:[%s3 + $0x3c] sm:$0xf]
  %v58 = vld [vmem:[%s3 + $0x40] sm:$0xf]
  %v59 = vld [vmem:[%s3 + $0x44] sm:$0xf]
  %v60 = vld [vmem:[%s3 + $0x48] sm:$0xf]
  %v61 = vld [vmem:[%s3 + $0x4c] sm:$0xf]
  %v62 = vld [vmem:[%s3 + $0x50] sm:$0xf]
  %v63 = vld [vmem:[%s3 + $0x54] sm:$0xf]
  %v64 = vld [vmem:[%s3 + $0x58] sm:$0xf]
  %v65 = vld [vmem:[%s3 + $0x5c] sm:$0xf]
  %v66 = vld [vmem:[%s3 + $0x60] sm:$0xf]
  %v67 = vld [vmem:[%s3 + $0x64] sm:$0xf]
  %v68 = vld [vmem:[%s3 + $0x68] sm:$0xf]
  %v69 = vld [vmem:[%s3 + $0x6c] sm:$0xf]
  %v70 = vld [vmem:[%s3 + $0x70] sm:$0xf]
  %v71 = vld [vmem:[%s3 + $0x74] sm:$0xf]
  %v72 = vld [vmem:[%s3 + $0x78] sm:$0xf]
  %v73 = vld [vmem:[%s3 + $0x7c] sm:$0xf]
  %v78 = vunpack.c.l.b16 %v42
  %v79 = vunpack.c.l.b16 %v43
  %v80 = vunpack.c.l.b16 %v44
  %v81 = vunpack.c.l.b16 %v45
  %v82 = vpack.c.b16 %v79, %v78
  %v83 = vpack.c.b16 %v81, %v80
  %vm86 = vcmask 261120
  %v88 = vsel %vm86, %v35, 0
  %90 = vmatpush.bf16.msra.mxu0 0
  %91 = vmatpush.bf16.msra.mxu0 0
  %92 = vmatpush.bf16.msra.mxu0 0
  %93 = vmatpush.bf16.msra.mxu0 0
  %94 = vmatpush.bf16.msra.mxu0 0
  %95 = vmatpush.bf16.msra.mxu0 0
  %96 = vmatpush.bf16.msra.mxu0 %v83
  %97 = vmatpush.bf16.msra.mxu0 %v82
  %98 = vmatmul.bf16.gmra.mxu0 %v88
  %v99 = vpop.f32.mrf.mxu0
  %v100 = vadd.f32 0.0, %v99
  %v101 = vpop.f32.mrf.mxu0
  %102 = vdwg.mxu0
  %v107 = vunpack.c.l.b16 %v46
  %v108 = vunpack.c.l.b16 %v47
  %v109 = vunpack.c.l.b16 %v48
  %v110 = vunpack.c.l.b16 %v49
  %v111 = vpack.c.b16 %v108, %v107
  %v112 = vpack.c.b16 %v110, %v109
  %v116 = vsel %vm86, %v36, 0
  %118 = vmatpush.bf16.msra.mxu0 0
  %119 = vmatpush.bf16.msra.mxu0 0
  %120 = vmatpush.bf16.msra.mxu0 0
  %121 = vmatpush.bf16.msra.mxu0 0
  %122 = vmatpush.bf16.msra.mxu0 0
  %123 = vmatpush.bf16.msra.mxu0 0
  %124 = vmatpush.bf16.msra.mxu0 %v112
  %125 = vmatpush.bf16.msra.mxu0 %v111
  %126 = vmatmul.bf16.gmra.mxu0 %v116
  %v127 = vpop.f32.mrf.mxu0
  %v128 = vadd.f32 0.0, %v127
  %v129 = vpop.f32.mrf.mxu0
  %130 = vdwg.mxu0
  %v135 = vunpack.c.l.b16 %v50
  %v136 = vunpack.c.l.b16 %v51
  %v137 = vunpack.c.l.b16 %v52
  %v138 = vunpack.c.l.b16 %v53
  %v139 = vpack.c.b16 %v136, %v135
  %v140 = vpack.c.b16 %v138, %v137
  %143 = vmatpush.bf16.msra.mxu0 0
  %144 = vmatpush.bf16.msra.mxu0 0
  %145 = vmatpush.bf16.msra.mxu0 0
  %146 = vmatpush.bf16.msra.mxu0 0
  %147 = vmatpush.bf16.msra.mxu0 0
  %148 = vmatpush.bf16.msra.mxu0 0
  %149 = vmatpush.bf16.msra.mxu0 %v140
  %150 = vmatpush.bf16.msra.mxu0 %v139
  %151 = vmatmul.bf16.gmra.mxu0 %v88
  %v152 = vpop.f32.mrf.mxu0
  %v153 = vadd.f32 0.0, %v152
  %v154 = vpop.f32.mrf.mxu0
  %155 = vdwg.mxu0
  %v160 = vunpack.c.l.b16 %v54
  %v161 = vunpack.c.l.b16 %v55
  %v162 = vunpack.c.l.b16 %v56
  %v163 = vunpack.c.l.b16 %v57
  %v164 = vpack.c.b16 %v161, %v160
  %v165 = vpack.c.b16 %v163, %v162
  %168 = vmatpush.bf16.msra.mxu0 0
  %169 = vmatpush.bf16.msra.mxu0 0
  %170 = vmatpush.bf16.msra.mxu0 0
  %171 = vmatpush.bf16.msra.mxu0 0
  %172 = vmatpush.bf16.msra.mxu0 0
  %173 = vmatpush.bf16.msra.mxu0 0
  %174 = vmatpush.bf16.msra.mxu0 %v165
  %175 = vmatpush.bf16.msra.mxu0 %v164
  %176 = vmatmul.bf16.gmra.mxu0 %v116
  %v177 = vpop.f32.mrf.mxu0
  %v178 = vadd.f32 0.0, %v177
  %v179 = vpop.f32.mrf.mxu0
  %180 = vdwg.mxu0
  %v185 = vunpack.c.l.b16 %v58
  %v186 = vunpack.c.l.b16 %v59
  %v187 = vunpack.c.l.b16 %v60
  %v188 = vunpack.c.l.b16 %v61
  %v189 = vpack.c.b16 %v186, %v185
  %v190 = vpack.c.b16 %v188, %v187
  %193 = vmatpush.bf16.msra.mxu0 0
  %194 = vmatpush.bf16.msra.mxu0 0
  %195 = vmatpush.bf16.msra.mxu0 0
  %196 = vmatpush.bf16.msra.mxu0 0
  %197 = vmatpush.bf16.msra.mxu0 0
  %198 = vmatpush.bf16.msra.mxu0 0
  %199 = vmatpush.bf16.msra.mxu0 %v190
  %200 = vmatpush.bf16.msra.mxu0 %v189
  %201 = vmatmul.bf16.gmra.mxu0 %v88
  %v202 = vpop.f32.mrf.mxu0
  %v203 = vadd.f32 0.0, %v202
  %v204 = vpop.f32.mrf.mxu0
  %205 = vdwg.mxu0
  %v210 = vunpack.c.l.b16 %v62
  %v211 = vunpack.c.l.b16 %v63
  %v212 = vunpack.c.l.b16 %v64
  %v213 = vunpack.c.l.b16 %v65
  %v214 = vpack.c.b16 %v211, %v210
  %v215 = vpack.c.b16 %v213, %v212
  %218 = vmatpush.bf16.msra.mxu0 0
  %219 = vmatpush.bf16.msra.mxu0 0
  %220 = vmatpush.bf16.msra.mxu0 0
  %221 = vmatpush.bf16.msra.mxu0 0
  %222 = vmatpush.bf16.msra.mxu0 0
  %223 = vmatpush.bf16.msra.mxu0 0
  %224 = vmatpush.bf16.msra.mxu0 %v215
  %225 = vmatpush.bf16.msra.mxu0 %v214
  %226 = vmatmul.bf16.gmra.mxu0 %v116
  %v227 = vpop.f32.mrf.mxu0
  %v228 = vadd.f32 0.0, %v227
  %v229 = vpop.f32.mrf.mxu0
  %230 = vdwg.mxu0
  %v235 = vunpack.c.l.b16 %v66
  %v236 = vunpack.c.l.b16 %v67
  %v237 = vunpack.c.l.b16 %v68
  %v238 = vunpack.c.l.b16 %v69
  %v239 = vpack.c.b16 %v236, %v235
  %v240 = vpack.c.b16 %v238, %v237
  %243 = vmatpush.bf16.msra.mxu0 0
  %244 = vmatpush.bf16.msra.mxu0 0
  %245 = vmatpush.bf16.msra.mxu0 0
  %246 = vmatpush.bf16.msra.mxu0 0
  %247 = vmatpush.bf16.msra.mxu0 0
  %248 = vmatpush.bf16.msra.mxu0 0
  %249 = vmatpush.bf16.msra.mxu0 %v240
  %250 = vmatpush.bf16.msra.mxu0 %v239
  %251 = vmatmul.bf16.gmra.mxu0 %v88
  %v252 = vpop.f32.mrf.mxu0
  %v253 = vadd.f32 0.0, %v252
  %v254 = vpop.f32.mrf.mxu0
  %255 = vdwg.mxu0
  %v260 = vunpack.c.l.b16 %v70
  %v261 = vunpack.c.l.b16 %v71
  %v262 = vunpack.c.l.b16 %v72
  %v263 = vunpack.c.l.b16 %v73
  %v264 = vpack.c.b16 %v261, %v260
  %v265 = vpack.c.b16 %v263, %v262
  %268 = vmatpush.bf16.msra.mxu0 0
  %269 = vmatpush.bf16.msra.mxu0 0
  %270 = vmatpush.bf16.msra.mxu0 0
  %271 = vmatpush.bf16.msra.mxu0 0
  %272 = vmatpush.bf16.msra.mxu0 0
  %273 = vmatpush.bf16.msra.mxu0 0
  %274 = vmatpush.bf16.msra.mxu0 %v265
  %275 = vmatpush.bf16.msra.mxu0 %v264
  %276 = vmatmul.bf16.gmra.mxu0 %v116
  %v277 = vpop.f32.mrf.mxu0
  %v278 = vadd.f32 0.0, %v277
  %v279 = vpop.f32.mrf.mxu0
  %280 = vdwg.mxu0
  %s281 = scalar_lea.vmem %s3, 128
  %v282 = vld [vmem:[%s281] sm:$0xf]
  %v283 = vld [vmem:[%s281 + $0x4] sm:$0xf]
  %v284 = vld [vmem:[%s281 + $0x8] sm:$0xf]
  %v285 = vld [vmem:[%s281 + $0xc] sm:$0xf]
  %v286 = vld [vmem:[%s281 + $0x10] sm:$0xf]
  %v287 = vld [vmem:[%s281 + $0x14] sm:$0xf]
  %v288 = vld [vmem:[%s281 + $0x18] sm:$0xf]
  %v289 = vld [vmem:[%s281 + $0x1c] sm:$0xf]
  %v290 = vld [vmem:[%s281 + $0x20] sm:$0xf]
  %v291 = vld [vmem:[%s281 + $0x24] sm:$0xf]
  %v292 = vld [vmem:[%s281 + $0x28] sm:$0xf]
  %v293 = vld [vmem:[%s281 + $0x2c] sm:$0xf]
  %v294 = vld [vmem:[%s281 + $0x30] sm:$0xf]
  %v295 = vld [vmem:[%s281 + $0x34] sm:$0xf]
  %v296 = vld [vmem:[%s281 + $0x38] sm:$0xf]
  %v297 = vld [vmem:[%s281 + $0x3c] sm:$0xf]
  %v298 = vld [vmem:[%s281 + $0x40] sm:$0xf]
  %v299 = vld [vmem:[%s281 + $0x44] sm:$0xf]
  %v300 = vld [vmem:[%s281 + $0x48] sm:$0xf]
  %v301 = vld [vmem:[%s281 + $0x4c] sm:$0xf]
  %v302 = vld [vmem:[%s281 + $0x50] sm:$0xf]
  %v303 = vld [vmem:[%s281 + $0x54] sm:$0xf]
  %v304 = vld [vmem:[%s281 + $0x58] sm:$0xf]
  %v305 = vld [vmem:[%s281 + $0x5c] sm:$0xf]
  %v306 = vld [vmem:[%s281 + $0x60] sm:$0xf]
  %v307 = vld [vmem:[%s281 + $0x64] sm:$0xf]
  %v308 = vld [vmem:[%s281 + $0x68] sm:$0xf]
  %v309 = vld [vmem:[%s281 + $0x6c] sm:$0xf]
  %v310 = vld [vmem:[%s281 + $0x70] sm:$0xf]
  %v311 = vld [vmem:[%s281 + $0x74] sm:$0xf]
  %v312 = vld [vmem:[%s281 + $0x78] sm:$0xf]
  %v313 = vld [vmem:[%s281 + $0x7c] sm:$0xf]
  %v318 = vunpack.c.l.b16 %v282
  %v319 = vunpack.c.l.b16 %v283
  %v320 = vunpack.c.l.b16 %v284
  %v321 = vunpack.c.l.b16 %v285
  %v322 = vpack.c.b16 %v319, %v318
  %v323 = vpack.c.b16 %v321, %v320
  %326 = vmatpush.bf16.msra.mxu0 0
  %327 = vmatpush.bf16.msra.mxu0 0
  %328 = vmatpush.bf16.msra.mxu0 0
  %329 = vmatpush.bf16.msra.mxu0 0
  %330 = vmatpush.bf16.msra.mxu0 0
  %331 = vmatpush.bf16.msra.mxu0 0
  %332 = vmatpush.bf16.msra.mxu0 %v323
  %333 = vmatpush.bf16.msra.mxu0 %v322
  %334 = vmatmul.bf16.gmra.mxu0 %v88
  %v335 = vpop.f32.mrf.mxu0
  %v336 = vadd.f32 0.0, %v335
  %v337 = vpop.f32.mrf.mxu0
  %338 = vdwg.mxu0
  %v343 = vunpack.c.l.b16 %v286
  %v344 = vunpack.c.l.b16 %v287
  %v345 = vunpack.c.l.b16 %v288
  %v346 = vunpack.c.l.b16 %v289
  %v347 = vpack.c.b16 %v344, %v343
  %v348 = vpack.c.b16 %v346, %v345
  %351 = vmatpush.bf16.msra.mxu0 0
  %352 = vmatpush.bf16.msra.mxu0 0
  %353 = vmatpush.bf16.msra.mxu0 0
  %354 = vmatpush.bf16.msra.mxu0 0
  %355 = vmatpush.bf16.msra.mxu0 0
  %356 = vmatpush.bf16.msra.mxu0 0
  %357 = vmatpush.bf16.msra.mxu0 %v348
  %358 = vmatpush.bf16.msra.mxu0 %v347
  %359 = vmatmul.bf16.gmra.mxu0 %v116
  %v360 = vpop.f32.mrf.mxu0
  %v361 = vadd.f32 0.0, %v360
  %v362 = vpop.f32.mrf.mxu0
  %363 = vdwg.mxu0
  %v368 = vunpack.c.l.b16 %v290
  %v369 = vunpack.c.l.b16 %v291
  %v370 = vunpack.c.l.b16 %v292
  %v371 = vunpack.c.l.b16 %v293
  %v372 = vpack.c.b16 %v369, %v368
  %v373 = vpack.c.b16 %v371, %v370
  %376 = vmatpush.bf16.msra.mxu0 0
  %377 = vmatpush.bf16.msra.mxu0 0
  %378 = vmatpush.bf16.msra.mxu0 0
  %379 = vmatpush.bf16.msra.mxu0 0
  %380 = vmatpush.bf16.msra.mxu0 0
  %381 = vmatpush.bf16.msra.mxu0 0
  %382 = vmatpush.bf16.msra.mxu0 %v373
  %383 = vmatpush.bf16.msra.mxu0 %v372
  %384 = vmatmul.bf16.gmra.mxu0 %v88
  %v385 = vpop.f32.mrf.mxu0
  %v386 = vadd.f32 0.0, %v385
  %v387 = vpop.f32.mrf.mxu0
  %388 = vdwg.mxu0
  %v393 = vunpack.c.l.b16 %v294
  %v394 = vunpack.c.l.b16 %v295
  %v395 = vunpack.c.l.b16 %v296
  %v396 = vunpack.c.l.b16 %v297
  %v397 = vpack.c.b16 %v394, %v393
  %v398 = vpack.c.b16 %v396, %v395
  %401 = vmatpush.bf16.msra.mxu0 0
  %402 = vmatpush.bf16.msra.mxu0 0
  %403 = vmatpush.bf16.msra.mxu0 0
  %404 = vmatpush.bf16.msra.mxu0 0
  %405 = vmatpush.bf16.msra.mxu0 0
  %406 = vmatpush.bf16.msra.mxu0 0
  %407 = vmatpush.bf16.msra.mxu0 %v398
  %408 = vmatpush.bf16.msra.mxu0 %v397
  %409 = vmatmul.bf16.gmra.mxu0 %v116
  %v410 = vpop.f32.mrf.mxu0
  %v411 = vadd.f32 0.0, %v410
  %v412 = vpop.f32.mrf.mxu0
  %413 = vdwg.mxu0
  %v418 = vunpack.c.l.b16 %v298
  %v419 = vunpack.c.l.b16 %v299
  %v420 = vunpack.c.l.b16 %v300
  %v421 = vunpack.c.l.b16 %v301
  %v422 = vpack.c.b16 %v419, %v418
  %v423 = vpack.c.b16 %v421, %v420
  %426 = vmatpush.bf16.msra.mxu0 0
  %427 = vmatpush.bf16.msra.mxu0 0
  %428 = vmatpush.bf16.msra.mxu0 0
  %429 = vmatpush.bf16.msra.mxu0 0
  %430 = vmatpush.bf16.msra.mxu0 0
  %431 = vmatpush.bf16.msra.mxu0 0
  %432 = vmatpush.bf16.msra.mxu0 %v423
  %433 = vmatpush.bf16.msra.mxu0 %v422
  %434 = vmatmul.bf16.gmra.mxu0 %v88
  %v435 = vpop.f32.mrf.mxu0
  %v436 = vadd.f32 0.0, %v435
  %v437 = vpop.f32.mrf.mxu0
  %438 = vdwg.mxu0
  %v443 = vunpack.c.l.b16 %v302
  %v444 = vunpack.c.l.b16 %v303
  %v445 = vunpack.c.l.b16 %v304
  %v446 = vunpack.c.l.b16 %v305
  %v447 = vpack.c.b16 %v444, %v443
  %v448 = vpack.c.b16 %v446, %v445
  %451 = vmatpush.bf16.msra.mxu0 0
  %452 = vmatpush.bf16.msra.mxu0 0
  %453 = vmatpush.bf16.msra.mxu0 0
  %454 = vmatpush.bf16.msra.mxu0 0
  %455 = vmatpush.bf16.msra.mxu0 0
  %456 = vmatpush.bf16.msra.mxu0 0
  %457 = vmatpush.bf16.msra.mxu0 %v448
  %458 = vmatpush.bf16.msra.mxu0 %v447
  %459 = vmatmul.bf16.gmra.mxu0 %v116
  %v460 = vpop.f32.mrf.mxu0
  %v461 = vadd.f32 0.0, %v460
  %v462 = vpop.f32.mrf.mxu0
  %463 = vdwg.mxu0
  %v468 = vunpack.c.l.b16 %v306
  %v469 = vunpack.c.l.b16 %v307
  %v470 = vunpack.c.l.b16 %v308
  %v471 = vunpack.c.l.b16 %v309
  %v472 = vpack.c.b16 %v469, %v468
  %v473 = vpack.c.b16 %v471, %v470
  %476 = vmatpush.bf16.msra.mxu0 0
  %477 = vmatpush.bf16.msra.mxu0 0
  %478 = vmatpush.bf16.msra.mxu0 0
  %479 = vmatpush.bf16.msra.mxu0 0
  %480 = vmatpush.bf16.msra.mxu0 0
  %481 = vmatpush.bf16.msra.mxu0 0
  %482 = vmatpush.bf16.msra.mxu0 %v473
  %483 = vmatpush.bf16.msra.mxu0 %v472
  %484 = vmatmul.bf16.gmra.mxu0 %v88
  %v485 = vpop.f32.mrf.mxu0
  %v486 = vadd.f32 0.0, %v485
  %v487 = vpop.f32.mrf.mxu0
  %488 = vdwg.mxu0
  %v493 = vunpack.c.l.b16 %v310
  %v494 = vunpack.c.l.b16 %v311
  %v495 = vunpack.c.l.b16 %v312
  %v496 = vunpack.c.l.b16 %v313
  %v497 = vpack.c.b16 %v494, %v493
  %v498 = vpack.c.b16 %v496, %v495
  %501 = vmatpush.bf16.msra.mxu0 0
  %502 = vmatpush.bf16.msra.mxu0 0
  %503 = vmatpush.bf16.msra.mxu0 0
  %504 = vmatpush.bf16.msra.mxu0 0
  %505 = vmatpush.bf16.msra.mxu0 0
  %506 = vmatpush.bf16.msra.mxu0 0
  %507 = vmatpush.bf16.msra.mxu0 %v498
  %508 = vmatpush.bf16.msra.mxu0 %v497
  %509 = vmatmul.bf16.gmra.mxu0 %v116
  %v510 = vpop.f32.mrf.mxu0
  %v511 = vadd.f32 0.0, %v510
  %v512 = vpop.f32.mrf.mxu0
  %513 = vdwg.mxu0
  %v514 = vpack.c.bf16 %v336, %v336
  %v515 = vpack.c.bf16 %v361, %v361
  %v516 = vpack.c.bf16 %v386, %v386
  %v517 = vpack.c.bf16 %v411, %v411
  %v518 = vpack.c.bf16 %v436, %v436
  %v519 = vpack.c.bf16 %v461, %v461
  %v520 = vpack.c.bf16 %v486, %v486
  %v521 = vpack.c.bf16 %v511, %v511
  %s522 = scalar_lea.vmem %s3, 256
  %v523 = vld [vmem:[%s522] sm:$0xf]
  %v524 = vld [vmem:[%s522 + $0x4] sm:$0xf]
  %v525 = vld [vmem:[%s522 + $0x8] sm:$0xf]
  %v526 = vld [vmem:[%s522 + $0xc] sm:$0xf]
  %v527 = vld [vmem:[%s522 + $0x10] sm:$0xf]
  %v528 = vld [vmem:[%s522 + $0x14] sm:$0xf]
  %v529 = vld [vmem:[%s522 + $0x18] sm:$0xf]
  %v530 = vld [vmem:[%s522 + $0x1c] sm:$0xf]
  %v531 = vld [vmem:[%s522 + $0x20] sm:$0xf]
  %v532 = vld [vmem:[%s522 + $0x24] sm:$0xf]
  %v533 = vld [vmem:[%s522 + $0x28] sm:$0xf]
  %v534 = vld [vmem:[%s522 + $0x2c] sm:$0xf]
  %v535 = vld [vmem:[%s522 + $0x30] sm:$0xf]
  %v536 = vld [vmem:[%s522 + $0x34] sm:$0xf]
  %v537 = vld [vmem:[%s522 + $0x38] sm:$0xf]
  %v538 = vld [vmem:[%s522 + $0x3c] sm:$0xf]
  %v539 = vld [vmem:[%s522 + $0x40] sm:$0xf]
  %v540 = vld [vmem:[%s522 + $0x44] sm:$0xf]
  %v541 = vld [vmem:[%s522 + $0x48] sm:$0xf]
  %v542 = vld [vmem:[%s522 + $0x4c] sm:$0xf]
  %v543 = vld [vmem:[%s522 + $0x50] sm:$0xf]
  %v544 = vld [vmem:[%s522 + $0x54] sm:$0xf]
  %v545 = vld [vmem:[%s522 + $0x58] sm:$0xf]
  %v546 = vld [vmem:[%s522 + $0x5c] sm:$0xf]
  %v547 = vld [vmem:[%s522 + $0x60] sm:$0xf]
  %v548 = vld [vmem:[%s522 + $0x64] sm:$0xf]
  %v549 = vld [vmem:[%s522 + $0x68] sm:$0xf]
  %v550 = vld [vmem:[%s522 + $0x6c] sm:$0xf]
  %v551 = vld [vmem:[%s522 + $0x70] sm:$0xf]
  %v552 = vld [vmem:[%s522 + $0x74] sm:$0xf]
  %v553 = vld [vmem:[%s522 + $0x78] sm:$0xf]
  %v554 = vld [vmem:[%s522 + $0x7c] sm:$0xf]
  %v559 = vunpack.c.l.b16 %v523
  %v560 = vunpack.c.l.b16 %v524
  %v561 = vunpack.c.l.b16 %v525
  %v562 = vunpack.c.l.b16 %v526
  %v563 = vpack.c.b16 %v560, %v559
  %v564 = vpack.c.b16 %v562, %v561
  %567 = vmatpush.bf16.msra.mxu0 0
  %568 = vmatpush.bf16.msra.mxu0 0
  %569 = vmatpush.bf16.msra.mxu0 0
  %570 = vmatpush.bf16.msra.mxu0 0
  %571 = vmatpush.bf16.msra.mxu0 0
  %572 = vmatpush.bf16.msra.mxu0 0
  %573 = vmatpush.bf16.msra.mxu0 %v564
  %574 = vmatpush.bf16.msra.mxu0 %v563
  %575 = vmatmul.bf16.gmra.mxu0 %v88
  %v576 = vpop.f32.mrf.mxu0
  %v577 = vadd.f32 0.0, %v576
  %v578 = vpop.f32.mrf.mxu0
  %579 = vdwg.mxu0
  %v584 = vunpack.c.l.b16 %v527
  %v585 = vunpack.c.l.b16 %v528
  %v586 = vunpack.c.l.b16 %v529
  %v587 = vunpack.c.l.b16 %v530
  %v588 = vpack.c.b16 %v585, %v584
  %v589 = vpack.c.b16 %v587, %v586
  %592 = vmatpush.bf16.msra.mxu0 0
  %593 = vmatpush.bf16.msra.mxu0 0
  %594 = vmatpush.bf16.msra.mxu0 0
  %595 = vmatpush.bf16.msra.mxu0 0
  %596 = vmatpush.bf16.msra.mxu0 0
  %597 = vmatpush.bf16.msra.mxu0 0
  %598 = vmatpush.bf16.msra.mxu0 %v589
  %599 = vmatpush.bf16.msra.mxu0 %v588
  %600 = vmatmul.bf16.gmra.mxu0 %v116
  %v601 = vpop.f32.mrf.mxu0
  %v602 = vadd.f32 0.0, %v601
  %v603 = vpop.f32.mrf.mxu0
  %604 = vdwg.mxu0
  %v609 = vunpack.c.l.b16 %v531
  %v610 = vunpack.c.l.b16 %v532
  %v611 = vunpack.c.l.b16 %v533
  %v612 = vunpack.c.l.b16 %v534
  %v613 = vpack.c.b16 %v610, %v609
  %v614 = vpack.c.b16 %v612, %v611
  %617 = vmatpush.bf16.msra.mxu0 0
  %618 = vmatpush.bf16.msra.mxu0 0
  %619 = vmatpush.bf16.msra.mxu0 0
  %620 = vmatpush.bf16.msra.mxu0 0
  %621 = vmatpush.bf16.msra.mxu0 0
  %622 = vmatpush.bf16.msra.mxu0 0
  %623 = vmatpush.bf16.msra.mxu0 %v614
  %624 = vmatpush.bf16.msra.mxu0 %v613
  %625 = vmatmul.bf16.gmra.mxu0 %v88
  %v626 = vpop.f32.mrf.mxu0
  %v627 = vadd.f32 0.0, %v626
  %v628 = vpop.f32.mrf.mxu0
  %629 = vdwg.mxu0
  %v634 = vunpack.c.l.b16 %v535
  %v635 = vunpack.c.l.b16 %v536
  %v636 = vunpack.c.l.b16 %v537
  %v637 = vunpack.c.l.b16 %v538
  %v638 = vpack.c.b16 %v635, %v634
  %v639 = vpack.c.b16 %v637, %v636
  %642 = vmatpush.bf16.msra.mxu0 0
  %643 = vmatpush.bf16.msra.mxu0 0
  %644 = vmatpush.bf16.msra.mxu0 0
  %645 = vmatpush.bf16.msra.mxu0 0
  %646 = vmatpush.bf16.msra.mxu0 0
  %647 = vmatpush.bf16.msra.mxu0 0
  %648 = vmatpush.bf16.msra.mxu0 %v639
  %649 = vmatpush.bf16.msra.mxu0 %v638
  %650 = vmatmul.bf16.gmra.mxu0 %v116
  %v651 = vpop.f32.mrf.mxu0
  %v652 = vadd.f32 0.0, %v651
  %v653 = vpop.f32.mrf.mxu0
  %654 = vdwg.mxu0
  %v659 = vunpack.c.l.b16 %v539
  %v660 = vunpack.c.l.b16 %v540
  %v661 = vunpack.c.l.b16 %v541
  %v662 = vunpack.c.l.b16 %v542
  %v663 = vpack.c.b16 %v660, %v659
  %v664 = vpack.c.b16 %v662, %v661
  %667 = vmatpush.bf16.msra.mxu0 0
  %668 = vmatpush.bf16.msra.mxu0 0
  %669 = vmatpush.bf16.msra.mxu0 0
  %670 = vmatpush.bf16.msra.mxu0 0
  %671 = vmatpush.bf16.msra.mxu0 0
  %672 = vmatpush.bf16.msra.mxu0 0
  %673 = vmatpush.bf16.msra.mxu0 %v664
  %674 = vmatpush.bf16.msra.mxu0 %v663
  %675 = vmatmul.bf16.gmra.mxu0 %v88
  %v676 = vpop.f32.mrf.mxu0
  %v677 = vadd.f32 0.0, %v676
  %v678 = vpop.f32.mrf.mxu0
  %679 = vdwg.mxu0
  %v684 = vunpack.c.l.b16 %v543
  %v685 = vunpack.c.l.b16 %v544
  %v686 = vunpack.c.l.b16 %v545
  %v687 = vunpack.c.l.b16 %v546
  %v688 = vpack.c.b16 %v685, %v684
  %v689 = vpack.c.b16 %v687, %v686
  %692 = vmatpush.bf16.msra.mxu0 0
  %693 = vmatpush.bf16.msra.mxu0 0
  %694 = vmatpush.bf16.msra.mxu0 0
  %695 = vmatpush.bf16.msra.mxu0 0
  %696 = vmatpush.bf16.msra.mxu0 0
  %697 = vmatpush.bf16.msra.mxu0 0
  %698 = vmatpush.bf16.msra.mxu0 %v689
  %699 = vmatpush.bf16.msra.mxu0 %v688
  %700 = vmatmul.bf16.gmra.mxu0 %v116
  %v701 = vpop.f32.mrf.mxu0
  %v702 = vadd.f32 0.0, %v701
  %v703 = vpop.f32.mrf.mxu0
  %704 = vdwg.mxu0
  %v709 = vunpack.c.l.b16 %v547
  %v710 = vunpack.c.l.b16 %v548
  %v711 = vunpack.c.l.b16 %v549
  %v712 = vunpack.c.l.b16 %v550
  %v713 = vpack.c.b16 %v710, %v709
  %v714 = vpack.c.b16 %v712, %v711
  %717 = vmatpush.bf16.msra.mxu0 0
  %718 = vmatpush.bf16.msra.mxu0 0
  %719 = vmatpush.bf16.msra.mxu0 0
  %720 = vmatpush.bf16.msra.mxu0 0
  %721 = vmatpush.bf16.msra.mxu0 0
  %722 = vmatpush.bf16.msra.mxu0 0
  %723 = vmatpush.bf16.msra.mxu0 %v714
  %724 = vmatpush.bf16.msra.mxu0 %v713
  %725 = vmatmul.bf16.gmra.mxu0 %v88
  %v726 = vpop.f32.mrf.mxu0
  %v727 = vadd.f32 0.0, %v726
  %v728 = vpop.f32.mrf.mxu0
  %729 = vdwg.mxu0
  %v734 = vunpack.c.l.b16 %v551
  %v735 = vunpack.c.l.b16 %v552
  %v736 = vunpack.c.l.b16 %v553
  %v737 = vunpack.c.l.b16 %v554
  %v738 = vpack.c.b16 %v735, %v734
  %v739 = vpack.c.b16 %v737, %v736
  %742 = vmatpush.bf16.msra.mxu0 0
  %743 = vmatpush.bf16.msra.mxu0 0
  %744 = vmatpush.bf16.msra.mxu0 0
  %745 = vmatpush.bf16.msra.mxu0 0
  %746 = vmatpush.bf16.msra.mxu0 0
  %747 = vmatpush.bf16.msra.mxu0 0
  %748 = vmatpush.bf16.msra.mxu0 %v739
  %749 = vmatpush.bf16.msra.mxu0 %v738
  %750 = vmatmul.bf16.gmra.mxu0 %v116
  %v751 = vpop.f32.mrf.mxu0
  %v752 = vadd.f32 0.0, %v751
  %v753 = vpop.f32.mrf.mxu0
  %754 = vdwg.mxu0
  %v755 = vpack.c.bf16 %v577, %v577
  %v756 = vpack.c.bf16 %v602, %v602
  %v757 = vpack.c.bf16 %v627, %v627
  %v758 = vpack.c.bf16 %v652, %v652
  %v759 = vpack.c.bf16 %v677, %v677
  %v760 = vpack.c.bf16 %v702, %v702
  %v761 = vpack.c.bf16 %v727, %v727
  %v762 = vpack.c.bf16 %v752, %v752
  %s763 = scalar_lea.vmem %s3, 384
  %v764 = vld [vmem:[%s763] sm:$0xf]
  %v765 = vld [vmem:[%s763 + $0x4] sm:$0xf]
  %v766 = vld [vmem:[%s763 + $0x8] sm:$0xf]
  %v767 = vld [vmem:[%s763 + $0xc] sm:$0xf]
  %v768 = vld [vmem:[%s763 + $0x10] sm:$0xf]
  %v769 = vld [vmem:[%s763 + $0x14] sm:$0xf]
  %v770 = vld [vmem:[%s763 + $0x18] sm:$0xf]
  %v771 = vld [vmem:[%s763 + $0x1c] sm:$0xf]
  %v772 = vld [vmem:[%s763 + $0x20] sm:$0xf]
  %v773 = vld [vmem:[%s763 + $0x24] sm:$0xf]
  %v774 = vld [vmem:[%s763 + $0x28] sm:$0xf]
  %v775 = vld [vmem:[%s763 + $0x2c] sm:$0xf]
  %v776 = vld [vmem:[%s763 + $0x30] sm:$0xf]
  %v777 = vld [vmem:[%s763 + $0x34] sm:$0xf]
  %v778 = vld [vmem:[%s763 + $0x38] sm:$0xf]
  %v779 = vld [vmem:[%s763 + $0x3c] sm:$0xf]
  %v780 = vld [vmem:[%s763 + $0x40] sm:$0xf]
  %v781 = vld [vmem:[%s763 + $0x44] sm:$0xf]
  %v782 = vld [vmem:[%s763 + $0x48] sm:$0xf]
  %v783 = vld [vmem:[%s763 + $0x4c] sm:$0xf]
  %v784 = vld [vmem:[%s763 + $0x50] sm:$0xf]
  %v785 = vld [vmem:[%s763 + $0x54] sm:$0xf]
  %v786 = vld [vmem:[%s763 + $0x58] sm:$0xf]
  %v787 = vld [vmem:[%s763 + $0x5c] sm:$0xf]
  %v788 = vld [vmem:[%s763 + $0x60] sm:$0xf]
  %v789 = vld [vmem:[%s763 + $0x64] sm:$0xf]
  %v790 = vld [vmem:[%s763 + $0x68] sm:$0xf]
  %v791 = vld [vmem:[%s763 + $0x6c] sm:$0xf]
  %v792 = vld [vmem:[%s763 + $0x70] sm:$0xf]
  %v793 = vld [vmem:[%s763 + $0x74] sm:$0xf]
  %v794 = vld [vmem:[%s763 + $0x78] sm:$0xf]
  %v795 = vld [vmem:[%s763 + $0x7c] sm:$0xf]
  %v800 = vunpack.c.l.b16 %v764
  %v801 = vunpack.c.l.b16 %v765
  %v802 = vunpack.c.l.b16 %v766
  %v803 = vunpack.c.l.b16 %v767
  %v804 = vpack.c.b16 %v801, %v800
  %v805 = vpack.c.b16 %v803, %v802
  %v809 = vsel %vm86, %v37, 0
  %811 = vmatpush.bf16.msra.mxu0 0
  %812 = vmatpush.bf16.msra.mxu0 0
  %813 = vmatpush.bf16.msra.mxu0 0
  %814 = vmatpush.bf16.msra.mxu0 0
  %815 = vmatpush.bf16.msra.mxu0 0
  %816 = vmatpush.bf16.msra.mxu0 0
  %817 = vmatpush.bf16.msra.mxu0 %v805
  %818 = vmatpush.bf16.msra.mxu0 %v804
  %819 = vmatmul.bf16.gmra.mxu0 %v809
  %v820 = vpop.f32.mrf.mxu0
  %v821 = vadd.f32 0.0, %v820
  %v822 = vpop.f32.mrf.mxu0
  %823 = vdwg.mxu0
  %v828 = vunpack.c.l.b16 %v768
  %v829 = vunpack.c.l.b16 %v769
  %v830 = vunpack.c.l.b16 %v770
  %v831 = vunpack.c.l.b16 %v771
  %v832 = vpack.c.b16 %v829, %v828
  %v833 = vpack.c.b16 %v831, %v830
  %836 = vmatpush.bf16.msra.mxu0 0
  %837 = vmatpush.bf16.msra.mxu0 0
  %838 = vmatpush.bf16.msra.mxu0 0
  %839 = vmatpush.bf16.msra.mxu0 0
  %840 = vmatpush.bf16.msra.mxu0 0
  %841 = vmatpush.bf16.msra.mxu0 0
  %842 = vmatpush.bf16.msra.mxu0 %v833
  %843 = vmatpush.bf16.msra.mxu0 %v832
  %844 = vmatmul.bf16.gmra.mxu0 %v809
  %v845 = vpop.f32.mrf.mxu0
  %v846 = vadd.f32 0.0, %v845
  %v847 = vpop.f32.mrf.mxu0
  %848 = vdwg.mxu0
  %v853 = vunpack.c.l.b16 %v772
  %v854 = vunpack.c.l.b16 %v773
  %v855 = vunpack.c.l.b16 %v774
  %v856 = vunpack.c.l.b16 %v775
  %v857 = vpack.c.b16 %v854, %v853
  %v858 = vpack.c.b16 %v856, %v855
  %861 = vmatpush.bf16.msra.mxu0 0
  %862 = vmatpush.bf16.msra.mxu0 0
  %863 = vmatpush.bf16.msra.mxu0 0
  %864 = vmatpush.bf16.msra.mxu0 0
  %865 = vmatpush.bf16.msra.mxu0 0
  %866 = vmatpush.bf16.msra.mxu0 0
  %867 = vmatpush.bf16.msra.mxu0 %v858
  %868 = vmatpush.bf16.msra.mxu0 %v857
  %869 = vmatmul.bf16.gmra.mxu0 %v809
  %v870 = vpop.f32.mrf.mxu0
  %v871 = vadd.f32 0.0, %v870
  %v872 = vpop.f32.mrf.mxu0
  %873 = vdwg.mxu0
  %v878 = vunpack.c.l.b16 %v776
  %v879 = vunpack.c.l.b16 %v777
  %v880 = vunpack.c.l.b16 %v778
  %v881 = vunpack.c.l.b16 %v779
  %v882 = vpack.c.b16 %v879, %v878
  %v883 = vpack.c.b16 %v881, %v880
  %886 = vmatpush.bf16.msra.mxu0 0
  %887 = vmatpush.bf16.msra.mxu0 0
  %888 = vmatpush.bf16.msra.mxu0 0
  %889 = vmatpush.bf16.msra.mxu0 0
  %890 = vmatpush.bf16.msra.mxu0 0
  %891 = vmatpush.bf16.msra.mxu0 0
  %892 = vmatpush.bf16.msra.mxu0 %v883
  %893 = vmatpush.bf16.msra.mxu0 %v882
  %894 = vmatmul.bf16.gmra.mxu0 %v809
  %v895 = vpop.f32.mrf.mxu0
  %v896 = vadd.f32 0.0, %v895
  %v897 = vpop.f32.mrf.mxu0
  %898 = vdwg.mxu0
  %v903 = vunpack.c.l.b16 %v780
  %v904 = vunpack.c.l.b16 %v781
  %v905 = vunpack.c.l.b16 %v782
  %v906 = vunpack.c.l.b16 %v783
  %v907 = vpack.c.b16 %v904, %v903
  %v908 = vpack.c.b16 %v906, %v905
  %911 = vmatpush.bf16.msra.mxu0 0
  %912 = vmatpush.bf16.msra.mxu0 0
  %913 = vmatpush.bf16.msra.mxu0 0
  %914 = vmatpush.bf16.msra.mxu0 0
  %915 = vmatpush.bf16.msra.mxu0 0
  %916 = vmatpush.bf16.msra.mxu0 0
  %917 = vmatpush.bf16.msra.mxu0 %v908
  %918 = vmatpush.bf16.msra.mxu0 %v907
  %919 = vmatmul.bf16.gmra.mxu0 %v809
  %v920 = vpop.f32.mrf.mxu0
  %v921 = vadd.f32 0.0, %v920
  %v922 = vpop.f32.mrf.mxu0
  %923 = vdwg.mxu0
  %v928 = vunpack.c.l.b16 %v784
  %v929 = vunpack.c.l.b16 %v785
  %v930 = vunpack.c.l.b16 %v786
  %v931 = vunpack.c.l.b16 %v787
  %v932 = vpack.c.b16 %v929, %v928
  %v933 = vpack.c.b16 %v931, %v930
  %936 = vmatpush.bf16.msra.mxu0 0
  %937 = vmatpush.bf16.msra.mxu0 0
  %938 = vmatpush.bf16.msra.mxu0 0
  %939 = vmatpush.bf16.msra.mxu0 0
  %940 = vmatpush.bf16.msra.mxu0 0
  %941 = vmatpush.bf16.msra.mxu0 0
  %942 = vmatpush.bf16.msra.mxu0 %v933
  %943 = vmatpush.bf16.msra.mxu0 %v932
  %944 = vmatmul.bf16.gmra.mxu0 %v809
  %v945 = vpop.f32.mrf.mxu0
  %v946 = vadd.f32 0.0, %v945
  %v947 = vpop.f32.mrf.mxu0
  %948 = vdwg.mxu0
  %v953 = vunpack.c.l.b16 %v788
  %v954 = vunpack.c.l.b16 %v789
  %v955 = vunpack.c.l.b16 %v790
  %v956 = vunpack.c.l.b16 %v791
  %v957 = vpack.c.b16 %v954, %v953
  %v958 = vpack.c.b16 %v956, %v955
  %961 = vmatpush.bf16.msra.mxu0 0
  %962 = vmatpush.bf16.msra.mxu0 0
  %963 = vmatpush.bf16.msra.mxu0 0
  %964 = vmatpush.bf16.msra.mxu0 0
  %965 = vmatpush.bf16.msra.mxu0 0
  %966 = vmatpush.bf16.msra.mxu0 0
  %967 = vmatpush.bf16.msra.mxu0 %v958
  %968 = vmatpush.bf16.msra.mxu0 %v957
  %969 = vmatmul.bf16.gmra.mxu0 %v809
  %v970 = vpop.f32.mrf.mxu0
  %v971 = vadd.f32 0.0, %v970
  %v972 = vpop.f32.mrf.mxu0
  %973 = vdwg.mxu0
  %v978 = vunpack.c.l.b16 %v792
  %v979 = vunpack.c.l.b16 %v793
  %v980 = vunpack.c.l.b16 %v794
  %v981 = vunpack.c.l.b16 %v795
  %v982 = vpack.c.b16 %v979, %v978
  %v983 = vpack.c.b16 %v981, %v980
  %986 = vmatpush.bf16.msra.mxu0 0
  %987 = vmatpush.bf16.msra.mxu0 0
  %988 = vmatpush.bf16.msra.mxu0 0
  %989 = vmatpush.bf16.msra.mxu0 0
  %990 = vmatpush.bf16.msra.mxu0 0
  %991 = vmatpush.bf16.msra.mxu0 0
  %992 = vmatpush.bf16.msra.mxu0 %v983
  %993 = vmatpush.bf16.msra.mxu0 %v982
  %994 = vmatmul.bf16.gmra.mxu0 %v809
  %v995 = vpop.f32.mrf.mxu0
  %v996 = vadd.f32 0.0, %v995
  %v997 = vpop.f32.mrf.mxu0
  %998 = vdwg.mxu0
  %v999 = vpack.c.bf16 %v821, %v821
  %v1000 = vpack.c.bf16 %v846, %v846
  %v1001 = vpack.c.bf16 %v871, %v871
  %v1002 = vpack.c.bf16 %v896, %v896
  %v1003 = vpack.c.bf16 %v921, %v921
  %v1004 = vpack.c.bf16 %v946, %v946
  %v1005 = vpack.c.bf16 %v971, %v971
  %v1006 = vpack.c.bf16 %v996, %v996
  %v1007 = vld [vmem:[%s5] sm:$0x1]
  %v1008 = vld [vmem:[%s5 + $0x1] sm:$0x1]
  %v1009 = vld [vmem:[%s5 + $0x2] sm:$0x1]
  %v1010 = vld [vmem:[%s5 + $0x3] sm:$0x1]
  %v1011 = vld [vmem:[%s5 + $0x4] sm:$0x1]
  %v1012 = vld [vmem:[%s5 + $0x5] sm:$0x1]
  %v1013 = vld [vmem:[%s5 + $0x6] sm:$0x1]
  %v1014 = vld [vmem:[%s5 + $0x7] sm:$0x1]
  %v1023 = vperm.slane %v1007, 0
  %v1024 = vperm.slane %v1008, 0
  %v1025 = vperm.slane %v1009, 0
  %v1026 = vperm.slane %v1010, 0
  %v1027 = vperm.slane %v1011, 0
  %v1028 = vperm.slane %v1012, 0
  %v1029 = vperm.slane %v1013, 0
  %v1030 = vperm.slane %v1014, 0
  %v1039 = vadd.f32 %v100, %v1023
  %v1040 = vadd.f32 %v128, %v1024
  %v1041 = vadd.f32 %v153, %v1025
  %v1042 = vadd.f32 %v178, %v1026
  %v1043 = vadd.f32 %v203, %v1027
  %v1044 = vadd.f32 %v228, %v1028
  %v1045 = vadd.f32 %v253, %v1029
  %v1046 = vadd.f32 %v278, %v1030
  %v1047 = vpack.c.bf16 %v1039, %v1039
  %v1048 = vpack.c.bf16 %v1040, %v1040
  %v1049 = vpack.c.bf16 %v1041, %v1041
  %v1050 = vpack.c.bf16 %v1042, %v1042
  %v1051 = vpack.c.bf16 %v1043, %v1043
  %v1052 = vpack.c.bf16 %v1044, %v1044
  %v1053 = vpack.c.bf16 %v1045, %v1045
  %v1054 = vpack.c.bf16 %v1046, %v1046
  %s1055 = scalar_lea.vmem %s5, 8
  %v1056 = vld [vmem:[%s1055] sm:$0x1]
  %v1057 = vld [vmem:[%s1055 + $0x1] sm:$0x1]
  %v1058 = vld [vmem:[%s1055 + $0x2] sm:$0x1]
  %v1059 = vld [vmem:[%s1055 + $0x3] sm:$0x1]
  %v1060 = vld [vmem:[%s1055 + $0x4] sm:$0x1]
  %v1061 = vld [vmem:[%s1055 + $0x5] sm:$0x1]
  %v1062 = vld [vmem:[%s1055 + $0x6] sm:$0x1]
  %v1063 = vld [vmem:[%s1055 + $0x7] sm:$0x1]
  %v1072 = vperm.slane %v1056, 0
  %v1073 = vperm.slane %v1057, 0
  %v1074 = vperm.slane %v1058, 0
  %v1075 = vperm.slane %v1059, 0
  %v1076 = vperm.slane %v1060, 0
  %v1077 = vperm.slane %v1061, 0
  %v1078 = vperm.slane %v1062, 0
  %v1079 = vperm.slane %v1063, 0
  %v1088 = vadd.f32 %v100, %v1072
  %v1089 = vadd.f32 %v128, %v1073
  %v1090 = vadd.f32 %v153, %v1074
  %v1091 = vadd.f32 %v178, %v1075
  %v1092 = vadd.f32 %v203, %v1076
  %v1093 = vadd.f32 %v228, %v1077
  %v1094 = vadd.f32 %v253, %v1078
  %v1095 = vadd.f32 %v278, %v1079
  %v1096 = vpack.c.bf16 %v1088, %v1088
  %v1097 = vpack.c.bf16 %v1089, %v1089
  %v1098 = vpack.c.bf16 %v1090, %v1090
  %v1099 = vpack.c.bf16 %v1091, %v1091
  %v1100 = vpack.c.bf16 %v1092, %v1092
  %v1101 = vpack.c.bf16 %v1093, %v1093
  %v1102 = vpack.c.bf16 %v1094, %v1094
  %v1103 = vpack.c.bf16 %v1095, %v1095
  %vm1104 = vcmask 64512
  %v1106 = vsel %vm1104, %v1096, 0
  %v1109 = vsel %vm1104, %v999, 0
  %1111 = vmatpush.bf16.xpose.msra.mxu0 0
  %1112 = vmatpush.bf16.xpose.msra.mxu0 0
  %1113 = vmatpush.bf16.xpose.msra.mxu0 0
  %1114 = vmatpush.bf16.xpose.msra.mxu0 0
  %1115 = vmatpush.bf16.xpose.msra.mxu0 0
  %1116 = vmatpush.bf16.xpose.msra.mxu0 0
  %1117 = vmatpush.bf16.xpose.msra.mxu0 0
  %1118 = vmatpush.bf16.xpose.msra.mxu0 %v1109
  %1119 = vmatmul.bf16.gmra.mxu0 %v1106
  %v1120 = vpop.f32.mrf.mxu0
  %v1121 = vadd.f32 0.0, %v1120
  %v1122 = vpop.f32.mrf.mxu0
  %1123 = vdwg.mxu0
  %v1125 = vsel %vm1104, %v1097, 0
  %v1128 = vsel %vm1104, %v1000, 0
  %1130 = vmatpush.bf16.xpose.msra.mxu0 0
  %1131 = vmatpush.bf16.xpose.msra.mxu0 0
  %1132 = vmatpush.bf16.xpose.msra.mxu0 0
  %1133 = vmatpush.bf16.xpose.msra.mxu0 0
  %1134 = vmatpush.bf16.xpose.msra.mxu0 0
  %1135 = vmatpush.bf16.xpose.msra.mxu0 0
  %1136 = vmatpush.bf16.xpose.msra.mxu0 0
  %1137 = vmatpush.bf16.xpose.msra.mxu0 %v1128
  %1138 = vmatmul.bf16.gmra.mxu0 %v1125
  %v1139 = vpop.f32.mrf.mxu0
  %v1140 = vadd.f32 0.0, %v1139
  %v1141 = vpop.f32.mrf.mxu0
  %1142 = vdwg.mxu0
  %v1144 = vsel %vm1104, %v1098, 0
  %v1147 = vsel %vm1104, %v1001, 0
  %1149 = vmatpush.bf16.xpose.msra.mxu0 0
  %1150 = vmatpush.bf16.xpose.msra.mxu0 0
  %1151 = vmatpush.bf16.xpose.msra.mxu0 0
  %1152 = vmatpush.bf16.xpose.msra.mxu0 0
  %1153 = vmatpush.bf16.xpose.msra.mxu0 0
  %1154 = vmatpush.bf16.xpose.msra.mxu0 0
  %1155 = vmatpush.bf16.xpose.msra.mxu0 0
  %1156 = vmatpush.bf16.xpose.msra.mxu0 %v1147
  %1157 = vmatmul.bf16.gmra.mxu0 %v1144
  %v1158 = vpop.f32.mrf.mxu0
  %v1159 = vadd.f32 0.0, %v1158
  %v1160 = vpop.f32.mrf.mxu0
  %1161 = vdwg.mxu0
  %v1163 = vsel %vm1104, %v1099, 0
  %v1166 = vsel %vm1104, %v1002, 0
  %1168 = vmatpush.bf16.xpose.msra.mxu0 0
  %1169 = vmatpush.bf16.xpose.msra.mxu0 0
  %1170 = vmatpush.bf16.xpose.msra.mxu0 0
  %1171 = vmatpush.bf16.xpose.msra.mxu0 0
  %1172 = vmatpush.bf16.xpose.msra.mxu0 0
  %1173 = vmatpush.bf16.xpose.msra.mxu0 0
  %1174 = vmatpush.bf16.xpose.msra.mxu0 0
  %1175 = vmatpush.bf16.xpose.msra.mxu0 %v1166
  %1176 = vmatmul.bf16.gmra.mxu0 %v1163
  %v1177 = vpop.f32.mrf.mxu0
  %v1178 = vadd.f32 0.0, %v1177
  %v1179 = vpop.f32.mrf.mxu0
  %1180 = vdwg.mxu0
  %v1182 = vsel %vm1104, %v1100, 0
  %v1185 = vsel %vm1104, %v1003, 0
  %1187 = vmatpush.bf16.xpose.msra.mxu0 0
  %1188 = vmatpush.bf16.xpose.msra.mxu0 0
  %1189 = vmatpush.bf16.xpose.msra.mxu0 0
  %1190 = vmatpush.bf16.xpose.msra.mxu0 0
  %1191 = vmatpush.bf16.xpose.msra.mxu0 0
  %1192 = vmatpush.bf16.xpose.msra.mxu0 0
  %1193 = vmatpush.bf16.xpose.msra.mxu0 0
  %1194 = vmatpush.bf16.xpose.msra.mxu0 %v1185
  %1195 = vmatmul.bf16.gmra.mxu0 %v1182
  %v1196 = vpop.f32.mrf.mxu0
  %v1197 = vadd.f32 0.0, %v1196
  %v1198 = vpop.f32.mrf.mxu0
  %1199 = vdwg.mxu0
  %v1201 = vsel %vm1104, %v1101, 0
  %v1204 = vsel %vm1104, %v1004, 0
  %1206 = vmatpush.bf16.xpose.msra.mxu0 0
  %1207 = vmatpush.bf16.xpose.msra.mxu0 0
  %1208 = vmatpush.bf16.xpose.msra.mxu0 0
  %1209 = vmatpush.bf16.xpose.msra.mxu0 0
  %1210 = vmatpush.bf16.xpose.msra.mxu0 0
  %1211 = vmatpush.bf16.xpose.msra.mxu0 0
  %1212 = vmatpush.bf16.xpose.msra.mxu0 0
  %1213 = vmatpush.bf16.xpose.msra.mxu0 %v1204
  %1214 = vmatmul.bf16.gmra.mxu0 %v1201
  %v1215 = vpop.f32.mrf.mxu0
  %v1216 = vadd.f32 0.0, %v1215
  %v1217 = vpop.f32.mrf.mxu0
  %1218 = vdwg.mxu0
  %v1220 = vsel %vm1104, %v1102, 0
  %v1223 = vsel %vm1104, %v1005, 0
  %1225 = vmatpush.bf16.xpose.msra.mxu0 0
  %1226 = vmatpush.bf16.xpose.msra.mxu0 0
  %1227 = vmatpush.bf16.xpose.msra.mxu0 0
  %1228 = vmatpush.bf16.xpose.msra.mxu0 0
  %1229 = vmatpush.bf16.xpose.msra.mxu0 0
  %1230 = vmatpush.bf16.xpose.msra.mxu0 0
  %1231 = vmatpush.bf16.xpose.msra.mxu0 0
  %1232 = vmatpush.bf16.xpose.msra.mxu0 %v1223
  %1233 = vmatmul.bf16.gmra.mxu0 %v1220
  %v1234 = vpop.f32.mrf.mxu0
  %v1235 = vadd.f32 0.0, %v1234
  %v1236 = vpop.f32.mrf.mxu0
  %1237 = vdwg.mxu0
  %v1239 = vsel %vm1104, %v1103, 0
  %v1242 = vsel %vm1104, %v1006, 0
  %1244 = vmatpush.bf16.xpose.msra.mxu0 0
  %1245 = vmatpush.bf16.xpose.msra.mxu0 0
  %1246 = vmatpush.bf16.xpose.msra.mxu0 0
  %1247 = vmatpush.bf16.xpose.msra.mxu0 0
  %1248 = vmatpush.bf16.xpose.msra.mxu0 0
  %1249 = vmatpush.bf16.xpose.msra.mxu0 0
  %1250 = vmatpush.bf16.xpose.msra.mxu0 0
  %1251 = vmatpush.bf16.xpose.msra.mxu0 %v1242
  %1252 = vmatmul.bf16.gmra.mxu0 %v1239
  %v1253 = vpop.f32.mrf.mxu0
  %v1254 = vadd.f32 0.0, %v1253
  %v1255 = vpop.f32.mrf.mxu0
  %1256 = vdwg.mxu0
  %v1265 = vrot.slane %v1121, 1
  %v1266 = vrot.slane %v1140, 1
  %v1267 = vrot.slane %v1159, 1
  %v1268 = vrot.slane %v1178, 1
  %v1269 = vrot.slane %v1197, 1
  %v1270 = vrot.slane %v1216, 1
  %v1271 = vrot.slane %v1235, 1
  %v1272 = vrot.slane %v1254, 1
  %vm1281 = vcmask 1046528
  %v1282 = vsel %vm1281, %v1265, 0.0
  %v1283 = vsel %vm1281, %v1266, 0.0
  %v1284 = vsel %vm1281, %v1267, 0.0
  %v1285 = vsel %vm1281, %v1268, 0.0
  %v1286 = vsel %vm1281, %v1269, 0.0
  %v1287 = vsel %vm1281, %v1270, 0.0
  %v1288 = vsel %vm1281, %v1271, 0.0
  %v1289 = vsel %vm1281, %v1272, 0.0
  %1298 = vrot.lane.b32.xlu0 %v1282, 9
  %v1299 = vpop.permute.xlu0 %1298
  %1300 = vrot.lane.b32.xlu0 %v1283, 9
  %v1301 = vpop.permute.xlu0 %1300
  %1302 = vrot.lane.b32.xlu0 %v1284, 9
  %v1303 = vpop.permute.xlu0 %1302
  %1304 = vrot.lane.b32.xlu0 %v1285, 9
  %v1305 = vpop.permute.xlu0 %1304
  %1306 = vrot.lane.b32.xlu0 %v1286, 9
  %v1307 = vpop.permute.xlu0 %1306
  %1308 = vrot.lane.b32.xlu0 %v1287, 9
  %v1309 = vpop.permute.xlu0 %1308
  %1310 = vrot.lane.b32.xlu0 %v1288, 9
  %v1311 = vpop.permute.xlu0 %1310
  %1312 = vrot.lane.b32.xlu0 %v1289, 9
  %v1313 = vpop.permute.xlu0 %1312
  %v1322 = vsel %vm1104, %v1121, 0.0
  %v1323 = vsel %vm1104, %v1140, 0.0
  %v1324 = vsel %vm1104, %v1159, 0.0
  %v1325 = vsel %vm1104, %v1178, 0.0
  %v1326 = vsel %vm1104, %v1197, 0.0
  %v1327 = vsel %vm1104, %v1216, 0.0
  %v1328 = vsel %vm1104, %v1235, 0.0
  %v1329 = vsel %vm1104, %v1254, 0.0
  %vm1330 = vcmask 72704
  %v1331 = vsel %vm1330, %v1322, %v1299
  %v1332 = vsel %vm1330, %v1323, %v1301
  %v1333 = vsel %vm1330, %v1324, %v1303
  %v1334 = vsel %vm1330, %v1325, %v1305
  %v1335 = vsel %vm1330, %v1326, %v1307
  %v1336 = vsel %vm1330, %v1327, %v1309
  %v1337 = vsel %vm1330, %v1328, %v1311
  %v1338 = vsel %vm1330, %v1329, %v1313
  %v1339 = vlaneseq
  %v1340 = vshrl.u32 %v1339, 7
  %v1341 = vsub.s32 7, %v1340
  %1350 = vrot.lane.b32.xlu0 %v1331, 127
  %v1351 = vpop.permute.xlu0 %1350
  %1352 = vrot.lane.b32.xlu0 %v1332, 127
  %v1353 = vpop.permute.xlu0 %1352
  %1354 = vrot.lane.b32.xlu0 %v1333, 127
  %v1355 = vpop.permute.xlu0 %1354
  %1356 = vrot.lane.b32.xlu0 %v1334, 127
  %v1357 = vpop.permute.xlu0 %1356
  %1358 = vrot.lane.b32.xlu0 %v1335, 127
  %v1359 = vpop.permute.xlu0 %1358
  %1360 = vrot.lane.b32.xlu0 %v1336, 127
  %v1361 = vpop.permute.xlu0 %1360
  %1362 = vrot.lane.b32.xlu0 %v1337, 127
  %v1363 = vpop.permute.xlu0 %1362
  %1364 = vrot.lane.b32.xlu0 %v1338, 127
  %v1365 = vpop.permute.xlu0 %1364
  %1374 = vrot.lane.b32.xlu0 %v1331, 16
  %v1375 = vpop.permute.xlu0 %1374
  %1376 = vrot.lane.b32.xlu0 %v1332, 16
  %v1377 = vpop.permute.xlu0 %1376
  %1378 = vrot.lane.b32.xlu0 %v1333, 16
  %v1379 = vpop.permute.xlu0 %1378
  %1380 = vrot.lane.b32.xlu0 %v1334, 16
  %v1381 = vpop.permute.xlu0 %1380
  %1382 = vrot.lane.b32.xlu0 %v1335, 16
  %v1383 = vpop.permute.xlu0 %1382
  %1384 = vrot.lane.b32.xlu0 %v1336, 16
  %v1385 = vpop.permute.xlu0 %1384
  %1386 = vrot.lane.b32.xlu0 %v1337, 16
  %v1387 = vpop.permute.xlu0 %1386
  %1388 = vrot.lane.b32.xlu0 %v1338, 16
  %v1389 = vpop.permute.xlu0 %1388
  %vm1398 = vcmask 130048
  %v1399 = vsel %vm1398, %v1351, %v1375
  %v1400 = vsel %vm1398, %v1353, %v1377
  %v1401 = vsel %vm1398, %v1355, %v1379
  %v1402 = vsel %vm1398, %v1357, %v1381
  %v1403 = vsel %vm1398, %v1359, %v1383
  %v1404 = vsel %vm1398, %v1361, %v1385
  %v1405 = vsel %vm1398, %v1363, %v1387
  %v1406 = vsel %vm1398, %v1365, %v1389
  %v1407 = vand.u32 %v1341, 1
  %vm1408 = vcmp.ne.s32.totalorder %v1407, 0
  %v1409 = vsel %vm1408, %v1399, %v1331
  %v1410 = vsel %vm1408, %v1400, %v1332
  %v1411 = vsel %vm1408, %v1401, %v1333
  %v1412 = vsel %vm1408, %v1402, %v1334
  %v1413 = vsel %vm1408, %v1403, %v1335
  %v1414 = vsel %vm1408, %v1404, %v1336
  %v1415 = vsel %vm1408, %v1405, %v1337
  %v1416 = vsel %vm1408, %v1406, %v1338
  %1425 = vrot.lane.b32.xlu0 %v1409, 126
  %v1426 = vpop.permute.xlu0 %1425
  %1427 = vrot.lane.b32.xlu0 %v1410, 126
  %v1428 = vpop.permute.xlu0 %1427
  %1429 = vrot.lane.b32.xlu0 %v1411, 126
  %v1430 = vpop.permute.xlu0 %1429
  %1431 = vrot.lane.b32.xlu0 %v1412, 126
  %v1432 = vpop.permute.xlu0 %1431
  %1433 = vrot.lane.b32.xlu0 %v1413, 126
  %v1434 = vpop.permute.xlu0 %1433
  %1435 = vrot.lane.b32.xlu0 %v1414, 126
  %v1436 = vpop.permute.xlu0 %1435
  %1437 = vrot.lane.b32.xlu0 %v1415, 126
  %v1438 = vpop.permute.xlu0 %1437
  %1439 = vrot.lane.b32.xlu0 %v1416, 126
  %v1440 = vpop.permute.xlu0 %1439
  %1449 = vrot.lane.b32.xlu0 %v1409, 15
  %v1450 = vpop.permute.xlu0 %1449
  %1451 = vrot.lane.b32.xlu0 %v1410, 15
  %v1452 = vpop.permute.xlu0 %1451
  %1453 = vrot.lane.b32.xlu0 %v1411, 15
  %v1454 = vpop.permute.xlu0 %1453
  %1455 = vrot.lane.b32.xlu0 %v1412, 15
  %v1456 = vpop.permute.xlu0 %1455
  %1457 = vrot.lane.b32.xlu0 %v1413, 15
  %v1458 = vpop.permute.xlu0 %1457
  %1459 = vrot.lane.b32.xlu0 %v1414, 15
  %v1460 = vpop.permute.xlu0 %1459
  %1461 = vrot.lane.b32.xlu0 %v1415, 15
  %v1462 = vpop.permute.xlu0 %1461
  %1463 = vrot.lane.b32.xlu0 %v1416, 15
  %v1464 = vpop.permute.xlu0 %1463
  %vm1473 = vcmask 121856
  %v1474 = vsel %vm1473, %v1426, %v1450
  %v1475 = vsel %vm1473, %v1428, %v1452
  %v1476 = vsel %vm1473, %v1430, %v1454
  %v1477 = vsel %vm1473, %v1432, %v1456
  %v1478 = vsel %vm1473, %v1434, %v1458
  %v1479 = vsel %vm1473, %v1436, %v1460
  %v1480 = vsel %vm1473, %v1438, %v1462
  %v1481 = vsel %vm1473, %v1440, %v1464
  %v1482 = vand.u32 %v1341, 2
  %vm1483 = vcmp.ne.s32.totalorder %v1482, 0
  %v1484 = vsel %vm1483, %v1474, %v1409
  %v1485 = vsel %vm1483, %v1475, %v1410
  %v1486 = vsel %vm1483, %v1476, %v1411
  %v1487 = vsel %vm1483, %v1477, %v1412
  %v1488 = vsel %vm1483, %v1478, %v1413
  %v1489 = vsel %vm1483, %v1479, %v1414
  %v1490 = vsel %vm1483, %v1480, %v1415
  %v1491 = vsel %vm1483, %v1481, %v1416
  %1500 = vrot.lane.b32.xlu0 %v1484, 124
  %v1501 = vpop.permute.xlu0 %1500
  %1502 = vrot.lane.b32.xlu0 %v1485, 124
  %v1503 = vpop.permute.xlu0 %1502
  %1504 = vrot.lane.b32.xlu0 %v1486, 124
  %v1505 = vpop.permute.xlu0 %1504
  %1506 = vrot.lane.b32.xlu0 %v1487, 124
  %v1507 = vpop.permute.xlu0 %1506
  %1508 = vrot.lane.b32.xlu0 %v1488, 124
  %v1509 = vpop.permute.xlu0 %1508
  %1510 = vrot.lane.b32.xlu0 %v1489, 124
  %v1511 = vpop.permute.xlu0 %1510
  %1512 = vrot.lane.b32.xlu0 %v1490, 124
  %v1513 = vpop.permute.xlu0 %1512
  %1514 = vrot.lane.b32.xlu0 %v1491, 124
  %v1515 = vpop.permute.xlu0 %1514
  %1524 = vrot.lane.b32.xlu0 %v1484, 13
  %v1525 = vpop.permute.xlu0 %1524
  %1526 = vrot.lane.b32.xlu0 %v1485, 13
  %v1527 = vpop.permute.xlu0 %1526
  %1528 = vrot.lane.b32.xlu0 %v1486, 13
  %v1529 = vpop.permute.xlu0 %1528
  %1530 = vrot.lane.b32.xlu0 %v1487, 13
  %v1531 = vpop.permute.xlu0 %1530
  %1532 = vrot.lane.b32.xlu0 %v1488, 13
  %v1533 = vpop.permute.xlu0 %1532
  %1534 = vrot.lane.b32.xlu0 %v1489, 13
  %v1535 = vpop.permute.xlu0 %1534
  %1536 = vrot.lane.b32.xlu0 %v1490, 13
  %v1537 = vpop.permute.xlu0 %1536
  %1538 = vrot.lane.b32.xlu0 %v1491, 13
  %v1539 = vpop.permute.xlu0 %1538
  %vm1548 = vcmask 105472
  %v1549 = vsel %vm1548, %v1501, %v1525
  %v1550 = vsel %vm1548, %v1503, %v1527
  %v1551 = vsel %vm1548, %v1505, %v1529
  %v1552 = vsel %vm1548, %v1507, %v1531
  %v1553 = vsel %vm1548, %v1509, %v1533
  %v1554 = vsel %vm1548, %v1511, %v1535
  %v1555 = vsel %vm1548, %v1513, %v1537
  %v1556 = vsel %vm1548, %v1515, %v1539
  %v1557 = vand.u32 %v1341, 4
  %vm1558 = vcmp.ne.s32.totalorder %v1557, 0
  %v1559 = vsel %vm1558, %v1549, %v1484
  %v1560 = vsel %vm1558, %v1550, %v1485
  %v1561 = vsel %vm1558, %v1551, %v1486
  %v1562 = vsel %vm1558, %v1552, %v1487
  %v1563 = vsel %vm1558, %v1553, %v1488
  %v1564 = vsel %vm1558, %v1554, %v1489
  %v1565 = vsel %vm1558, %v1555, %v1490
  %v1566 = vsel %vm1558, %v1556, %v1491
  %v1568 = vsel %vm1104, %v1047, 0
  %v1571 = vsel %vm1104, %v514, 0
  %1573 = vmatpush.bf16.xpose.msra.mxu0 0
  %1574 = vmatpush.bf16.xpose.msra.mxu0 0
  %1575 = vmatpush.bf16.xpose.msra.mxu0 0
  %1576 = vmatpush.bf16.xpose.msra.mxu0 0
  %1577 = vmatpush.bf16.xpose.msra.mxu0 0
  %1578 = vmatpush.bf16.xpose.msra.mxu0 0
  %1579 = vmatpush.bf16.xpose.msra.mxu0 0
  %1580 = vmatpush.bf16.xpose.msra.mxu0 %v1571
  %1581 = vmatmul.bf16.gmra.mxu0 %v1568
  %v1582 = vpop.f32.mrf.mxu0
  %v1583 = vadd.f32 %v1559, %v1582
  %v1584 = vpop.f32.mrf.mxu0
  %1585 = vdwg.mxu0
  %v1587 = vsel %vm1104, %v1048, 0
  %v1590 = vsel %vm1104, %v515, 0
  %1592 = vmatpush.bf16.xpose.msra.mxu0 0
  %1593 = vmatpush.bf16.xpose.msra.mxu0 0
  %1594 = vmatpush.bf16.xpose.msra.mxu0 0
  %1595 = vmatpush.bf16.xpose.msra.mxu0 0
  %1596 = vmatpush.bf16.xpose.msra.mxu0 0
  %1597 = vmatpush.bf16.xpose.msra.mxu0 0
  %1598 = vmatpush.bf16.xpose.msra.mxu0 0
  %1599 = vmatpush.bf16.xpose.msra.mxu0 %v1590
  %1600 = vmatmul.bf16.gmra.mxu0 %v1587
  %v1601 = vpop.f32.mrf.mxu0
  %v1602 = vadd.f32 %v1560, %v1601
  %v1603 = vpop.f32.mrf.mxu0
  %1604 = vdwg.mxu0
  %v1606 = vsel %vm1104, %v1049, 0
  %v1609 = vsel %vm1104, %v516, 0
  %1611 = vmatpush.bf16.xpose.msra.mxu0 0
  %1612 = vmatpush.bf16.xpose.msra.mxu0 0
  %1613 = vmatpush.bf16.xpose.msra.mxu0 0
  %1614 = vmatpush.bf16.xpose.msra.mxu0 0
  %1615 = vmatpush.bf16.xpose.msra.mxu0 0
  %1616 = vmatpush.bf16.xpose.msra.mxu0 0
  %1617 = vmatpush.bf16.xpose.msra.mxu0 0
  %1618 = vmatpush.bf16.xpose.msra.mxu0 %v1609
  %1619 = vmatmul.bf16.gmra.mxu0 %v1606
  %v1620 = vpop.f32.mrf.mxu0
  %v1621 = vadd.f32 %v1561, %v1620
  %v1622 = vpop.f32.mrf.mxu0
  %1623 = vdwg.mxu0
  %v1625 = vsel %vm1104, %v1050, 0
  %v1628 = vsel %vm1104, %v517, 0
  %1630 = vmatpush.bf16.xpose.msra.mxu0 0
  %1631 = vmatpush.bf16.xpose.msra.mxu0 0
  %1632 = vmatpush.bf16.xpose.msra.mxu0 0
  %1633 = vmatpush.bf16.xpose.msra.mxu0 0
  %1634 = vmatpush.bf16.xpose.msra.mxu0 0
  %1635 = vmatpush.bf16.xpose.msra.mxu0 0
  %1636 = vmatpush.bf16.xpose.msra.mxu0 0
  %1637 = vmatpush.bf16.xpose.msra.mxu0 %v1628
  %1638 = vmatmul.bf16.gmra.mxu0 %v1625
  %v1639 = vpop.f32.mrf.mxu0
  %v1640 = vadd.f32 %v1562, %v1639
  %v1641 = vpop.f32.mrf.mxu0
  %1642 = vdwg.mxu0
  %v1644 = vsel %vm1104, %v1051, 0
  %v1647 = vsel %vm1104, %v518, 0
  %1649 = vmatpush.bf16.xpose.msra.mxu0 0
  %1650 = vmatpush.bf16.xpose.msra.mxu0 0
  %1651 = vmatpush.bf16.xpose.msra.mxu0 0
  %1652 = vmatpush.bf16.xpose.msra.mxu0 0
  %1653 = vmatpush.bf16.xpose.msra.mxu0 0
  %1654 = vmatpush.bf16.xpose.msra.mxu0 0
  %1655 = vmatpush.bf16.xpose.msra.mxu0 0
  %1656 = vmatpush.bf16.xpose.msra.mxu0 %v1647
  %1657 = vmatmul.bf16.gmra.mxu0 %v1644
  %v1658 = vpop.f32.mrf.mxu0
  %v1659 = vadd.f32 %v1563, %v1658
  %v1660 = vpop.f32.mrf.mxu0
  %1661 = vdwg.mxu0
  %v1663 = vsel %vm1104, %v1052, 0
  %v1666 = vsel %vm1104, %v519, 0
  %1668 = vmatpush.bf16.xpose.msra.mxu0 0
  %1669 = vmatpush.bf16.xpose.msra.mxu0 0
  %1670 = vmatpush.bf16.xpose.msra.mxu0 0
  %1671 = vmatpush.bf16.xpose.msra.mxu0 0
  %1672 = vmatpush.bf16.xpose.msra.mxu0 0
  %1673 = vmatpush.bf16.xpose.msra.mxu0 0
  %1674 = vmatpush.bf16.xpose.msra.mxu0 0
  %1675 = vmatpush.bf16.xpose.msra.mxu0 %v1666
  %1676 = vmatmul.bf16.gmra.mxu0 %v1663
  %v1677 = vpop.f32.mrf.mxu0
  %v1678 = vadd.f32 %v1564, %v1677
  %v1679 = vpop.f32.mrf.mxu0
  %1680 = vdwg.mxu0
  %v1682 = vsel %vm1104, %v1053, 0
  %v1685 = vsel %vm1104, %v520, 0
  %1687 = vmatpush.bf16.xpose.msra.mxu0 0
  %1688 = vmatpush.bf16.xpose.msra.mxu0 0
  %1689 = vmatpush.bf16.xpose.msra.mxu0 0
  %1690 = vmatpush.bf16.xpose.msra.mxu0 0
  %1691 = vmatpush.bf16.xpose.msra.mxu0 0
  %1692 = vmatpush.bf16.xpose.msra.mxu0 0
  %1693 = vmatpush.bf16.xpose.msra.mxu0 0
  %1694 = vmatpush.bf16.xpose.msra.mxu0 %v1685
  %1695 = vmatmul.bf16.gmra.mxu0 %v1682
  %v1696 = vpop.f32.mrf.mxu0
  %v1697 = vadd.f32 %v1565, %v1696
  %v1698 = vpop.f32.mrf.mxu0
  %1699 = vdwg.mxu0
  %v1701 = vsel %vm1104, %v1054, 0
  %v1704 = vsel %vm1104, %v521, 0
  %1706 = vmatpush.bf16.xpose.msra.mxu0 0
  %1707 = vmatpush.bf16.xpose.msra.mxu0 0
  %1708 = vmatpush.bf16.xpose.msra.mxu0 0
  %1709 = vmatpush.bf16.xpose.msra.mxu0 0
  %1710 = vmatpush.bf16.xpose.msra.mxu0 0
  %1711 = vmatpush.bf16.xpose.msra.mxu0 0
  %1712 = vmatpush.bf16.xpose.msra.mxu0 0
  %1713 = vmatpush.bf16.xpose.msra.mxu0 %v1704
  %1714 = vmatmul.bf16.gmra.mxu0 %v1701
  %v1715 = vpop.f32.mrf.mxu0
  %v1716 = vadd.f32 %v1566, %v1715
  %v1717 = vpop.f32.mrf.mxu0
  %1718 = vdwg.mxu0
  %v1719 = vld [vmem:[%s7] sm:$0xff]
  %v1720 = vadd.f32 %v1583, %v1719
  %v1721 = vadd.f32 %v1602, %v1719
  %v1722 = vadd.f32 %v1621, %v1719
  %v1723 = vadd.f32 %v1640, %v1719
  %v1724 = vadd.f32 %v1659, %v1719
  %v1725 = vadd.f32 %v1678, %v1719
  %v1726 = vadd.f32 %v1697, %v1719
  %v1727 = vadd.f32 %v1716, %v1719
  %v1728 = vsel %vm1104, %v1720, -inf
  %1729 = vmax.xlane.f32.xlu0 %v1728
  %v1730 = vpop.xlane.xlu0 %1729
  %v1731 = vsel %vm1104, %v1721, -inf
  %1732 = vmax.xlane.f32.xlu0 %v1731
  %v1733 = vpop.xlane.xlu0 %1732
  %v1734 = vsel %vm1104, %v1722, -inf
  %1735 = vmax.xlane.f32.xlu0 %v1734
  %v1736 = vpop.xlane.xlu0 %1735
  %v1737 = vsel %vm1104, %v1723, -inf
  %1738 = vmax.xlane.f32.xlu0 %v1737
  %v1739 = vpop.xlane.xlu0 %1738
  %v1740 = vsel %vm1104, %v1724, -inf
  %1741 = vmax.xlane.f32.xlu0 %v1740
  %v1742 = vpop.xlane.xlu0 %1741
  %v1743 = vsel %vm1104, %v1725, -inf
  %1744 = vmax.xlane.f32.xlu0 %v1743
  %v1745 = vpop.xlane.xlu0 %1744
  %v1746 = vsel %vm1104, %v1726, -inf
  %1747 = vmax.xlane.f32.xlu0 %v1746
  %v1748 = vpop.xlane.xlu0 %1747
  %v1749 = vsel %vm1104, %v1727, -inf
  %1750 = vmax.xlane.f32.xlu0 %v1749
  %v1751 = vpop.xlane.xlu0 %1750
  %v1752 = vsub.f32 %v1720, %v1730
  %v1753 = vsub.f32 %v1721, %v1733
  %v1754 = vsub.f32 %v1722, %v1736
  %v1755 = vsub.f32 %v1723, %v1739
  %v1756 = vsub.f32 %v1724, %v1742
  %v1757 = vsub.f32 %v1725, %v1745
  %v1758 = vsub.f32 %v1726, %v1748
  %v1759 = vsub.f32 %v1727, %v1751
  %v1760 = vmul.f32 %v1752, 1.442695
  %v1761 = vpow.pop %v1760
  %v1762 = vmul.f32 %v1753, 1.442695
  %v1763 = vpow.pop %v1762
  %v1764 = vmul.f32 %v1754, 1.442695
  %v1765 = vpow.pop %v1764
  %v1766 = vmul.f32 %v1755, 1.442695
  %v1767 = vpow.pop %v1766
  %v1768 = vmul.f32 %v1756, 1.442695
  %v1769 = vpow.pop %v1768
  %v1770 = vmul.f32 %v1757, 1.442695
  %v1771 = vpow.pop %v1770
  %v1772 = vmul.f32 %v1758, 1.442695
  %v1773 = vpow.pop %v1772
  %v1774 = vmul.f32 %v1759, 1.442695
  %v1775 = vpow.pop %v1774
  %v1776 = vsel %vm1104, %v1761, 0.0
  %1777 = vadd.xlane.f32.xlu0 %v1776
  %v1778 = vpop.xlane.xlu0 %1777
  %v1779 = vsel %vm1104, %v1763, 0.0
  %1780 = vadd.xlane.f32.xlu0 %v1779
  %v1781 = vpop.xlane.xlu0 %1780
  %v1782 = vsel %vm1104, %v1765, 0.0
  %1783 = vadd.xlane.f32.xlu0 %v1782
  %v1784 = vpop.xlane.xlu0 %1783
  %v1785 = vsel %vm1104, %v1767, 0.0
  %1786 = vadd.xlane.f32.xlu0 %v1785
  %v1787 = vpop.xlane.xlu0 %1786
  %v1788 = vsel %vm1104, %v1769, 0.0
  %1789 = vadd.xlane.f32.xlu0 %v1788
  %v1790 = vpop.xlane.xlu0 %1789
  %v1791 = vsel %vm1104, %v1771, 0.0
  %1792 = vadd.xlane.f32.xlu0 %v1791
  %v1793 = vpop.xlane.xlu0 %1792
  %v1794 = vsel %vm1104, %v1773, 0.0
  %1795 = vadd.xlane.f32.xlu0 %v1794
  %v1796 = vpop.xlane.xlu0 %1795
  %v1797 = vsel %vm1104, %v1775, 0.0
  %1798 = vadd.xlane.f32.xlu0 %v1797
  %v1799 = vpop.xlane.xlu0 %1798
  %v1800 = vrcp.pop %v1778
  %v1801 = vrcp.pop %v1781
  %v1802 = vrcp.pop %v1784
  %v1803 = vrcp.pop %v1787
  %v1804 = vrcp.pop %v1790
  %v1805 = vrcp.pop %v1793
  %v1806 = vrcp.pop %v1796
  %v1807 = vrcp.pop %v1799
  %v1808 = vmul.f32 %v1761, %v1800
  %v1809 = vmul.f32 %v1763, %v1801
  %v1810 = vmul.f32 %v1765, %v1802
  %v1811 = vmul.f32 %v1767, %v1803
  %v1812 = vmul.f32 %v1769, %v1804
  %v1813 = vmul.f32 %v1771, %v1805
  %v1814 = vmul.f32 %v1773, %v1806
  %v1815 = vmul.f32 %v1775, %v1807
  %v1816 = vpack.c.bf16 %v1808, %v1808
  %v1817 = vpack.c.bf16 %v1809, %v1809
  %v1818 = vpack.c.bf16 %v1810, %v1810
  %v1819 = vpack.c.bf16 %v1811, %v1811
  %v1820 = vpack.c.bf16 %v1812, %v1812
  %v1821 = vpack.c.bf16 %v1813, %v1813
  %v1822 = vpack.c.bf16 %v1814, %v1814
  %v1823 = vpack.c.bf16 %v1815, %v1815
  %v1825 = vsel %vm1104, %v1816, 0
  %vm1827 = vcmask 1043456
  %v1829 = vsel %vm1827, %v755, 0
  %1831 = vmatpush.bf16.msra.mxu0 0
  %1832 = vmatpush.bf16.msra.mxu0 0
  %1833 = vmatpush.bf16.msra.mxu0 0
  %1834 = vmatpush.bf16.msra.mxu0 0
  %1835 = vmatpush.bf16.msra.mxu0 0
  %1836 = vmatpush.bf16.msra.mxu0 0
  %1837 = vmatpush.bf16.msra.mxu0 0
  %1838 = vmatpush.bf16.msra.mxu0 %v1829
  %1839 = vmatmul.bf16.gmra.mxu0 %v1825
  %v1840 = vpop.f32.mrf.mxu0
  %v1841 = vadd.f32 0.0, %v1840
  %v1842 = vpop.f32.mrf.mxu0
  %1843 = vdwg.mxu0
  %v1845 = vsel %vm1104, %v1817, 0
  %v1848 = vsel %vm1827, %v756, 0
  %1850 = vmatpush.bf16.msra.mxu0 0
  %1851 = vmatpush.bf16.msra.mxu0 0
  %1852 = vmatpush.bf16.msra.mxu0 0
  %1853 = vmatpush.bf16.msra.mxu0 0
  %1854 = vmatpush.bf16.msra.mxu0 0
  %1855 = vmatpush.bf16.msra.mxu0 0
  %1856 = vmatpush.bf16.msra.mxu0 0
  %1857 = vmatpush.bf16.msra.mxu0 %v1848
  %1858 = vmatmul.bf16.gmra.mxu0 %v1845
  %v1859 = vpop.f32.mrf.mxu0
  %v1860 = vadd.f32 0.0, %v1859
  %v1861 = vpop.f32.mrf.mxu0
  %1862 = vdwg.mxu0
  %v1864 = vsel %vm1104, %v1818, 0
  %v1867 = vsel %vm1827, %v757, 0
  %1869 = vmatpush.bf16.msra.mxu0 0
  %1870 = vmatpush.bf16.msra.mxu0 0
  %1871 = vmatpush.bf16.msra.mxu0 0
  %1872 = vmatpush.bf16.msra.mxu0 0
  %1873 = vmatpush.bf16.msra.mxu0 0
  %1874 = vmatpush.bf16.msra.mxu0 0
  %1875 = vmatpush.bf16.msra.mxu0 0
  %1876 = vmatpush.bf16.msra.mxu0 %v1867
  %1877 = vmatmul.bf16.gmra.mxu0 %v1864
  %v1878 = vpop.f32.mrf.mxu0
  %v1879 = vadd.f32 0.0, %v1878
  %v1880 = vpop.f32.mrf.mxu0
  %1881 = vdwg.mxu0
  %v1883 = vsel %vm1104, %v1819, 0
  %v1886 = vsel %vm1827, %v758, 0
  %1888 = vmatpush.bf16.msra.mxu0 0
  %1889 = vmatpush.bf16.msra.mxu0 0
  %1890 = vmatpush.bf16.msra.mxu0 0
  %1891 = vmatpush.bf16.msra.mxu0 0
  %1892 = vmatpush.bf16.msra.mxu0 0
  %1893 = vmatpush.bf16.msra.mxu0 0
  %1894 = vmatpush.bf16.msra.mxu0 0
  %1895 = vmatpush.bf16.msra.mxu0 %v1886
  %1896 = vmatmul.bf16.gmra.mxu0 %v1883
  %v1897 = vpop.f32.mrf.mxu0
  %v1898 = vadd.f32 0.0, %v1897
  %v1899 = vpop.f32.mrf.mxu0
  %1900 = vdwg.mxu0
  %v1902 = vsel %vm1104, %v1820, 0
  %v1905 = vsel %vm1827, %v759, 0
  %1907 = vmatpush.bf16.msra.mxu0 0
  %1908 = vmatpush.bf16.msra.mxu0 0
  %1909 = vmatpush.bf16.msra.mxu0 0
  %1910 = vmatpush.bf16.msra.mxu0 0
  %1911 = vmatpush.bf16.msra.mxu0 0
  %1912 = vmatpush.bf16.msra.mxu0 0
  %1913 = vmatpush.bf16.msra.mxu0 0
  %1914 = vmatpush.bf16.msra.mxu0 %v1905
  %1915 = vmatmul.bf16.gmra.mxu0 %v1902
  %v1916 = vpop.f32.mrf.mxu0
  %v1917 = vadd.f32 0.0, %v1916
  %v1918 = vpop.f32.mrf.mxu0
  %1919 = vdwg.mxu0
  %v1921 = vsel %vm1104, %v1821, 0
  %v1924 = vsel %vm1827, %v760, 0
  %1926 = vmatpush.bf16.msra.mxu0 0
  %1927 = vmatpush.bf16.msra.mxu0 0
  %1928 = vmatpush.bf16.msra.mxu0 0
  %1929 = vmatpush.bf16.msra.mxu0 0
  %1930 = vmatpush.bf16.msra.mxu0 0
  %1931 = vmatpush.bf16.msra.mxu0 0
  %1932 = vmatpush.bf16.msra.mxu0 0
  %1933 = vmatpush.bf16.msra.mxu0 %v1924
  %1934 = vmatmul.bf16.gmra.mxu0 %v1921
  %v1935 = vpop.f32.mrf.mxu0
  %v1936 = vadd.f32 0.0, %v1935
  %v1937 = vpop.f32.mrf.mxu0
  %1938 = vdwg.mxu0
  %v1940 = vsel %vm1104, %v1822, 0
  %v1943 = vsel %vm1827, %v761, 0
  %1945 = vmatpush.bf16.msra.mxu0 0
  %1946 = vmatpush.bf16.msra.mxu0 0
  %1947 = vmatpush.bf16.msra.mxu0 0
  %1948 = vmatpush.bf16.msra.mxu0 0
  %1949 = vmatpush.bf16.msra.mxu0 0
  %1950 = vmatpush.bf16.msra.mxu0 0
  %1951 = vmatpush.bf16.msra.mxu0 0
  %1952 = vmatpush.bf16.msra.mxu0 %v1943
  %1953 = vmatmul.bf16.gmra.mxu0 %v1940
  %v1954 = vpop.f32.mrf.mxu0
  %v1955 = vadd.f32 0.0, %v1954
  %v1956 = vpop.f32.mrf.mxu0
  %1957 = vdwg.mxu0
  %v1959 = vsel %vm1104, %v1823, 0
  %v1962 = vsel %vm1827, %v762, 0
  %1964 = vmatpush.bf16.msra.mxu0 0
  %1965 = vmatpush.bf16.msra.mxu0 0
  %1966 = vmatpush.bf16.msra.mxu0 0
  %1967 = vmatpush.bf16.msra.mxu0 0
  %1968 = vmatpush.bf16.msra.mxu0 0
  %1969 = vmatpush.bf16.msra.mxu0 0
  %1970 = vmatpush.bf16.msra.mxu0 0
  %1971 = vmatpush.bf16.msra.mxu0 %v1962
  %1972 = vmatmul.bf16.gmra.mxu0 %v1959
  %v1973 = vpop.f32.mrf.mxu0
  %v1974 = vadd.f32 0.0, %v1973
  %v1975 = vpop.f32.mrf.mxu0
  %1976 = vdwg.mxu0
  %v1977 = vpack.c.bf16 %v1841, %v1841
  %v1978 = vpack.c.bf16 %v1860, %v1860
  %v1979 = vpack.c.bf16 %v1879, %v1879
  %v1980 = vpack.c.bf16 %v1898, %v1898
  %v1981 = vpack.c.bf16 %v1917, %v1917
  %v1982 = vpack.c.bf16 %v1936, %v1936
  %v1983 = vpack.c.bf16 %v1955, %v1955
  %v1984 = vpack.c.bf16 %v1974, %v1974
  %v1985 = vld [vmem:[%s4] sm:$0xf]
  %v1986 = vld [vmem:[%s4 + $0x4] sm:$0xf]
  %v1987 = vld [vmem:[%s4 + $0x8] sm:$0xf]
  %v1988 = vld [vmem:[%s4 + $0xc] sm:$0xf]
  %v1989 = vld [vmem:[%s4 + $0x10] sm:$0xf]
  %v1990 = vld [vmem:[%s4 + $0x14] sm:$0xf]
  %v1991 = vld [vmem:[%s4 + $0x18] sm:$0xf]
  %v1992 = vld [vmem:[%s4 + $0x1c] sm:$0xf]
  %v1994 = vsel %vm1104, %v1977, 0
  %v1997 = vsel %vm1827, %v1985, 0
  %1999 = vmatpush.bf16.msra.mxu0 0
  %2000 = vmatpush.bf16.msra.mxu0 0
  %2001 = vmatpush.bf16.msra.mxu0 0
  %2002 = vmatpush.bf16.msra.mxu0 0
  %2003 = vmatpush.bf16.msra.mxu0 0
  %2004 = vmatpush.bf16.msra.mxu0 0
  %2005 = vmatpush.bf16.msra.mxu0 0
  %2006 = vmatpush.bf16.msra.mxu0 %v1997
  %2007 = vmatmul.bf16.gmra.mxu0 %v1994
  %v2008 = vpop.f32.mrf.mxu0
  %v2009 = vadd.f32 0.0, %v2008
  %v2010 = vpop.f32.mrf.mxu0
  %2011 = vdwg.mxu0
  %v2013 = vsel %vm1104, %v1978, 0
  %v2016 = vsel %vm1827, %v1986, 0
  %2018 = vmatpush.bf16.msra.mxu0 0
  %2019 = vmatpush.bf16.msra.mxu0 0
  %2020 = vmatpush.bf16.msra.mxu0 0
  %2021 = vmatpush.bf16.msra.mxu0 0
  %2022 = vmatpush.bf16.msra.mxu0 0
  %2023 = vmatpush.bf16.msra.mxu0 0
  %2024 = vmatpush.bf16.msra.mxu0 0
  %2025 = vmatpush.bf16.msra.mxu0 %v2016
  %2026 = vmatmul.bf16.gmra.mxu0 %v2013
  %v2027 = vpop.f32.mrf.mxu0
  %v2028 = vadd.f32 0.0, %v2027
  %v2029 = vpop.f32.mrf.mxu0
  %2030 = vdwg.mxu0
  %v2032 = vsel %vm1104, %v1979, 0
  %v2035 = vsel %vm1827, %v1987, 0
  %2037 = vmatpush.bf16.msra.mxu0 0
  %2038 = vmatpush.bf16.msra.mxu0 0
  %2039 = vmatpush.bf16.msra.mxu0 0
  %2040 = vmatpush.bf16.msra.mxu0 0
  %2041 = vmatpush.bf16.msra.mxu0 0
  %2042 = vmatpush.bf16.msra.mxu0 0
  %2043 = vmatpush.bf16.msra.mxu0 0
  %2044 = vmatpush.bf16.msra.mxu0 %v2035
  %2045 = vmatmul.bf16.gmra.mxu0 %v2032
  %v2046 = vpop.f32.mrf.mxu0
  %v2047 = vadd.f32 0.0, %v2046
  %v2048 = vpop.f32.mrf.mxu0
  %2049 = vdwg.mxu0
  %v2051 = vsel %vm1104, %v1980, 0
  %v2054 = vsel %vm1827, %v1988, 0
  %2056 = vmatpush.bf16.msra.mxu0 0
  %2057 = vmatpush.bf16.msra.mxu0 0
  %2058 = vmatpush.bf16.msra.mxu0 0
  %2059 = vmatpush.bf16.msra.mxu0 0
  %2060 = vmatpush.bf16.msra.mxu0 0
  %2061 = vmatpush.bf16.msra.mxu0 0
  %2062 = vmatpush.bf16.msra.mxu0 0
  %2063 = vmatpush.bf16.msra.mxu0 %v2054
  %2064 = vmatmul.bf16.gmra.mxu0 %v2051
  %v2065 = vpop.f32.mrf.mxu0
  %v2066 = vadd.f32 0.0, %v2065
  %v2067 = vpop.f32.mrf.mxu0
  %2068 = vdwg.mxu0
  %v2070 = vsel %vm1104, %v1981, 0
  %v2073 = vsel %vm1827, %v1989, 0
  %2075 = vmatpush.bf16.msra.mxu0 0
  %2076 = vmatpush.bf16.msra.mxu0 0
  %2077 = vmatpush.bf16.msra.mxu0 0
  %2078 = vmatpush.bf16.msra.mxu0 0
  %2079 = vmatpush.bf16.msra.mxu0 0
  %2080 = vmatpush.bf16.msra.mxu0 0
  %2081 = vmatpush.bf16.msra.mxu0 0
  %2082 = vmatpush.bf16.msra.mxu0 %v2073
  %2083 = vmatmul.bf16.gmra.mxu0 %v2070
  %v2084 = vpop.f32.mrf.mxu0
  %v2085 = vadd.f32 0.0, %v2084
  %v2086 = vpop.f32.mrf.mxu0
  %2087 = vdwg.mxu0
  %v2089 = vsel %vm1104, %v1982, 0
  %v2092 = vsel %vm1827, %v1990, 0
  %2094 = vmatpush.bf16.msra.mxu0 0
  %2095 = vmatpush.bf16.msra.mxu0 0
  %2096 = vmatpush.bf16.msra.mxu0 0
  %2097 = vmatpush.bf16.msra.mxu0 0
  %2098 = vmatpush.bf16.msra.mxu0 0
  %2099 = vmatpush.bf16.msra.mxu0 0
  %2100 = vmatpush.bf16.msra.mxu0 0
  %2101 = vmatpush.bf16.msra.mxu0 %v2092
  %2102 = vmatmul.bf16.gmra.mxu0 %v2089
  %v2103 = vpop.f32.mrf.mxu0
  %v2104 = vadd.f32 0.0, %v2103
  %v2105 = vpop.f32.mrf.mxu0
  %2106 = vdwg.mxu0
  %v2108 = vsel %vm1104, %v1983, 0
  %v2111 = vsel %vm1827, %v1991, 0
  %2113 = vmatpush.bf16.msra.mxu0 0
  %2114 = vmatpush.bf16.msra.mxu0 0
  %2115 = vmatpush.bf16.msra.mxu0 0
  %2116 = vmatpush.bf16.msra.mxu0 0
  %2117 = vmatpush.bf16.msra.mxu0 0
  %2118 = vmatpush.bf16.msra.mxu0 0
  %2119 = vmatpush.bf16.msra.mxu0 0
  %2120 = vmatpush.bf16.msra.mxu0 %v2111
  %2121 = vmatmul.bf16.gmra.mxu0 %v2108
  %v2122 = vpop.f32.mrf.mxu0
  %v2123 = vadd.f32 0.0, %v2122
  %v2124 = vpop.f32.mrf.mxu0
  %2125 = vdwg.mxu0
  %v2127 = vsel %vm1104, %v1984, 0
  %v2130 = vsel %vm1827, %v1992, 0
  %2132 = vmatpush.bf16.msra.mxu0 0
  %2133 = vmatpush.bf16.msra.mxu0 0
  %2134 = vmatpush.bf16.msra.mxu0 0
  %2135 = vmatpush.bf16.msra.mxu0 0
  %2136 = vmatpush.bf16.msra.mxu0 0
  %2137 = vmatpush.bf16.msra.mxu0 0
  %2138 = vmatpush.bf16.msra.mxu0 0
  %2139 = vmatpush.bf16.msra.mxu0 %v2130
  %2140 = vmatmul.bf16.gmra.mxu0 %v2127
  %v2141 = vpop.f32.mrf.mxu0
  %v2142 = vadd.f32 0.0, %v2141
  %v2143 = vpop.f32.mrf.mxu0
  %2144 = vdwg.mxu0
  %v2145 = vadd.f32 %v2009, %v2047
  %v2146 = vadd.f32 %v2028, %v2066
  %v2147 = vadd.f32 %v2145, %v2085
  %v2148 = vadd.f32 %v2146, %v2104
  %v2149 = vadd.f32 %v2147, %v2123
  %v2150 = vadd.f32 %v2148, %v2142
  %v2151 = vadd.f32 %v33, %v2149
  %v2152 = vadd.f32 %v34, %v2150
  %v2153 = vld [vmem:[%s6] sm:$0x1]
  %s2154 = scalar_lea.vmem %s6, 1
  %v2155 = vld [vmem:[%s2154] sm:$0x1]
  %v2156 = vsel %vm86, %v2151, 0.0
  %2157 = vadd.xlane.f32.xlu0 %v2156
  %v2158 = vpop.xlane.xlu0 %2157
  %v2159 = vsel %vm86, %v2152, 0.0
  %2160 = vadd.xlane.f32.xlu0 %v2159
  %v2161 = vpop.xlane.xlu0 %2160
  %v2162 = vrcp.pop 32.0
  %v2163 = vmul.f32 32.0, %v2162
  %v2164 = vsub.f32 1.0, %v2163
  %v2165 = vmul.f32 %v2162, %v2164
  %v2166 = vadd.f32 %v2162, %v2165
  %vm2167 = vweird.f32 %v2162
  %v2168 = vsel %vm2167, %v2162, %v2166
  %v2169 = vmul.f32 %v2158, %v2168
  %v2170 = vmul.f32 %v2161, %v2168
  %v2171 = vsub.f32 %v2151, %v2169
  %v2172 = vsub.f32 %v2152, %v2170
  %v2173 = vmul.f32 %v2171, %v2171
  %v2174 = vmul.f32 %v2172, %v2172
  %v2175 = vsel %vm86, %v2173, 0.0
  %2176 = vadd.xlane.f32.xlu0 %v2175
  %v2177 = vpop.xlane.xlu0 %2176
  %v2178 = vsel %vm86, %v2174, 0.0
  %2179 = vadd.xlane.f32.xlu0 %v2178
  %v2180 = vpop.xlane.xlu0 %2179
  %v2181 = vmul.f32 %v2177, %v2168
  %v2182 = vmul.f32 %v2180, %v2168
  %v2183 = vadd.f32 %v2181, 1e-05
  %v2184 = vadd.f32 %v2182, 1e-05
  %v2185 = vrsqrt.pop %v2183
  %v2186 = vmul.f32 %v2185, %v2183
  %v2187 = vmul.f32 %v2186, %v2185
  %v2188 = vmul.f32 0.5, %v2187
  %v2189 = vsub.f32 1.5, %v2188
  %v2190 = vmul.f32 %v2185, %v2189
  %vm2191 = vweird.f32 %v2183
  %vm2192 = vweird.f32 %v2185
  %vm2193 = vmor %vm2191, %vm2192
  %v2194 = vsel %vm2193, %v2185, %v2190
  %v2195 = vrsqrt.pop %v2184
  %v2196 = vmul.f32 %v2195, %v2184
  %v2197 = vmul.f32 %v2196, %v2195
  %v2198 = vmul.f32 0.5, %v2197
  %v2199 = vsub.f32 1.5, %v2198
  %v2200 = vmul.f32 %v2195, %v2199
  %vm2201 = vweird.f32 %v2184
  %vm2202 = vweird.f32 %v2195
  %vm2203 = vmor %vm2201, %vm2202
  %v2204 = vsel %vm2203, %v2195, %v2200
  %v2205 = vmul.f32 %v2171, %v2194
  %v2206 = vmul.f32 %v2172, %v2204
  %v2208 = vperm.slane %v2153, 0
  %v2210 = vmul.f32 %v2205, %v2208
  %v2211 = vmul.f32 %v2206, %v2208
  %v2213 = vperm.slane %v2155, 0
  %v2215 = vadd.f32 %v2210, %v2213
  %v2216 = vadd.f32 %v2211, %v2213
  %v2217 = vpack.c.bf16 %v2215, %v2215
  %v2218 = vpack.c.bf16 %v2216, %v2216
  %s2219 = scalar_lea.vmem %s3, 512
  %v2220 = vld [vmem:[%s2219] sm:$0xf]
  %v2221 = vld [vmem:[%s2219 + $0x4] sm:$0xf]
  %v2222 = vld [vmem:[%s2219 + $0x8] sm:$0xf]
  %v2223 = vld [vmem:[%s2219 + $0xc] sm:$0xf]
  %v2224 = vld [vmem:[%s2219 + $0x10] sm:$0xf]
  %v2225 = vld [vmem:[%s2219 + $0x14] sm:$0xf]
  %v2226 = vld [vmem:[%s2219 + $0x18] sm:$0xf]
  %v2227 = vld [vmem:[%s2219 + $0x1c] sm:$0xf]
  %v2228 = vld [vmem:[%s2219 + $0x20] sm:$0xf]
  %v2229 = vld [vmem:[%s2219 + $0x24] sm:$0xf]
  %v2230 = vld [vmem:[%s2219 + $0x28] sm:$0xf]
  %v2231 = vld [vmem:[%s2219 + $0x2c] sm:$0xf]
  %v2232 = vld [vmem:[%s2219 + $0x30] sm:$0xf]
  %v2233 = vld [vmem:[%s2219 + $0x34] sm:$0xf]
  %v2234 = vld [vmem:[%s2219 + $0x38] sm:$0xf]
  %v2235 = vld [vmem:[%s2219 + $0x3c] sm:$0xf]
  %v2236 = vld [vmem:[%s2219 + $0x40] sm:$0xf]
  %v2237 = vld [vmem:[%s2219 + $0x44] sm:$0xf]
  %v2238 = vld [vmem:[%s2219 + $0x48] sm:$0xf]
  %v2239 = vld [vmem:[%s2219 + $0x4c] sm:$0xf]
  %v2240 = vld [vmem:[%s2219 + $0x50] sm:$0xf]
  %v2241 = vld [vmem:[%s2219 + $0x54] sm:$0xf]
  %v2242 = vld [vmem:[%s2219 + $0x58] sm:$0xf]
  %v2243 = vld [vmem:[%s2219 + $0x5c] sm:$0xf]
  %v2244 = vld [vmem:[%s2219 + $0x60] sm:$0xf]
  %v2245 = vld [vmem:[%s2219 + $0x64] sm:$0xf]
  %v2246 = vld [vmem:[%s2219 + $0x68] sm:$0xf]
  %v2247 = vld [vmem:[%s2219 + $0x6c] sm:$0xf]
  %v2248 = vld [vmem:[%s2219 + $0x70] sm:$0xf]
  %v2249 = vld [vmem:[%s2219 + $0x74] sm:$0xf]
  %v2250 = vld [vmem:[%s2219 + $0x78] sm:$0xf]
  %v2251 = vld [vmem:[%s2219 + $0x7c] sm:$0xf]
  %v2256 = vunpack.c.l.b16 %v2220
  %v2257 = vunpack.c.l.b16 %v2221
  %v2258 = vunpack.c.l.b16 %v2222
  %v2259 = vunpack.c.l.b16 %v2223
  %v2260 = vpack.c.b16 %v2257, %v2256
  %v2261 = vpack.c.b16 %v2259, %v2258
  %v2265 = vsel %vm86, %v2217, 0
  %2267 = vmatpush.bf16.msra.mxu0 0
  %2268 = vmatpush.bf16.msra.mxu0 0
  %2269 = vmatpush.bf16.msra.mxu0 0
  %2270 = vmatpush.bf16.msra.mxu0 0
  %2271 = vmatpush.bf16.msra.mxu0 0
  %2272 = vmatpush.bf16.msra.mxu0 0
  %2273 = vmatpush.bf16.msra.mxu0 %v2261
  %2274 = vmatpush.bf16.msra.mxu0 %v2260
  %2275 = vmatmul.bf16.gmra.mxu0 %v2265
  %v2276 = vpop.f32.mrf.mxu0
  %v2277 = vadd.f32 0.0, %v2276
  %v2278 = vpop.f32.mrf.mxu0
  %2279 = vdwg.mxu0
  %v2284 = vunpack.c.l.b16 %v2224
  %v2285 = vunpack.c.l.b16 %v2225
  %v2286 = vunpack.c.l.b16 %v2226
  %v2287 = vunpack.c.l.b16 %v2227
  %v2288 = vpack.c.b16 %v2285, %v2284
  %v2289 = vpack.c.b16 %v2287, %v2286
  %v2293 = vsel %vm86, %v2218, 0
  %2295 = vmatpush.bf16.msra.mxu0 0
  %2296 = vmatpush.bf16.msra.mxu0 0
  %2297 = vmatpush.bf16.msra.mxu0 0
  %2298 = vmatpush.bf16.msra.mxu0 0
  %2299 = vmatpush.bf16.msra.mxu0 0
  %2300 = vmatpush.bf16.msra.mxu0 0
  %2301 = vmatpush.bf16.msra.mxu0 %v2289
  %2302 = vmatpush.bf16.msra.mxu0 %v2288
  %2303 = vmatmul.bf16.gmra.mxu0 %v2293
  %v2304 = vpop.f32.mrf.mxu0
  %v2305 = vadd.f32 0.0, %v2304
  %v2306 = vpop.f32.mrf.mxu0
  %2307 = vdwg.mxu0
  %v2312 = vunpack.c.l.b16 %v2228
  %v2313 = vunpack.c.l.b16 %v2229
  %v2314 = vunpack.c.l.b16 %v2230
  %v2315 = vunpack.c.l.b16 %v2231
  %v2316 = vpack.c.b16 %v2313, %v2312
  %v2317 = vpack.c.b16 %v2315, %v2314
  %2320 = vmatpush.bf16.msra.mxu0 0
  %2321 = vmatpush.bf16.msra.mxu0 0
  %2322 = vmatpush.bf16.msra.mxu0 0
  %2323 = vmatpush.bf16.msra.mxu0 0
  %2324 = vmatpush.bf16.msra.mxu0 0
  %2325 = vmatpush.bf16.msra.mxu0 0
  %2326 = vmatpush.bf16.msra.mxu0 %v2317
  %2327 = vmatpush.bf16.msra.mxu0 %v2316
  %2328 = vmatmul.bf16.gmra.mxu0 %v2265
  %v2329 = vpop.f32.mrf.mxu0
  %v2330 = vadd.f32 0.0, %v2329
  %v2331 = vpop.f32.mrf.mxu0
  %2332 = vdwg.mxu0
  %v2337 = vunpack.c.l.b16 %v2232
  %v2338 = vunpack.c.l.b16 %v2233
  %v2339 = vunpack.c.l.b16 %v2234
  %v2340 = vunpack.c.l.b16 %v2235
  %v2341 = vpack.c.b16 %v2338, %v2337
  %v2342 = vpack.c.b16 %v2340, %v2339
  %2345 = vmatpush.bf16.msra.mxu0 0
  %2346 = vmatpush.bf16.msra.mxu0 0
  %2347 = vmatpush.bf16.msra.mxu0 0
  %2348 = vmatpush.bf16.msra.mxu0 0
  %2349 = vmatpush.bf16.msra.mxu0 0
  %2350 = vmatpush.bf16.msra.mxu0 0
  %2351 = vmatpush.bf16.msra.mxu0 %v2342
  %2352 = vmatpush.bf16.msra.mxu0 %v2341
  %2353 = vmatmul.bf16.gmra.mxu0 %v2293
  %v2354 = vpop.f32.mrf.mxu0
  %v2355 = vadd.f32 0.0, %v2354
  %v2356 = vpop.f32.mrf.mxu0
  %2357 = vdwg.mxu0
  %v2362 = vunpack.c.l.b16 %v2236
  %v2363 = vunpack.c.l.b16 %v2237
  %v2364 = vunpack.c.l.b16 %v2238
  %v2365 = vunpack.c.l.b16 %v2239
  %v2366 = vpack.c.b16 %v2363, %v2362
  %v2367 = vpack.c.b16 %v2365, %v2364
  %2370 = vmatpush.bf16.msra.mxu0 0
  %2371 = vmatpush.bf16.msra.mxu0 0
  %2372 = vmatpush.bf16.msra.mxu0 0
  %2373 = vmatpush.bf16.msra.mxu0 0
  %2374 = vmatpush.bf16.msra.mxu0 0
  %2375 = vmatpush.bf16.msra.mxu0 0
  %2376 = vmatpush.bf16.msra.mxu0 %v2367
  %2377 = vmatpush.bf16.msra.mxu0 %v2366
  %2378 = vmatmul.bf16.gmra.mxu0 %v2265
  %v2379 = vpop.f32.mrf.mxu0
  %v2380 = vadd.f32 0.0, %v2379
  %v2381 = vpop.f32.mrf.mxu0
  %2382 = vdwg.mxu0
  %v2387 = vunpack.c.l.b16 %v2240
  %v2388 = vunpack.c.l.b16 %v2241
  %v2389 = vunpack.c.l.b16 %v2242
  %v2390 = vunpack.c.l.b16 %v2243
  %v2391 = vpack.c.b16 %v2388, %v2387
  %v2392 = vpack.c.b16 %v2390, %v2389
  %2395 = vmatpush.bf16.msra.mxu0 0
  %2396 = vmatpush.bf16.msra.mxu0 0
  %2397 = vmatpush.bf16.msra.mxu0 0
  %2398 = vmatpush.bf16.msra.mxu0 0
  %2399 = vmatpush.bf16.msra.mxu0 0
  %2400 = vmatpush.bf16.msra.mxu0 0
  %2401 = vmatpush.bf16.msra.mxu0 %v2392
  %2402 = vmatpush.bf16.msra.mxu0 %v2391
  %2403 = vmatmul.bf16.gmra.mxu0 %v2293
  %v2404 = vpop.f32.mrf.mxu0
  %v2405 = vadd.f32 0.0, %v2404
  %v2406 = vpop.f32.mrf.mxu0
  %2407 = vdwg.mxu0
  %v2412 = vunpack.c.l.b16 %v2244
  %v2413 = vunpack.c.l.b16 %v2245
  %v2414 = vunpack.c.l.b16 %v2246
  %v2415 = vunpack.c.l.b16 %v2247
  %v2416 = vpack.c.b16 %v2413, %v2412
  %v2417 = vpack.c.b16 %v2415, %v2414
  %2420 = vmatpush.bf16.msra.mxu0 0
  %2421 = vmatpush.bf16.msra.mxu0 0
  %2422 = vmatpush.bf16.msra.mxu0 0
  %2423 = vmatpush.bf16.msra.mxu0 0
  %2424 = vmatpush.bf16.msra.mxu0 0
  %2425 = vmatpush.bf16.msra.mxu0 0
  %2426 = vmatpush.bf16.msra.mxu0 %v2417
  %2427 = vmatpush.bf16.msra.mxu0 %v2416
  %2428 = vmatmul.bf16.gmra.mxu0 %v2265
  %v2429 = vpop.f32.mrf.mxu0
  %v2430 = vadd.f32 0.0, %v2429
  %v2431 = vpop.f32.mrf.mxu0
  %2432 = vdwg.mxu0
  %v2437 = vunpack.c.l.b16 %v2248
  %v2438 = vunpack.c.l.b16 %v2249
  %v2439 = vunpack.c.l.b16 %v2250
  %v2440 = vunpack.c.l.b16 %v2251
  %v2441 = vpack.c.b16 %v2438, %v2437
  %v2442 = vpack.c.b16 %v2440, %v2439
  %2445 = vmatpush.bf16.msra.mxu0 0
  %2446 = vmatpush.bf16.msra.mxu0 0
  %2447 = vmatpush.bf16.msra.mxu0 0
  %2448 = vmatpush.bf16.msra.mxu0 0
  %2449 = vmatpush.bf16.msra.mxu0 0
  %2450 = vmatpush.bf16.msra.mxu0 0
  %2451 = vmatpush.bf16.msra.mxu0 %v2442
  %2452 = vmatpush.bf16.msra.mxu0 %v2441
  %2453 = vmatmul.bf16.gmra.mxu0 %v2293
  %v2454 = vpop.f32.mrf.mxu0
  %v2455 = vadd.f32 0.0, %v2454
  %v2456 = vpop.f32.mrf.mxu0
  %2457 = vdwg.mxu0
  %v2458 = vpack.c.bf16 %v2277, %v2277
  %v2459 = vpack.c.bf16 %v2305, %v2305
  %v2460 = vpack.c.bf16 %v2330, %v2330
  %v2461 = vpack.c.bf16 %v2355, %v2355
  %v2462 = vpack.c.bf16 %v2380, %v2380
  %v2463 = vpack.c.bf16 %v2405, %v2405
  %v2464 = vpack.c.bf16 %v2430, %v2430
  %v2465 = vpack.c.bf16 %v2455, %v2455
  %s2466 = scalar_lea.vmem %s3, 640
  %v2467 = vld [vmem:[%s2466] sm:$0xf]
  %v2468 = vld [vmem:[%s2466 + $0x4] sm:$0xf]
  %v2469 = vld [vmem:[%s2466 + $0x8] sm:$0xf]
  %v2470 = vld [vmem:[%s2466 + $0xc] sm:$0xf]
  %v2471 = vld [vmem:[%s2466 + $0x10] sm:$0xf]
  %v2472 = vld [vmem:[%s2466 + $0x14] sm:$0xf]
  %v2473 = vld [vmem:[%s2466 + $0x18] sm:$0xf]
  %v2474 = vld [vmem:[%s2466 + $0x1c] sm:$0xf]
  %v2475 = vld [vmem:[%s2466 + $0x20] sm:$0xf]
  %v2476 = vld [vmem:[%s2466 + $0x24] sm:$0xf]
  %v2477 = vld [vmem:[%s2466 + $0x28] sm:$0xf]
  %v2478 = vld [vmem:[%s2466 + $0x2c] sm:$0xf]
  %v2479 = vld [vmem:[%s2466 + $0x30] sm:$0xf]
  %v2480 = vld [vmem:[%s2466 + $0x34] sm:$0xf]
  %v2481 = vld [vmem:[%s2466 + $0x38] sm:$0xf]
  %v2482 = vld [vmem:[%s2466 + $0x3c] sm:$0xf]
  %v2483 = vld [vmem:[%s2466 + $0x40] sm:$0xf]
  %v2484 = vld [vmem:[%s2466 + $0x44] sm:$0xf]
  %v2485 = vld [vmem:[%s2466 + $0x48] sm:$0xf]
  %v2486 = vld [vmem:[%s2466 + $0x4c] sm:$0xf]
  %v2487 = vld [vmem:[%s2466 + $0x50] sm:$0xf]
  %v2488 = vld [vmem:[%s2466 + $0x54] sm:$0xf]
  %v2489 = vld [vmem:[%s2466 + $0x58] sm:$0xf]
  %v2490 = vld [vmem:[%s2466 + $0x5c] sm:$0xf]
  %v2491 = vld [vmem:[%s2466 + $0x60] sm:$0xf]
  %v2492 = vld [vmem:[%s2466 + $0x64] sm:$0xf]
  %v2493 = vld [vmem:[%s2466 + $0x68] sm:$0xf]
  %v2494 = vld [vmem:[%s2466 + $0x6c] sm:$0xf]
  %v2495 = vld [vmem:[%s2466 + $0x70] sm:$0xf]
  %v2496 = vld [vmem:[%s2466 + $0x74] sm:$0xf]
  %v2497 = vld [vmem:[%s2466 + $0x78] sm:$0xf]
  %v2498 = vld [vmem:[%s2466 + $0x7c] sm:$0xf]
  %v2501 = vunpack.c.l.b16 %v38
  %v2502 = vunpack.c.l.b16 %v39
  %v2503 = vpack.c.b16 %v2502, %v2501
  %v2508 = vunpack.c.l.b16 %v2467
  %v2509 = vunpack.c.l.b16 %v2468
  %v2510 = vunpack.c.l.b16 %v2469
  %v2511 = vunpack.c.l.b16 %v2470
  %v2512 = vpack.c.b16 %v2509, %v2508
  %v2513 = vpack.c.b16 %v2511, %v2510
  %v2517 = vsel %vm86, %v2503, 0
  %2519 = vmatpush.bf16.msra.mxu0 0
  %2520 = vmatpush.bf16.msra.mxu0 0
  %2521 = vmatpush.bf16.msra.mxu0 0
  %2522 = vmatpush.bf16.msra.mxu0 0
  %2523 = vmatpush.bf16.msra.mxu0 0
  %2524 = vmatpush.bf16.msra.mxu0 0
  %2525 = vmatpush.bf16.msra.mxu0 %v2513
  %2526 = vmatpush.bf16.msra.mxu0 %v2512
  %2527 = vmatmul.bf16.gmra.mxu0 %v2517
  %v2528 = vpop.f32.mrf.mxu0
  %v2529 = vadd.f32 0.0, %v2528
  %v2530 = vpop.f32.mrf.mxu0
  %v2531 = vadd.f32 0.0, %v2530
  %2532 = vdwg.mxu0
  %v2535 = vunpack.c.l.b16 %v40
  %v2536 = vunpack.c.l.b16 %v41
  %v2537 = vpack.c.b16 %v2536, %v2535
  %v2542 = vunpack.c.l.b16 %v2471
  %v2543 = vunpack.c.l.b16 %v2472
  %v2544 = vunpack.c.l.b16 %v2473
  %v2545 = vunpack.c.l.b16 %v2474
  %v2546 = vpack.c.b16 %v2543, %v2542
  %v2547 = vpack.c.b16 %v2545, %v2544
  %v2551 = vsel %vm86, %v2537, 0
  %2553 = vmatpush.bf16.msra.mxu0 0
  %2554 = vmatpush.bf16.msra.mxu0 0
  %2555 = vmatpush.bf16.msra.mxu0 0
  %2556 = vmatpush.bf16.msra.mxu0 0
  %2557 = vmatpush.bf16.msra.mxu0 0
  %2558 = vmatpush.bf16.msra.mxu0 0
  %2559 = vmatpush.bf16.msra.mxu0 %v2547
  %2560 = vmatpush.bf16.msra.mxu0 %v2546
  %2561 = vmatmul.bf16.gmra.mxu0 %v2551
  %v2562 = vpop.f32.mrf.mxu0
  %v2563 = vadd.f32 0.0, %v2562
  %v2564 = vpop.f32.mrf.mxu0
  %v2565 = vadd.f32 0.0, %v2564
  %2566 = vdwg.mxu0
  %v2571 = vunpack.c.l.b16 %v2475
  %v2572 = vunpack.c.l.b16 %v2476
  %v2573 = vunpack.c.l.b16 %v2477
  %v2574 = vunpack.c.l.b16 %v2478
  %v2575 = vpack.c.b16 %v2572, %v2571
  %v2576 = vpack.c.b16 %v2574, %v2573
  %2579 = vmatpush.bf16.msra.mxu0 0
  %2580 = vmatpush.bf16.msra.mxu0 0
  %2581 = vmatpush.bf16.msra.mxu0 0
  %2582 = vmatpush.bf16.msra.mxu0 0
  %2583 = vmatpush.bf16.msra.mxu0 0
  %2584 = vmatpush.bf16.msra.mxu0 0
  %2585 = vmatpush.bf16.msra.mxu0 %v2576
  %2586 = vmatpush.bf16.msra.mxu0 %v2575
  %2587 = vmatmul.bf16.gmra.mxu0 %v2517
  %v2588 = vpop.f32.mrf.mxu0
  %v2589 = vadd.f32 0.0, %v2588
  %v2590 = vpop.f32.mrf.mxu0
  %v2591 = vadd.f32 0.0, %v2590
  %2592 = vdwg.mxu0
  %v2597 = vunpack.c.l.b16 %v2479
  %v2598 = vunpack.c.l.b16 %v2480
  %v2599 = vunpack.c.l.b16 %v2481
  %v2600 = vunpack.c.l.b16 %v2482
  %v2601 = vpack.c.b16 %v2598, %v2597
  %v2602 = vpack.c.b16 %v2600, %v2599
  %2605 = vmatpush.bf16.msra.mxu0 0
  %2606 = vmatpush.bf16.msra.mxu0 0
  %2607 = vmatpush.bf16.msra.mxu0 0
  %2608 = vmatpush.bf16.msra.mxu0 0
  %2609 = vmatpush.bf16.msra.mxu0 0
  %2610 = vmatpush.bf16.msra.mxu0 0
  %2611 = vmatpush.bf16.msra.mxu0 %v2602
  %2612 = vmatpush.bf16.msra.mxu0 %v2601
  %2613 = vmatmul.bf16.gmra.mxu0 %v2551
  %v2614 = vpop.f32.mrf.mxu0
  %v2615 = vadd.f32 0.0, %v2614
  %v2616 = vpop.f32.mrf.mxu0
  %v2617 = vadd.f32 0.0, %v2616
  %2618 = vdwg.mxu0
  %v2623 = vunpack.c.l.b16 %v2483
  %v2624 = vunpack.c.l.b16 %v2484
  %v2625 = vunpack.c.l.b16 %v2485
  %v2626 = vunpack.c.l.b16 %v2486
  %v2627 = vpack.c.b16 %v2624, %v2623
  %v2628 = vpack.c.b16 %v2626, %v2625
  %2631 = vmatpush.bf16.msra.mxu0 0
  %2632 = vmatpush.bf16.msra.mxu0 0
  %2633 = vmatpush.bf16.msra.mxu0 0
  %2634 = vmatpush.bf16.msra.mxu0 0
  %2635 = vmatpush.bf16.msra.mxu0 0
  %2636 = vmatpush.bf16.msra.mxu0 0
  %2637 = vmatpush.bf16.msra.mxu0 %v2628
  %2638 = vmatpush.bf16.msra.mxu0 %v2627
  %2639 = vmatmul.bf16.gmra.mxu0 %v2517
  %v2640 = vpop.f32.mrf.mxu0
  %v2641 = vadd.f32 0.0, %v2640
  %v2642 = vpop.f32.mrf.mxu0
  %v2643 = vadd.f32 0.0, %v2642
  %2644 = vdwg.mxu0
  %v2649 = vunpack.c.l.b16 %v2487
  %v2650 = vunpack.c.l.b16 %v2488
  %v2651 = vunpack.c.l.b16 %v2489
  %v2652 = vunpack.c.l.b16 %v2490
  %v2653 = vpack.c.b16 %v2650, %v2649
  %v2654 = vpack.c.b16 %v2652, %v2651
  %2657 = vmatpush.bf16.msra.mxu0 0
  %2658 = vmatpush.bf16.msra.mxu0 0
  %2659 = vmatpush.bf16.msra.mxu0 0
  %2660 = vmatpush.bf16.msra.mxu0 0
  %2661 = vmatpush.bf16.msra.mxu0 0
  %2662 = vmatpush.bf16.msra.mxu0 0
  %2663 = vmatpush.bf16.msra.mxu0 %v2654
  %2664 = vmatpush.bf16.msra.mxu0 %v2653
  %2665 = vmatmul.bf16.gmra.mxu0 %v2551
  %v2666 = vpop.f32.mrf.mxu0
  %v2667 = vadd.f32 0.0, %v2666
  %v2668 = vpop.f32.mrf.mxu0
  %v2669 = vadd.f32 0.0, %v2668
  %2670 = vdwg.mxu0
  %v2675 = vunpack.c.l.b16 %v2491
  %v2676 = vunpack.c.l.b16 %v2492
  %v2677 = vunpack.c.l.b16 %v2493
  %v2678 = vunpack.c.l.b16 %v2494
  %v2679 = vpack.c.b16 %v2676, %v2675
  %v2680 = vpack.c.b16 %v2678, %v2677
  %2683 = vmatpush.bf16.msra.mxu0 0
  %2684 = vmatpush.bf16.msra.mxu0 0
  %2685 = vmatpush.bf16.msra.mxu0 0
  %2686 = vmatpush.bf16.msra.mxu0 0
  %2687 = vmatpush.bf16.msra.mxu0 0
  %2688 = vmatpush.bf16.msra.mxu0 0
  %2689 = vmatpush.bf16.msra.mxu0 %v2680
  %2690 = vmatpush.bf16.msra.mxu0 %v2679
  %2691 = vmatmul.bf16.gmra.mxu0 %v2517
  %v2692 = vpop.f32.mrf.mxu0
  %v2693 = vadd.f32 0.0, %v2692
  %v2694 = vpop.f32.mrf.mxu0
  %v2695 = vadd.f32 0.0, %v2694
  %2696 = vdwg.mxu0
  %v2701 = vunpack.c.l.b16 %v2495
  %v2702 = vunpack.c.l.b16 %v2496
  %v2703 = vunpack.c.l.b16 %v2497
  %v2704 = vunpack.c.l.b16 %v2498
  %v2705 = vpack.c.b16 %v2702, %v2701
  %v2706 = vpack.c.b16 %v2704, %v2703
  %2709 = vmatpush.bf16.msra.mxu0 0
  %2710 = vmatpush.bf16.msra.mxu0 0
  %2711 = vmatpush.bf16.msra.mxu0 0
  %2712 = vmatpush.bf16.msra.mxu0 0
  %2713 = vmatpush.bf16.msra.mxu0 0
  %2714 = vmatpush.bf16.msra.mxu0 0
  %2715 = vmatpush.bf16.msra.mxu0 %v2706
  %2716 = vmatpush.bf16.msra.mxu0 %v2705
  %2717 = vmatmul.bf16.gmra.mxu0 %v2551
  %v2718 = vpop.f32.mrf.mxu0
  %v2719 = vadd.f32 0.0, %v2718
  %v2720 = vpop.f32.mrf.mxu0
  %v2721 = vadd.f32 0.0, %v2720
  %2722 = vdwg.mxu0
  %v2723 = vpack.c.bf16 %v2529, %v2529
  %v2724 = vpack.c.bf16 %v2531, %v2531
  %v2725 = vpack.c.bf16 %v2563, %v2563
  %v2726 = vpack.c.bf16 %v2565, %v2565
  %v2727 = vpack.c.bf16 %v2589, %v2589
  %v2728 = vpack.c.bf16 %v2591, %v2591
  %v2729 = vpack.c.bf16 %v2615, %v2615
  %v2730 = vpack.c.bf16 %v2617, %v2617
  %v2731 = vpack.c.bf16 %v2641, %v2641
  %v2732 = vpack.c.bf16 %v2643, %v2643
  %v2733 = vpack.c.bf16 %v2667, %v2667
  %v2734 = vpack.c.bf16 %v2669, %v2669
  %v2735 = vpack.c.bf16 %v2693, %v2693
  %v2736 = vpack.c.bf16 %v2695, %v2695
  %v2737 = vpack.c.bf16 %v2719, %v2719
  %v2738 = vpack.c.bf16 %v2721, %v2721
  %s2739 = scalar_lea.vmem %s3, 768
  %v2740 = vld [vmem:[%s2739] sm:$0xf]
  %v2741 = vld [vmem:[%s2739 + $0x4] sm:$0xf]
  %v2742 = vld [vmem:[%s2739 + $0x8] sm:$0xf]
  %v2743 = vld [vmem:[%s2739 + $0xc] sm:$0xf]
  %v2744 = vld [vmem:[%s2739 + $0x10] sm:$0xf]
  %v2745 = vld [vmem:[%s2739 + $0x14] sm:$0xf]
  %v2746 = vld [vmem:[%s2739 + $0x18] sm:$0xf]
  %v2747 = vld [vmem:[%s2739 + $0x1c] sm:$0xf]
  %v2748 = vld [vmem:[%s2739 + $0x20] sm:$0xf]
  %v2749 = vld [vmem:[%s2739 + $0x24] sm:$0xf]
  %v2750 = vld [vmem:[%s2739 + $0x28] sm:$0xf]
  %v2751 = vld [vmem:[%s2739 + $0x2c] sm:$0xf]
  %v2752 = vld [vmem:[%s2739 + $0x30] sm:$0xf]
  %v2753 = vld [vmem:[%s2739 + $0x34] sm:$0xf]
  %v2754 = vld [vmem:[%s2739 + $0x38] sm:$0xf]
  %v2755 = vld [vmem:[%s2739 + $0x3c] sm:$0xf]
  %v2756 = vld [vmem:[%s2739 + $0x40] sm:$0xf]
  %v2757 = vld [vmem:[%s2739 + $0x44] sm:$0xf]
  %v2758 = vld [vmem:[%s2739 + $0x48] sm:$0xf]
  %v2759 = vld [vmem:[%s2739 + $0x4c] sm:$0xf]
  %v2760 = vld [vmem:[%s2739 + $0x50] sm:$0xf]
  %v2761 = vld [vmem:[%s2739 + $0x54] sm:$0xf]
  %v2762 = vld [vmem:[%s2739 + $0x58] sm:$0xf]
  %v2763 = vld [vmem:[%s2739 + $0x5c] sm:$0xf]
  %v2764 = vld [vmem:[%s2739 + $0x60] sm:$0xf]
  %v2765 = vld [vmem:[%s2739 + $0x64] sm:$0xf]
  %v2766 = vld [vmem:[%s2739 + $0x68] sm:$0xf]
  %v2767 = vld [vmem:[%s2739 + $0x6c] sm:$0xf]
  %v2768 = vld [vmem:[%s2739 + $0x70] sm:$0xf]
  %v2769 = vld [vmem:[%s2739 + $0x74] sm:$0xf]
  %v2770 = vld [vmem:[%s2739 + $0x78] sm:$0xf]
  %v2771 = vld [vmem:[%s2739 + $0x7c] sm:$0xf]
  %v2776 = vunpack.c.l.b16 %v2740
  %v2777 = vunpack.c.l.b16 %v2741
  %v2778 = vunpack.c.l.b16 %v2742
  %v2779 = vunpack.c.l.b16 %v2743
  %v2780 = vpack.c.b16 %v2777, %v2776
  %v2781 = vpack.c.b16 %v2779, %v2778
  %2784 = vmatpush.bf16.msra.mxu0 0
  %2785 = vmatpush.bf16.msra.mxu0 0
  %2786 = vmatpush.bf16.msra.mxu0 0
  %2787 = vmatpush.bf16.msra.mxu0 0
  %2788 = vmatpush.bf16.msra.mxu0 0
  %2789 = vmatpush.bf16.msra.mxu0 0
  %2790 = vmatpush.bf16.msra.mxu0 %v2781
  %2791 = vmatpush.bf16.msra.mxu0 %v2780
  %2792 = vmatmul.bf16.gmra.mxu0 %v2517
  %v2793 = vpop.f32.mrf.mxu0
  %v2794 = vadd.f32 0.0, %v2793
  %v2795 = vpop.f32.mrf.mxu0
  %v2796 = vadd.f32 0.0, %v2795
  %2797 = vdwg.mxu0
  %v2802 = vunpack.c.l.b16 %v2744
  %v2803 = vunpack.c.l.b16 %v2745
  %v2804 = vunpack.c.l.b16 %v2746
  %v2805 = vunpack.c.l.b16 %v2747
  %v2806 = vpack.c.b16 %v2803, %v2802
  %v2807 = vpack.c.b16 %v2805, %v2804
  %2810 = vmatpush.bf16.msra.mxu0 0
  %2811 = vmatpush.bf16.msra.mxu0 0
  %2812 = vmatpush.bf16.msra.mxu0 0
  %2813 = vmatpush.bf16.msra.mxu0 0
  %2814 = vmatpush.bf16.msra.mxu0 0
  %2815 = vmatpush.bf16.msra.mxu0 0
  %2816 = vmatpush.bf16.msra.mxu0 %v2807
  %2817 = vmatpush.bf16.msra.mxu0 %v2806
  %2818 = vmatmul.bf16.gmra.mxu0 %v2551
  %v2819 = vpop.f32.mrf.mxu0
  %v2820 = vadd.f32 0.0, %v2819
  %v2821 = vpop.f32.mrf.mxu0
  %v2822 = vadd.f32 0.0, %v2821
  %2823 = vdwg.mxu0
  %v2828 = vunpack.c.l.b16 %v2748
  %v2829 = vunpack.c.l.b16 %v2749
  %v2830 = vunpack.c.l.b16 %v2750
  %v2831 = vunpack.c.l.b16 %v2751
  %v2832 = vpack.c.b16 %v2829, %v2828
  %v2833 = vpack.c.b16 %v2831, %v2830
  %2836 = vmatpush.bf16.msra.mxu0 0
  %2837 = vmatpush.bf16.msra.mxu0 0
  %2838 = vmatpush.bf16.msra.mxu0 0
  %2839 = vmatpush.bf16.msra.mxu0 0
  %2840 = vmatpush.bf16.msra.mxu0 0
  %2841 = vmatpush.bf16.msra.mxu0 0
  %2842 = vmatpush.bf16.msra.mxu0 %v2833
  %2843 = vmatpush.bf16.msra.mxu0 %v2832
  %2844 = vmatmul.bf16.gmra.mxu0 %v2517
  %v2845 = vpop.f32.mrf.mxu0
  %v2846 = vadd.f32 0.0, %v2845
  %v2847 = vpop.f32.mrf.mxu0
  %v2848 = vadd.f32 0.0, %v2847
  %2849 = vdwg.mxu0
  %v2854 = vunpack.c.l.b16 %v2752
  %v2855 = vunpack.c.l.b16 %v2753
  %v2856 = vunpack.c.l.b16 %v2754
  %v2857 = vunpack.c.l.b16 %v2755
  %v2858 = vpack.c.b16 %v2855, %v2854
  %v2859 = vpack.c.b16 %v2857, %v2856
  %2862 = vmatpush.bf16.msra.mxu0 0
  %2863 = vmatpush.bf16.msra.mxu0 0
  %2864 = vmatpush.bf16.msra.mxu0 0
  %2865 = vmatpush.bf16.msra.mxu0 0
  %2866 = vmatpush.bf16.msra.mxu0 0
  %2867 = vmatpush.bf16.msra.mxu0 0
  %2868 = vmatpush.bf16.msra.mxu0 %v2859
  %2869 = vmatpush.bf16.msra.mxu0 %v2858
  %2870 = vmatmul.bf16.gmra.mxu0 %v2551
  %v2871 = vpop.f32.mrf.mxu0
  %v2872 = vadd.f32 0.0, %v2871
  %v2873 = vpop.f32.mrf.mxu0
  %v2874 = vadd.f32 0.0, %v2873
  %2875 = vdwg.mxu0
  %v2880 = vunpack.c.l.b16 %v2756
  %v2881 = vunpack.c.l.b16 %v2757
  %v2882 = vunpack.c.l.b16 %v2758
  %v2883 = vunpack.c.l.b16 %v2759
  %v2884 = vpack.c.b16 %v2881, %v2880
  %v2885 = vpack.c.b16 %v2883, %v2882
  %2888 = vmatpush.bf16.msra.mxu0 0
  %2889 = vmatpush.bf16.msra.mxu0 0
  %2890 = vmatpush.bf16.msra.mxu0 0
  %2891 = vmatpush.bf16.msra.mxu0 0
  %2892 = vmatpush.bf16.msra.mxu0 0
  %2893 = vmatpush.bf16.msra.mxu0 0
  %2894 = vmatpush.bf16.msra.mxu0 %v2885
  %2895 = vmatpush.bf16.msra.mxu0 %v2884
  %2896 = vmatmul.bf16.gmra.mxu0 %v2517
  %v2897 = vpop.f32.mrf.mxu0
  %v2898 = vadd.f32 0.0, %v2897
  %v2899 = vpop.f32.mrf.mxu0
  %v2900 = vadd.f32 0.0, %v2899
  %2901 = vdwg.mxu0
  %v2906 = vunpack.c.l.b16 %v2760
  %v2907 = vunpack.c.l.b16 %v2761
  %v2908 = vunpack.c.l.b16 %v2762
  %v2909 = vunpack.c.l.b16 %v2763
  %v2910 = vpack.c.b16 %v2907, %v2906
  %v2911 = vpack.c.b16 %v2909, %v2908
  %2914 = vmatpush.bf16.msra.mxu0 0
  %2915 = vmatpush.bf16.msra.mxu0 0
  %2916 = vmatpush.bf16.msra.mxu0 0
  %2917 = vmatpush.bf16.msra.mxu0 0
  %2918 = vmatpush.bf16.msra.mxu0 0
  %2919 = vmatpush.bf16.msra.mxu0 0
  %2920 = vmatpush.bf16.msra.mxu0 %v2911
  %2921 = vmatpush.bf16.msra.mxu0 %v2910
  %2922 = vmatmul.bf16.gmra.mxu0 %v2551
  %v2923 = vpop.f32.mrf.mxu0
  %v2924 = vadd.f32 0.0, %v2923
  %v2925 = vpop.f32.mrf.mxu0
  %v2926 = vadd.f32 0.0, %v2925
  %2927 = vdwg.mxu0
  %v2932 = vunpack.c.l.b16 %v2764
  %v2933 = vunpack.c.l.b16 %v2765
  %v2934 = vunpack.c.l.b16 %v2766
  %v2935 = vunpack.c.l.b16 %v2767
  %v2936 = vpack.c.b16 %v2933, %v2932
  %v2937 = vpack.c.b16 %v2935, %v2934
  %2940 = vmatpush.bf16.msra.mxu0 0
  %2941 = vmatpush.bf16.msra.mxu0 0
  %2942 = vmatpush.bf16.msra.mxu0 0
  %2943 = vmatpush.bf16.msra.mxu0 0
  %2944 = vmatpush.bf16.msra.mxu0 0
  %2945 = vmatpush.bf16.msra.mxu0 0
  %2946 = vmatpush.bf16.msra.mxu0 %v2937
  %2947 = vmatpush.bf16.msra.mxu0 %v2936
  %2948 = vmatmul.bf16.gmra.mxu0 %v2517
  %v2949 = vpop.f32.mrf.mxu0
  %v2950 = vadd.f32 0.0, %v2949
  %v2951 = vpop.f32.mrf.mxu0
  %v2952 = vadd.f32 0.0, %v2951
  %2953 = vdwg.mxu0
  %v2958 = vunpack.c.l.b16 %v2768
  %v2959 = vunpack.c.l.b16 %v2769
  %v2960 = vunpack.c.l.b16 %v2770
  %v2961 = vunpack.c.l.b16 %v2771
  %v2962 = vpack.c.b16 %v2959, %v2958
  %v2963 = vpack.c.b16 %v2961, %v2960
  %2966 = vmatpush.bf16.msra.mxu0 0
  %2967 = vmatpush.bf16.msra.mxu0 0
  %2968 = vmatpush.bf16.msra.mxu0 0
  %2969 = vmatpush.bf16.msra.mxu0 0
  %2970 = vmatpush.bf16.msra.mxu0 0
  %2971 = vmatpush.bf16.msra.mxu0 0
  %2972 = vmatpush.bf16.msra.mxu0 %v2963
  %2973 = vmatpush.bf16.msra.mxu0 %v2962
  %2974 = vmatmul.bf16.gmra.mxu0 %v2551
  %v2975 = vpop.f32.mrf.mxu0
  %v2976 = vadd.f32 0.0, %v2975
  %v2977 = vpop.f32.mrf.mxu0
  %v2978 = vadd.f32 0.0, %v2977
  %2979 = vdwg.mxu0
  %v2980 = vpack.c.bf16 %v2794, %v2794
  %v2981 = vpack.c.bf16 %v2796, %v2796
  %v2982 = vpack.c.bf16 %v2820, %v2820
  %v2983 = vpack.c.bf16 %v2822, %v2822
  %v2984 = vpack.c.bf16 %v2846, %v2846
  %v2985 = vpack.c.bf16 %v2848, %v2848
  %v2986 = vpack.c.bf16 %v2872, %v2872
  %v2987 = vpack.c.bf16 %v2874, %v2874
  %v2988 = vpack.c.bf16 %v2898, %v2898
  %v2989 = vpack.c.bf16 %v2900, %v2900
  %v2990 = vpack.c.bf16 %v2924, %v2924
  %v2991 = vpack.c.bf16 %v2926, %v2926
  %v2992 = vpack.c.bf16 %v2950, %v2950
  %v2993 = vpack.c.bf16 %v2952, %v2952
  %v2994 = vpack.c.bf16 %v2976, %v2976
  %v2995 = vpack.c.bf16 %v2978, %v2978
  %v2996 = vld [vmem:[%s8] sm:$0x1]
  %v2997 = vld [vmem:[%s8 + $0x1] sm:$0x1]
  %v2998 = vld [vmem:[%s8 + $0x2] sm:$0x1]
  %v2999 = vld [vmem:[%s8 + $0x3] sm:$0x1]
  %v3000 = vld [vmem:[%s8 + $0x4] sm:$0x1]
  %v3001 = vld [vmem:[%s8 + $0x5] sm:$0x1]
  %v3002 = vld [vmem:[%s8 + $0x6] sm:$0x1]
  %v3003 = vld [vmem:[%s8 + $0x7] sm:$0x1]
  %v3012 = vperm.slane %v2996, 0
  %v3013 = vperm.slane %v2997, 0
  %v3014 = vperm.slane %v2998, 0
  %v3015 = vperm.slane %v2999, 0
  %v3016 = vperm.slane %v3000, 0
  %v3017 = vperm.slane %v3001, 0
  %v3018 = vperm.slane %v3002, 0
  %v3019 = vperm.slane %v3003, 0
  %v3030 = vunpack.c.l.b16 %v2723
  %v3031 = vunpack.c.l.b16 %v2724
  %v3032 = vpack.c.b16 %v3031, %v3030
  %v3034 = vsel %vm1104, %v2458, 0
  %v3037 = vsel %vm1104, %v3032, 0
  %3039 = vmatpush.bf16.xpose.msra.mxu0 0
  %3040 = vmatpush.bf16.xpose.msra.mxu0 0
  %3041 = vmatpush.bf16.xpose.msra.mxu0 0
  %3042 = vmatpush.bf16.xpose.msra.mxu0 0
  %3043 = vmatpush.bf16.xpose.msra.mxu0 0
  %3044 = vmatpush.bf16.xpose.msra.mxu0 0
  %3045 = vmatpush.bf16.xpose.msra.mxu0 0
  %3046 = vmatpush.bf16.xpose.msra.mxu0 %v3037
  %3047 = vmatmul.bf16.gmra.mxu0 %v3034
  %v3048 = vpop.f32.mrf.mxu0
  %v3049 = vadd.f32 %v3012, %v3048
  %v3050 = vpop.f32.mrf.mxu0
  %3051 = vdwg.mxu0
  %v3054 = vunpack.c.l.b16 %v2725
  %v3055 = vunpack.c.l.b16 %v2726
  %v3056 = vpack.c.b16 %v3055, %v3054
  %v3058 = vsel %vm1104, %v2459, 0
  %v3061 = vsel %vm1104, %v3056, 0
  %3063 = vmatpush.bf16.xpose.msra.mxu0 0
  %3064 = vmatpush.bf16.xpose.msra.mxu0 0
  %3065 = vmatpush.bf16.xpose.msra.mxu0 0
  %3066 = vmatpush.bf16.xpose.msra.mxu0 0
  %3067 = vmatpush.bf16.xpose.msra.mxu0 0
  %3068 = vmatpush.bf16.xpose.msra.mxu0 0
  %3069 = vmatpush.bf16.xpose.msra.mxu0 0
  %3070 = vmatpush.bf16.xpose.msra.mxu0 %v3061
  %3071 = vmatmul.bf16.gmra.mxu0 %v3058
  %v3072 = vpop.f32.mrf.mxu0
  %v3073 = vadd.f32 %v3013, %v3072
  %v3074 = vpop.f32.mrf.mxu0
  %3075 = vdwg.mxu0
  %v3078 = vunpack.c.l.b16 %v2727
  %v3079 = vunpack.c.l.b16 %v2728
  %v3080 = vpack.c.b16 %v3079, %v3078
  %v3082 = vsel %vm1104, %v2460, 0
  %v3085 = vsel %vm1104, %v3080, 0
  %3087 = vmatpush.bf16.xpose.msra.mxu0 0
  %3088 = vmatpush.bf16.xpose.msra.mxu0 0
  %3089 = vmatpush.bf16.xpose.msra.mxu0 0
  %3090 = vmatpush.bf16.xpose.msra.mxu0 0
  %3091 = vmatpush.bf16.xpose.msra.mxu0 0
  %3092 = vmatpush.bf16.xpose.msra.mxu0 0
  %3093 = vmatpush.bf16.xpose.msra.mxu0 0
  %3094 = vmatpush.bf16.xpose.msra.mxu0 %v3085
  %3095 = vmatmul.bf16.gmra.mxu0 %v3082
  %v3096 = vpop.f32.mrf.mxu0
  %v3097 = vadd.f32 %v3014, %v3096
  %v3098 = vpop.f32.mrf.mxu0
  %3099 = vdwg.mxu0
  %v3102 = vunpack.c.l.b16 %v2729
  %v3103 = vunpack.c.l.b16 %v2730
  %v3104 = vpack.c.b16 %v3103, %v3102
  %v3106 = vsel %vm1104, %v2461, 0
  %v3109 = vsel %vm1104, %v3104, 0
  %3111 = vmatpush.bf16.xpose.msra.mxu0 0
  %3112 = vmatpush.bf16.xpose.msra.mxu0 0
  %3113 = vmatpush.bf16.xpose.msra.mxu0 0
  %3114 = vmatpush.bf16.xpose.msra.mxu0 0
  %3115 = vmatpush.bf16.xpose.msra.mxu0 0
  %3116 = vmatpush.bf16.xpose.msra.mxu0 0
  %3117 = vmatpush.bf16.xpose.msra.mxu0 0
  %3118 = vmatpush.bf16.xpose.msra.mxu0 %v3109
  %3119 = vmatmul.bf16.gmra.mxu0 %v3106
  %v3120 = vpop.f32.mrf.mxu0
  %v3121 = vadd.f32 %v3015, %v3120
  %v3122 = vpop.f32.mrf.mxu0
  %3123 = vdwg.mxu0
  %v3126 = vunpack.c.l.b16 %v2731
  %v3127 = vunpack.c.l.b16 %v2732
  %v3128 = vpack.c.b16 %v3127, %v3126
  %v3130 = vsel %vm1104, %v2462, 0
  %v3133 = vsel %vm1104, %v3128, 0
  %3135 = vmatpush.bf16.xpose.msra.mxu0 0
  %3136 = vmatpush.bf16.xpose.msra.mxu0 0
  %3137 = vmatpush.bf16.xpose.msra.mxu0 0
  %3138 = vmatpush.bf16.xpose.msra.mxu0 0
  %3139 = vmatpush.bf16.xpose.msra.mxu0 0
  %3140 = vmatpush.bf16.xpose.msra.mxu0 0
  %3141 = vmatpush.bf16.xpose.msra.mxu0 0
  %3142 = vmatpush.bf16.xpose.msra.mxu0 %v3133
  %3143 = vmatmul.bf16.gmra.mxu0 %v3130
  %v3144 = vpop.f32.mrf.mxu0
  %v3145 = vadd.f32 %v3016, %v3144
  %v3146 = vpop.f32.mrf.mxu0
  %3147 = vdwg.mxu0
  %v3150 = vunpack.c.l.b16 %v2733
  %v3151 = vunpack.c.l.b16 %v2734
  %v3152 = vpack.c.b16 %v3151, %v3150
  %v3154 = vsel %vm1104, %v2463, 0
  %v3157 = vsel %vm1104, %v3152, 0
  %3159 = vmatpush.bf16.xpose.msra.mxu0 0
  %3160 = vmatpush.bf16.xpose.msra.mxu0 0
  %3161 = vmatpush.bf16.xpose.msra.mxu0 0
  %3162 = vmatpush.bf16.xpose.msra.mxu0 0
  %3163 = vmatpush.bf16.xpose.msra.mxu0 0
  %3164 = vmatpush.bf16.xpose.msra.mxu0 0
  %3165 = vmatpush.bf16.xpose.msra.mxu0 0
  %3166 = vmatpush.bf16.xpose.msra.mxu0 %v3157
  %3167 = vmatmul.bf16.gmra.mxu0 %v3154
  %v3168 = vpop.f32.mrf.mxu0
  %v3169 = vadd.f32 %v3017, %v3168
  %v3170 = vpop.f32.mrf.mxu0
  %3171 = vdwg.mxu0
  %v3174 = vunpack.c.l.b16 %v2735
  %v3175 = vunpack.c.l.b16 %v2736
  %v3176 = vpack.c.b16 %v3175, %v3174
  %v3178 = vsel %vm1104, %v2464, 0
  %v3181 = vsel %vm1104, %v3176, 0
  %3183 = vmatpush.bf16.xpose.msra.mxu0 0
  %3184 = vmatpush.bf16.xpose.msra.mxu0 0
  %3185 = vmatpush.bf16.xpose.msra.mxu0 0
  %3186 = vmatpush.bf16.xpose.msra.mxu0 0
  %3187 = vmatpush.bf16.xpose.msra.mxu0 0
  %3188 = vmatpush.bf16.xpose.msra.mxu0 0
  %3189 = vmatpush.bf16.xpose.msra.mxu0 0
  %3190 = vmatpush.bf16.xpose.msra.mxu0 %v3181
  %3191 = vmatmul.bf16.gmra.mxu0 %v3178
  %v3192 = vpop.f32.mrf.mxu0
  %v3193 = vadd.f32 %v3018, %v3192
  %v3194 = vpop.f32.mrf.mxu0
  %3195 = vdwg.mxu0
  %v3198 = vunpack.c.l.b16 %v2737
  %v3199 = vunpack.c.l.b16 %v2738
  %v3200 = vpack.c.b16 %v3199, %v3198
  %v3202 = vsel %vm1104, %v2465, 0
  %v3205 = vsel %vm1104, %v3200, 0
  %3207 = vmatpush.bf16.xpose.msra.mxu0 0
  %3208 = vmatpush.bf16.xpose.msra.mxu0 0
  %3209 = vmatpush.bf16.xpose.msra.mxu0 0
  %3210 = vmatpush.bf16.xpose.msra.mxu0 0
  %3211 = vmatpush.bf16.xpose.msra.mxu0 0
  %3212 = vmatpush.bf16.xpose.msra.mxu0 0
  %3213 = vmatpush.bf16.xpose.msra.mxu0 0
  %3214 = vmatpush.bf16.xpose.msra.mxu0 %v3205
  %3215 = vmatmul.bf16.gmra.mxu0 %v3202
  %v3216 = vpop.f32.mrf.mxu0
  %v3217 = vadd.f32 %v3019, %v3216
  %v3218 = vpop.f32.mrf.mxu0
  %3219 = vdwg.mxu0
  %v3220 = vsel %vm1398, %v3049, -inf
  %3221 = vmax.xlane.f32.xlu0 %v3220
  %v3222 = vpop.xlane.xlu0 %3221
  %v3223 = vsel %vm1398, %v3073, -inf
  %3224 = vmax.xlane.f32.xlu0 %v3223
  %v3225 = vpop.xlane.xlu0 %3224
  %v3226 = vsel %vm1398, %v3097, -inf
  %3227 = vmax.xlane.f32.xlu0 %v3226
  %v3228 = vpop.xlane.xlu0 %3227
  %v3229 = vsel %vm1398, %v3121, -inf
  %3230 = vmax.xlane.f32.xlu0 %v3229
  %v3231 = vpop.xlane.xlu0 %3230
  %v3232 = vsel %vm1398, %v3145, -inf
  %3233 = vmax.xlane.f32.xlu0 %v3232
  %v3234 = vpop.xlane.xlu0 %3233
  %v3235 = vsel %vm1398, %v3169, -inf
  %3236 = vmax.xlane.f32.xlu0 %v3235
  %v3237 = vpop.xlane.xlu0 %3236
  %v3238 = vsel %vm1398, %v3193, -inf
  %3239 = vmax.xlane.f32.xlu0 %v3238
  %v3240 = vpop.xlane.xlu0 %3239
  %v3241 = vsel %vm1398, %v3217, -inf
  %3242 = vmax.xlane.f32.xlu0 %v3241
  %v3243 = vpop.xlane.xlu0 %3242
  %v3244 = vsub.f32 %v3049, %v3222
  %v3245 = vsub.f32 %v3073, %v3225
  %v3246 = vsub.f32 %v3097, %v3228
  %v3247 = vsub.f32 %v3121, %v3231
  %v3248 = vsub.f32 %v3145, %v3234
  %v3249 = vsub.f32 %v3169, %v3237
  %v3250 = vsub.f32 %v3193, %v3240
  %v3251 = vsub.f32 %v3217, %v3243
  %v3252 = vmul.f32 %v3244, 1.442695
  %v3253 = vpow.pop %v3252
  %v3254 = vmul.f32 %v3245, 1.442695
  %v3255 = vpow.pop %v3254
  %v3256 = vmul.f32 %v3246, 1.442695
  %v3257 = vpow.pop %v3256
  %v3258 = vmul.f32 %v3247, 1.442695
  %v3259 = vpow.pop %v3258
  %v3260 = vmul.f32 %v3248, 1.442695
  %v3261 = vpow.pop %v3260
  %v3262 = vmul.f32 %v3249, 1.442695
  %v3263 = vpow.pop %v3262
  %v3264 = vmul.f32 %v3250, 1.442695
  %v3265 = vpow.pop %v3264
  %v3266 = vmul.f32 %v3251, 1.442695
  %v3267 = vpow.pop %v3266
  %v3268 = vsel %vm1398, %v3253, 0.0
  %3269 = vadd.xlane.f32.xlu0 %v3268
  %v3270 = vpop.xlane.xlu0 %3269
  %v3271 = vsel %vm1398, %v3255, 0.0
  %3272 = vadd.xlane.f32.xlu0 %v3271
  %v3273 = vpop.xlane.xlu0 %3272
  %v3274 = vsel %vm1398, %v3257, 0.0
  %3275 = vadd.xlane.f32.xlu0 %v3274
  %v3276 = vpop.xlane.xlu0 %3275
  %v3277 = vsel %vm1398, %v3259, 0.0
  %3278 = vadd.xlane.f32.xlu0 %v3277
  %v3279 = vpop.xlane.xlu0 %3278
  %v3280 = vsel %vm1398, %v3261, 0.0
  %3281 = vadd.xlane.f32.xlu0 %v3280
  %v3282 = vpop.xlane.xlu0 %3281
  %v3283 = vsel %vm1398, %v3263, 0.0
  %3284 = vadd.xlane.f32.xlu0 %v3283
  %v3285 = vpop.xlane.xlu0 %3284
  %v3286 = vsel %vm1398, %v3265, 0.0
  %3287 = vadd.xlane.f32.xlu0 %v3286
  %v3288 = vpop.xlane.xlu0 %3287
  %v3289 = vsel %vm1398, %v3267, 0.0
  %3290 = vadd.xlane.f32.xlu0 %v3289
  %v3291 = vpop.xlane.xlu0 %3290
  %v3292 = vrcp.pop %v3270
  %v3293 = vrcp.pop %v3273
  %v3294 = vrcp.pop %v3276
  %v3295 = vrcp.pop %v3279
  %v3296 = vrcp.pop %v3282
  %v3297 = vrcp.pop %v3285
  %v3298 = vrcp.pop %v3288
  %v3299 = vrcp.pop %v3291
  %v3300 = vmul.f32 %v3253, %v3292
  %v3301 = vmul.f32 %v3255, %v3293
  %v3302 = vmul.f32 %v3257, %v3294
  %v3303 = vmul.f32 %v3259, %v3295
  %v3304 = vmul.f32 %v3261, %v3296
  %v3305 = vmul.f32 %v3263, %v3297
  %v3306 = vmul.f32 %v3265, %v3298
  %v3307 = vmul.f32 %v3267, %v3299
  %v3308 = vpack.c.bf16 %v3300, %v3300
  %v3309 = vpack.c.bf16 %v3301, %v3301
  %v3310 = vpack.c.bf16 %v3302, %v3302
  %v3311 = vpack.c.bf16 %v3303, %v3303
  %v3312 = vpack.c.bf16 %v3304, %v3304
  %v3313 = vpack.c.bf16 %v3305, %v3305
  %v3314 = vpack.c.bf16 %v3306, %v3306
  %v3315 = vpack.c.bf16 %v3307, %v3307
  %v3318 = vunpack.c.l.b16 %v2980
  %v3319 = vunpack.c.l.b16 %v2981
  %v3320 = vpack.c.b16 %v3319, %v3318
  %v3323 = vsel %vm1398, %v3308, 0
  %3325 = vmatpush.bf16.msra.mxu0 0
  %3326 = vmatpush.bf16.msra.mxu0 0
  %3327 = vmatpush.bf16.msra.mxu0 0
  %3328 = vmatpush.bf16.msra.mxu0 0
  %3329 = vmatpush.bf16.msra.mxu0 0
  %3330 = vmatpush.bf16.msra.mxu0 0
  %3331 = vmatpush.bf16.msra.mxu0 0
  %3332 = vmatpush.bf16.msra.mxu0 %v3320
  %3333 = vmatmul.bf16.gmra.mxu0 %v3323
  %v3334 = vpop.f32.mrf.mxu0
  %v3335 = vadd.f32 0.0, %v3334
  %v3336 = vpop.f32.mrf.mxu0
  %3337 = vdwg.mxu0
  %v3340 = vunpack.c.l.b16 %v2982
  %v3341 = vunpack.c.l.b16 %v2983
  %v3342 = vpack.c.b16 %v3341, %v3340
  %v3345 = vsel %vm1398, %v3309, 0
  %3347 = vmatpush.bf16.msra.mxu0 0
  %3348 = vmatpush.bf16.msra.mxu0 0
  %3349 = vmatpush.bf16.msra.mxu0 0
  %3350 = vmatpush.bf16.msra.mxu0 0
  %3351 = vmatpush.bf16.msra.mxu0 0
  %3352 = vmatpush.bf16.msra.mxu0 0
  %3353 = vmatpush.bf16.msra.mxu0 0
  %3354 = vmatpush.bf16.msra.mxu0 %v3342
  %3355 = vmatmul.bf16.gmra.mxu0 %v3345
  %v3356 = vpop.f32.mrf.mxu0
  %v3357 = vadd.f32 0.0, %v3356
  %v3358 = vpop.f32.mrf.mxu0
  %3359 = vdwg.mxu0
  %v3362 = vunpack.c.l.b16 %v2984
  %v3363 = vunpack.c.l.b16 %v2985
  %v3364 = vpack.c.b16 %v3363, %v3362
  %v3367 = vsel %vm1398, %v3310, 0
  %3369 = vmatpush.bf16.msra.mxu0 0
  %3370 = vmatpush.bf16.msra.mxu0 0
  %3371 = vmatpush.bf16.msra.mxu0 0
  %3372 = vmatpush.bf16.msra.mxu0 0
  %3373 = vmatpush.bf16.msra.mxu0 0
  %3374 = vmatpush.bf16.msra.mxu0 0
  %3375 = vmatpush.bf16.msra.mxu0 0
  %3376 = vmatpush.bf16.msra.mxu0 %v3364
  %3377 = vmatmul.bf16.gmra.mxu0 %v3367
  %v3378 = vpop.f32.mrf.mxu0
  %v3379 = vadd.f32 0.0, %v3378
  %v3380 = vpop.f32.mrf.mxu0
  %3381 = vdwg.mxu0
  %v3384 = vunpack.c.l.b16 %v2986
  %v3385 = vunpack.c.l.b16 %v2987
  %v3386 = vpack.c.b16 %v3385, %v3384
  %v3389 = vsel %vm1398, %v3311, 0
  %3391 = vmatpush.bf16.msra.mxu0 0
  %3392 = vmatpush.bf16.msra.mxu0 0
  %3393 = vmatpush.bf16.msra.mxu0 0
  %3394 = vmatpush.bf16.msra.mxu0 0
  %3395 = vmatpush.bf16.msra.mxu0 0
  %3396 = vmatpush.bf16.msra.mxu0 0
  %3397 = vmatpush.bf16.msra.mxu0 0
  %3398 = vmatpush.bf16.msra.mxu0 %v3386
  %3399 = vmatmul.bf16.gmra.mxu0 %v3389
  %v3400 = vpop.f32.mrf.mxu0
  %v3401 = vadd.f32 0.0, %v3400
  %v3402 = vpop.f32.mrf.mxu0
  %3403 = vdwg.mxu0
  %v3406 = vunpack.c.l.b16 %v2988
  %v3407 = vunpack.c.l.b16 %v2989
  %v3408 = vpack.c.b16 %v3407, %v3406
  %v3411 = vsel %vm1398, %v3312, 0
  %3413 = vmatpush.bf16.msra.mxu0 0
  %3414 = vmatpush.bf16.msra.mxu0 0
  %3415 = vmatpush.bf16.msra.mxu0 0
  %3416 = vmatpush.bf16.msra.mxu0 0
  %3417 = vmatpush.bf16.msra.mxu0 0
  %3418 = vmatpush.bf16.msra.mxu0 0
  %3419 = vmatpush.bf16.msra.mxu0 0
  %3420 = vmatpush.bf16.msra.mxu0 %v3408
  %3421 = vmatmul.bf16.gmra.mxu0 %v3411
  %v3422 = vpop.f32.mrf.mxu0
  %v3423 = vadd.f32 0.0, %v3422
  %v3424 = vpop.f32.mrf.mxu0
  %3425 = vdwg.mxu0
  %v3428 = vunpack.c.l.b16 %v2990
  %v3429 = vunpack.c.l.b16 %v2991
  %v3430 = vpack.c.b16 %v3429, %v3428
  %v3433 = vsel %vm1398, %v3313, 0
  %3435 = vmatpush.bf16.msra.mxu0 0
  %3436 = vmatpush.bf16.msra.mxu0 0
  %3437 = vmatpush.bf16.msra.mxu0 0
  %3438 = vmatpush.bf16.msra.mxu0 0
  %3439 = vmatpush.bf16.msra.mxu0 0
  %3440 = vmatpush.bf16.msra.mxu0 0
  %3441 = vmatpush.bf16.msra.mxu0 0
  %3442 = vmatpush.bf16.msra.mxu0 %v3430
  %3443 = vmatmul.bf16.gmra.mxu0 %v3433
  %v3444 = vpop.f32.mrf.mxu0
  %v3445 = vadd.f32 0.0, %v3444
  %v3446 = vpop.f32.mrf.mxu0
  %3447 = vdwg.mxu0
  %v3450 = vunpack.c.l.b16 %v2992
  %v3451 = vunpack.c.l.b16 %v2993
  %v3452 = vpack.c.b16 %v3451, %v3450
  %v3455 = vsel %vm1398, %v3314, 0
  %3457 = vmatpush.bf16.msra.mxu0 0
  %3458 = vmatpush.bf16.msra.mxu0 0
  %3459 = vmatpush.bf16.msra.mxu0 0
  %3460 = vmatpush.bf16.msra.mxu0 0
  %3461 = vmatpush.bf16.msra.mxu0 0
  %3462 = vmatpush.bf16.msra.mxu0 0
  %3463 = vmatpush.bf16.msra.mxu0 0
  %3464 = vmatpush.bf16.msra.mxu0 %v3452
  %3465 = vmatmul.bf16.gmra.mxu0 %v3455
  %v3466 = vpop.f32.mrf.mxu0
  %v3467 = vadd.f32 0.0, %v3466
  %v3468 = vpop.f32.mrf.mxu0
  %3469 = vdwg.mxu0
  %v3472 = vunpack.c.l.b16 %v2994
  %v3473 = vunpack.c.l.b16 %v2995
  %v3474 = vpack.c.b16 %v3473, %v3472
  %v3477 = vsel %vm1398, %v3315, 0
  %3479 = vmatpush.bf16.msra.mxu0 0
  %3480 = vmatpush.bf16.msra.mxu0 0
  %3481 = vmatpush.bf16.msra.mxu0 0
  %3482 = vmatpush.bf16.msra.mxu0 0
  %3483 = vmatpush.bf16.msra.mxu0 0
  %3484 = vmatpush.bf16.msra.mxu0 0
  %3485 = vmatpush.bf16.msra.mxu0 0
  %3486 = vmatpush.bf16.msra.mxu0 %v3474
  %3487 = vmatmul.bf16.gmra.mxu0 %v3477
  %v3488 = vpop.f32.mrf.mxu0
  %v3489 = vadd.f32 0.0, %v3488
  %v3490 = vpop.f32.mrf.mxu0
  %3491 = vdwg.mxu0
  %v3492 = vpack.c.bf16 %v3335, %v3335
  %v3493 = vpack.c.bf16 %v3357, %v3357
  %v3494 = vpack.c.bf16 %v3379, %v3379
  %v3495 = vpack.c.bf16 %v3401, %v3401
  %v3496 = vpack.c.bf16 %v3423, %v3423
  %v3497 = vpack.c.bf16 %v3445, %v3445
  %v3498 = vpack.c.bf16 %v3467, %v3467
  %v3499 = vpack.c.bf16 %v3489, %v3489
  %s3500 = scalar_lea.vmem %s4, 32
  %v3501 = vld [vmem:[%s3500] sm:$0xf]
  %v3502 = vld [vmem:[%s3500 + $0x4] sm:$0xf]
  %v3503 = vld [vmem:[%s3500 + $0x8] sm:$0xf]
  %v3504 = vld [vmem:[%s3500 + $0xc] sm:$0xf]
  %v3505 = vld [vmem:[%s3500 + $0x10] sm:$0xf]
  %v3506 = vld [vmem:[%s3500 + $0x14] sm:$0xf]
  %v3507 = vld [vmem:[%s3500 + $0x18] sm:$0xf]
  %v3508 = vld [vmem:[%s3500 + $0x1c] sm:$0xf]
  %v3510 = vsel %vm1104, %v3492, 0
  %v3513 = vsel %vm1827, %v3501, 0
  %3515 = vmatpush.bf16.msra.mxu0 0
  %3516 = vmatpush.bf16.msra.mxu0 0
  %3517 = vmatpush.bf16.msra.mxu0 0
  %3518 = vmatpush.bf16.msra.mxu0 0
  %3519 = vmatpush.bf16.msra.mxu0 0
  %3520 = vmatpush.bf16.msra.mxu0 0
  %3521 = vmatpush.bf16.msra.mxu0 0
  %3522 = vmatpush.bf16.msra.mxu0 %v3513
  %3523 = vmatmul.bf16.gmra.mxu0 %v3510
  %v3524 = vpop.f32.mrf.mxu0
  %v3525 = vadd.f32 0.0, %v3524
  %v3526 = vpop.f32.mrf.mxu0
  %3527 = vdwg.mxu0
  %v3529 = vsel %vm1104, %v3493, 0
  %v3532 = vsel %vm1827, %v3502, 0
  %3534 = vmatpush.bf16.msra.mxu0 0
  %3535 = vmatpush.bf16.msra.mxu0 0
  %3536 = vmatpush.bf16.msra.mxu0 0
  %3537 = vmatpush.bf16.msra.mxu0 0
  %3538 = vmatpush.bf16.msra.mxu0 0
  %3539 = vmatpush.bf16.msra.mxu0 0
  %3540 = vmatpush.bf16.msra.mxu0 0
  %3541 = vmatpush.bf16.msra.mxu0 %v3532
  %3542 = vmatmul.bf16.gmra.mxu0 %v3529
  %v3543 = vpop.f32.mrf.mxu0
  %v3544 = vadd.f32 0.0, %v3543
  %v3545 = vpop.f32.mrf.mxu0
  %3546 = vdwg.mxu0
  %v3548 = vsel %vm1104, %v3494, 0
  %v3551 = vsel %vm1827, %v3503, 0
  %3553 = vmatpush.bf16.msra.mxu0 0
  %3554 = vmatpush.bf16.msra.mxu0 0
  %3555 = vmatpush.bf16.msra.mxu0 0
  %3556 = vmatpush.bf16.msra.mxu0 0
  %3557 = vmatpush.bf16.msra.mxu0 0
  %3558 = vmatpush.bf16.msra.mxu0 0
  %3559 = vmatpush.bf16.msra.mxu0 0
  %3560 = vmatpush.bf16.msra.mxu0 %v3551
  %3561 = vmatmul.bf16.gmra.mxu0 %v3548
  %v3562 = vpop.f32.mrf.mxu0
  %v3563 = vadd.f32 0.0, %v3562
  %v3564 = vpop.f32.mrf.mxu0
  %3565 = vdwg.mxu0
  %v3567 = vsel %vm1104, %v3495, 0
  %v3570 = vsel %vm1827, %v3504, 0
  %3572 = vmatpush.bf16.msra.mxu0 0
  %3573 = vmatpush.bf16.msra.mxu0 0
  %3574 = vmatpush.bf16.msra.mxu0 0
  %3575 = vmatpush.bf16.msra.mxu0 0
  %3576 = vmatpush.bf16.msra.mxu0 0
  %3577 = vmatpush.bf16.msra.mxu0 0
  %3578 = vmatpush.bf16.msra.mxu0 0
  %3579 = vmatpush.bf16.msra.mxu0 %v3570
  %3580 = vmatmul.bf16.gmra.mxu0 %v3567
  %v3581 = vpop.f32.mrf.mxu0
  %v3582 = vadd.f32 0.0, %v3581
  %v3583 = vpop.f32.mrf.mxu0
  %3584 = vdwg.mxu0
  %v3586 = vsel %vm1104, %v3496, 0
  %v3589 = vsel %vm1827, %v3505, 0
  %3591 = vmatpush.bf16.msra.mxu0 0
  %3592 = vmatpush.bf16.msra.mxu0 0
  %3593 = vmatpush.bf16.msra.mxu0 0
  %3594 = vmatpush.bf16.msra.mxu0 0
  %3595 = vmatpush.bf16.msra.mxu0 0
  %3596 = vmatpush.bf16.msra.mxu0 0
  %3597 = vmatpush.bf16.msra.mxu0 0
  %3598 = vmatpush.bf16.msra.mxu0 %v3589
  %3599 = vmatmul.bf16.gmra.mxu0 %v3586
  %v3600 = vpop.f32.mrf.mxu0
  %v3601 = vadd.f32 0.0, %v3600
  %v3602 = vpop.f32.mrf.mxu0
  %3603 = vdwg.mxu0
  %v3605 = vsel %vm1104, %v3497, 0
  %v3608 = vsel %vm1827, %v3506, 0
  %3610 = vmatpush.bf16.msra.mxu0 0
  %3611 = vmatpush.bf16.msra.mxu0 0
  %3612 = vmatpush.bf16.msra.mxu0 0
  %3613 = vmatpush.bf16.msra.mxu0 0
  %3614 = vmatpush.bf16.msra.mxu0 0
  %3615 = vmatpush.bf16.msra.mxu0 0
  %3616 = vmatpush.bf16.msra.mxu0 0
  %3617 = vmatpush.bf16.msra.mxu0 %v3608
  %3618 = vmatmul.bf16.gmra.mxu0 %v3605
  %v3619 = vpop.f32.mrf.mxu0
  %v3620 = vadd.f32 0.0, %v3619
  %v3621 = vpop.f32.mrf.mxu0
  %3622 = vdwg.mxu0
  %v3624 = vsel %vm1104, %v3498, 0
  %v3627 = vsel %vm1827, %v3507, 0
  %3629 = vmatpush.bf16.msra.mxu0 0
  %3630 = vmatpush.bf16.msra.mxu0 0
  %3631 = vmatpush.bf16.msra.mxu0 0
  %3632 = vmatpush.bf16.msra.mxu0 0
  %3633 = vmatpush.bf16.msra.mxu0 0
  %3634 = vmatpush.bf16.msra.mxu0 0
  %3635 = vmatpush.bf16.msra.mxu0 0
  %3636 = vmatpush.bf16.msra.mxu0 %v3627
  %3637 = vmatmul.bf16.gmra.mxu0 %v3624
  %v3638 = vpop.f32.mrf.mxu0
  %v3639 = vadd.f32 0.0, %v3638
  %v3640 = vpop.f32.mrf.mxu0
  %3641 = vdwg.mxu0
  %v3643 = vsel %vm1104, %v3499, 0
  %v3646 = vsel %vm1827, %v3508, 0
  %3648 = vmatpush.bf16.msra.mxu0 0
  %3649 = vmatpush.bf16.msra.mxu0 0
  %3650 = vmatpush.bf16.msra.mxu0 0
  %3651 = vmatpush.bf16.msra.mxu0 0
  %3652 = vmatpush.bf16.msra.mxu0 0
  %3653 = vmatpush.bf16.msra.mxu0 0
  %3654 = vmatpush.bf16.msra.mxu0 0
  %3655 = vmatpush.bf16.msra.mxu0 %v3646
  %3656 = vmatmul.bf16.gmra.mxu0 %v3643
  %v3657 = vpop.f32.mrf.mxu0
  %v3658 = vadd.f32 0.0, %v3657
  %v3659 = vpop.f32.mrf.mxu0
  %3660 = vdwg.mxu0
  %v3661 = vadd.f32 %v3525, %v3563
  %v3662 = vadd.f32 %v3544, %v3582
  %v3663 = vadd.f32 %v3661, %v3601
  %v3664 = vadd.f32 %v3662, %v3620
  %v3665 = vadd.f32 %v3663, %v3639
  %v3666 = vadd.f32 %v3664, %v3658
  %v3667 = vadd.f32 %v3665, %v2215
  %v3668 = vadd.f32 %v3666, %v2216
  %s3669 = scalar_lea.vmem %s6, 2
  %v3670 = vld [vmem:[%s3669] sm:$0x1]
  %s3671 = scalar_lea.vmem %s6, 3
  %v3672 = vld [vmem:[%s3671] sm:$0x1]
  %v3673 = vsel %vm86, %v3667, 0.0
  %3674 = vadd.xlane.f32.xlu0 %v3673
  %v3675 = vpop.xlane.xlu0 %3674
  %v3676 = vsel %vm86, %v3668, 0.0
  %3677 = vadd.xlane.f32.xlu0 %v3676
  %v3678 = vpop.xlane.xlu0 %3677
  %v3679 = vmul.f32 %v3675, %v2168
  %v3680 = vmul.f32 %v3678, %v2168
  %v3681 = vsub.f32 %v3667, %v3679
  %v3682 = vsub.f32 %v3668, %v3680
  %v3683 = vmul.f32 %v3681, %v3681
  %v3684 = vmul.f32 %v3682, %v3682
  %v3685 = vsel %vm86, %v3683, 0.0
  %3686 = vadd.xlane.f32.xlu0 %v3685
  %v3687 = vpop.xlane.xlu0 %3686
  %v3688 = vsel %vm86, %v3684, 0.0
  %3689 = vadd.xlane.f32.xlu0 %v3688
  %v3690 = vpop.xlane.xlu0 %3689
  %v3691 = vmul.f32 %v3687, %v2168
  %v3692 = vmul.f32 %v3690, %v2168
  %v3693 = vadd.f32 %v3691, 1e-05
  %v3694 = vadd.f32 %v3692, 1e-05
  %v3695 = vrsqrt.pop %v3693
  %v3696 = vmul.f32 %v3695, %v3693
  %v3697 = vmul.f32 %v3696, %v3695
  %v3698 = vmul.f32 0.5, %v3697
  %v3699 = vsub.f32 1.5, %v3698
  %v3700 = vmul.f32 %v3695, %v3699
  %vm3701 = vweird.f32 %v3693
  %vm3702 = vweird.f32 %v3695
  %vm3703 = vmor %vm3701, %vm3702
  %v3704 = vsel %vm3703, %v3695, %v3700
  %v3705 = vrsqrt.pop %v3694
  %v3706 = vmul.f32 %v3705, %v3694
  %v3707 = vmul.f32 %v3706, %v3705
  %v3708 = vmul.f32 0.5, %v3707
  %v3709 = vsub.f32 1.5, %v3708
  %v3710 = vmul.f32 %v3705, %v3709
  %vm3711 = vweird.f32 %v3694
  %vm3712 = vweird.f32 %v3705
  %vm3713 = vmor %vm3711, %vm3712
  %v3714 = vsel %vm3713, %v3705, %v3710
  %v3715 = vmul.f32 %v3681, %v3704
  %v3716 = vmul.f32 %v3682, %v3714
  %v3718 = vperm.slane %v3670, 0
  %v3720 = vmul.f32 %v3715, %v3718
  %v3721 = vmul.f32 %v3716, %v3718
  %v3723 = vperm.slane %v3672, 0
  %v3725 = vadd.f32 %v3720, %v3723
  %v3726 = vadd.f32 %v3721, %v3723
  %3727 = vst.msk [vmem:[%s9] sm:$0xff] %vm86, %v3725
  %3728 = vst.msk [vmem:[%s9 + $0x8] sm:$0xff] %vm86, %v3726
  // Predicated region
  $region38: #{rel_mha_forward.1} parent=0 // pred_check
    _
  $region39: #{rel_mha_forward.1} parent=0 // pred_check_branch
    %3730 = sbr.rel (0) target = $region41
  $region40: #{rel_mha_forward.1} parent=0 // pred_region
    _
  $region41: #{rel_mha_forward.1} parent=0 // pred_fallthru
    _
  // Predicated region
  $region42: #{rel_mha_forward.1} parent=0 // pred_check
    _
  $region43: #{rel_mha_forward.1} parent=0 // pred_check_branch
    %3732 = sbr.rel (0) target = $region45
  $region44: #{rel_mha_forward.1} parent=0 // pred_region
    _
  $region45: #{rel_mha_forward.1} parent=0 // pred_fallthru
    _

</llo_original>
